<compile_context>
chip_gen: v6e
topology: v6e:2x2x1
jax: 0.10.0
libtpu: 0.0.40
codegen_flags: <defaults>
</compile_context>

<pallas_src>
import functools

import jax
import jax.numpy as jnp
import numpy as np
from jax.experimental import pallas as pl
from jax.experimental.pallas import tpu as pltpu

INPUT_SIZE = 768
HIDDEN = 32
NUM_CLASSES = 2
CNN_OUT = 128
KSIZE = 5
PAD = (KSIZE - 1) // 2

BBLK = 16          # sequences per grid step (16 = one packed bf16 sublane tile)
CIN = INPUT_SIZE
GATES = 4 * HIDDEN  # 128 gate lanes, PyTorch order i|f|g|o
OUT_PAD = 128       # fc output padded to a full lane width for dense stores


def _make_kernel(T):
    H = HIDDEN
    G = GATES

    def kernel(lens_ref,    # SMEM (B_pad,) int32   (scalar prefetch)
               x_ref,       # (T, BBLK, CIN)        compute dtype, time-major
               lenv_ref,    # (BBLK, 1)     int32   per-sequence lengths (vector form)
               wf_ref,      # (K, CIN, G)           compute dtype, fused conv (x) W_ih
               gbias_ref,   # (1, G)        f32     conv_b @ W_ih^T + b_ih + b_hh
               whh_ref,     # (H, G)        f32     W_hh^T
               wfc_ref,     # (H, OUT_PAD)  f32     fc weight (zero-padded cols)
               bfc_ref,     # (1, OUT_PAD)  f32     fc bias (zero-padded)
               out_ref,     # (BBLK, OUT_PAD) f32
               gates_ref):  # VMEM scratch (T, BBLK, G) f32, time-major
        blk = pl.program_id(0)

        # ---- fused Conv1d(768->128, k=5, pad=2) o W_ih: gates_x for all t ----
        # gates_x[t] = sum_k x[t + k - PAD] @ W'_k + gbias ; halo taps clipped
        # in-kernel (no zero-padded copy of x).  Each tap is one
        # (n*BBLK, 768) @ (768, 128) MXU matmul accumulated in f32.
        bias = gbias_ref[...]                                       # (1, G) f32
        xc = x_ref[...].reshape(T * BBLK, CIN)                      # centre tap covers all t
        g0 = jnp.dot(xc, wf_ref[PAD], preferred_element_type=jnp.float32)
        gates_ref[...] = (g0 + bias).reshape(T, BBLK, G)
        for k in range(KSIZE):                                      # static unroll (4 off-centre taps)
            d = k - PAD
            if d == 0:
                continue
            lo_out, hi_out = max(0, -d), T - max(0, d)
            lo_in, hi_in = max(0, d), T + min(0, d)
            n = hi_out - lo_out
            upd = jnp.dot(x_ref[lo_in:hi_in, :, :].reshape(n * BBLK, CIN),
                          wf_ref[k], preferred_element_type=jnp.float32)
            gates_ref[lo_out:hi_out, :, :] = (
                gates_ref[lo_out:hi_out, :, :] + upd.reshape(n, BBLK, G))

        # ---- LSTM recurrence (pack_padded_sequence / h_n emulation) ----------
        whh = whh_ref[...]                                          # (H, G) f32, hoisted
        lens_v = lenv_ref[...]                                      # (BBLK, 1) int32, hoisted

        # Longest sequence in this batch block: skip fully-padded tail steps.
        max_len = lens_ref[blk * BBLK]
        for b in range(1, BBLK):
            max_len = jnp.maximum(max_len, lens_ref[blk * BBLK + b])

        def step(t, carry):
            h, c = carry                                            # (BBLK, H) f32 each
            gates = gates_ref[t] + jnp.dot(h, whh,                  # leading-axis load + tiny matmul
                                           preferred_element_type=jnp.float32)
            # PyTorch gate order: i, f, g, o  (32-lane slices of the 128-lane gates vreg)
            i_g = jax.nn.sigmoid(gates[:, 0:H])
            f_g = jax.nn.sigmoid(gates[:, H:2 * H])
            g_g = jnp.tanh(gates[:, 2 * H:3 * H])
            o_g = jax.nn.sigmoid(gates[:, 3 * H:4 * H])
            c_new = f_g * c + i_g * g_g
            h_new = o_g * jnp.tanh(c_new)
            valid = t < lens_v                                      # freeze state past each length
            h = jnp.where(valid, h_new, h)
            c = jnp.where(valid, c_new, c)
            return h, c

        h0 = jnp.zeros((BBLK, H), jnp.float32)
        c0 = jnp.zeros((BBLK, H), jnp.float32)
        # Dynamic trip count (length-bounded) -> no static unroll here.
        h, _ = jax.lax.fori_loop(0, max_len, step, (h0, c0))

        # dropout1 / dropout2: identity at inference; h == h_n[-1] (1 layer, unidirectional).
        logits = jnp.dot(h, wfc_ref[...], preferred_element_type=jnp.float32) + bfc_ref[...]
        out_ref[...] = logits.astype(out_ref.dtype)                 # lane-dense (BBLK, 128) store

    return kernel


@functools.partial(jax.jit, static_argnames=("compute_dtype",))
def cnn_lstm_forward(x, mask, params, compute_dtype=jnp.bfloat16):
    """x: (B, T, 768) float32, mask: (B, T) int -> logits (B, NUM_CLASSES) float32."""
    B, T, Cin = x.shape
    assert Cin == INPUT_SIZE
    B_pad = ((B + BBLK - 1) // BBLK) * BBLK

    lengths = jnp.sum(mask, axis=1).astype(jnp.int32)
    lengths = jnp.pad(lengths, (0, B_pad - B))                      # padded rows: length 0
    lens2d = lengths[:, None]                                       # (B_pad, 1)

    # Single prep materialisation of x: cast + time-major transpose (+ batch pad).
    # This replaces the old jnp.pad halo copy; the conv halo is clipped in-kernel.
    x_tm = jnp.transpose(x.astype(compute_dtype), (1, 0, 2))        # (T, B, CIN)
    if B_pad != B:
        x_tm = jnp.pad(x_tm, ((0, 0), (0, B_pad - B), (0, 0)))

    # Algebraic fusion of Conv1d and the LSTM input projection:
    #   W'_k[c, g] = sum_o conv_w[o, c, k] * w_ih[g, o]
    w_fused = jnp.einsum("ock,go->kcg",
                         params["conv_w"].astype(jnp.float32),
                         params["w_ih"].astype(jnp.float32)).astype(compute_dtype)
    g_bias = (params["conv_b"] @ params["w_ih"].T
              + params["b_ih"] + params["b_hh"])[None, :].astype(jnp.float32)   # (1, 4H)
    whh_t = params["w_hh"].T.astype(jnp.float32)                    # (H, 4H)
    wfc_pad = jnp.zeros((HIDDEN, OUT_PAD), jnp.float32).at[:, :NUM_CLASSES].set(
        params["fc_w"].T.astype(jnp.float32))
    bfc_pad = jnp.zeros((1, OUT_PAD), jnp.float32).at[0, :NUM_CLASSES].set(
        params["fc_b"].astype(jnp.float32))

    grid_spec = pltpu.PrefetchScalarGridSpec(
        num_scalar_prefetch=1,                        # lengths -> SMEM
        grid=(B_pad // BBLK,),                        # one block of BBLK sequences per step
        in_specs=[
            pl.BlockSpec((T, BBLK, INPUT_SIZE), lambda i, lens: (0, i, 0)),
            pl.BlockSpec((BBLK, 1), lambda i, lens: (i, 0)),
            pl.BlockSpec((KSIZE, INPUT_SIZE, GATES), lambda i, lens: (0, 0, 0)),
            pl.BlockSpec((1, GATES), lambda i, lens: (0, 0)),
            pl.BlockSpec((HIDDEN, GATES), lambda i, lens: (0, 0)),
            pl.BlockSpec((HIDDEN, OUT_PAD), lambda i, lens: (0, 0)),
            pl.BlockSpec((1, OUT_PAD), lambda i, lens: (0, 0)),
        ],
        out_specs=pl.BlockSpec((BBLK, OUT_PAD), lambda i, lens: (i, 0)),
        scratch_shapes=[pltpu.VMEM((T, BBLK, GATES), jnp.float32)],  # time-major gates_x
    )

    out = pl.pallas_call(
        _make_kernel(T),
        grid_spec=grid_spec,
        out_shape=jax.ShapeDtypeStruct((B_pad, OUT_PAD), jnp.float32),
        compiler_params=pltpu.CompilerParams(
            dimension_semantics=("parallel",),        # batch blocks are independent (v7x: 2 TCs)
            vmem_limit_bytes=32 * 1024 * 1024,        # explicit cap, fits v7x's 64 MiB physical VMEM
        ),
    )(lengths, x_tm, lens2d, w_fused, g_bias, whh_t, wfc_pad, bfc_pad)
    return out[:B, :NUM_CLASSES]


def reference_forward(x, mask, params):
    """Pure-JAX reference of the same (unfused) forward pass, mirroring PyTorch."""
    B, T, _ = x.shape
    H = HIDDEN
    lengths = jnp.sum(mask, axis=1).astype(jnp.int32)
    x_pad = jnp.pad(x, ((0, 0), (PAD, PAD), (0, 0)))
    conv = jnp.zeros((B, T, CNN_OUT), jnp.float32) + params["conv_b"]
    for k in range(KSIZE):
        conv = conv + jnp.einsum("btc,oc->bto", x_pad[:, k:k + T, :],
                                 params["conv_w"][:, :, k])
    h = jnp.zeros((B, H), jnp.float32)
    c = jnp.zeros((B, H), jnp.float32)
    for t in range(T):
        gates = (conv[:, t, :] @ params["w_ih"].T + params["b_ih"]
                 + h @ params["w_hh"].T + params["b_hh"])
        i_g = jax.nn.sigmoid(gates[:, 0:H])
        f_g = jax.nn.sigmoid(gates[:, H:2 * H])
        g_g = jnp.tanh(gates[:, 2 * H:3 * H])
        o_g = jax.nn.sigmoid(gates[:, 3 * H:4 * H])
        c_new = f_g * c + i_g * g_g
        h_new = o_g * jnp.tanh(c_new)
        valid = (t < lengths)[:, None]
        h = jnp.where(valid, h_new, h)
        c = jnp.where(valid, c_new, c)
    return h @ params["fc_w"].T + params["fc_b"]


if __name__ == "__main__":
    key = jax.random.PRNGKey(0)
    ks = jax.random.split(key, 9)
    B, T = 2, 8

    # Deterministic synthetic parameters (shapes from CNNLSTM.__init__).
    params = {
        "conv_w": jax.random.normal(ks[0], (CNN_OUT, INPUT_SIZE, KSIZE), jnp.float32) * 0.02,
        "conv_b": jax.random.normal(ks[1], (CNN_OUT,), jnp.float32) * 0.02,
        "w_ih": jax.random.normal(ks[2], (4 * HIDDEN, CNN_OUT), jnp.float32) * 0.1,
        "w_hh": jax.random.normal(ks[3], (4 * HIDDEN, HIDDEN), jnp.float32) * 0.1,
        "b_ih": jax.random.normal(ks[4], (4 * HIDDEN,), jnp.float32) * 0.1,
        "b_hh": jax.random.normal(ks[5], (4 * HIDDEN,), jnp.float32) * 0.1,
        "fc_w": jax.random.normal(ks[6], (NUM_CLASSES, HIDDEN), jnp.float32) * 0.1,
        "fc_b": jax.random.normal(ks[7], (NUM_CLASSES,), jnp.float32) * 0.1,
    }

    x = jax.random.normal(ks[8], (B, T, INPUT_SIZE), jnp.float32)
    seq_lengths = jnp.array([T, 5], jnp.int32)          # ragged, like real BERT masks
    mask = (jnp.arange(T)[None, :] < seq_lengths[:, None]).astype(jnp.int32)

    ref = reference_forward(x, mask, params)

    # f32 compute mode: tight check of the kernel structure / packing semantics.
    out_f32 = jax.block_until_ready(cnn_lstm_forward(x, mask, params,
                                                     compute_dtype=jnp.float32))
    assert out_f32.shape == (B, NUM_CLASSES)
    np.testing.assert_allclose(np.asarray(out_f32), np.asarray(ref),
                               rtol=5e-4, atol=5e-4)

    # Default (production) bf16 compute mode: looser tolerance for the cast.
    out_bf16 = jax.block_until_ready(cnn_lstm_forward(x, mask, params))
    assert out_bf16.shape == (B, NUM_CLASSES)
    np.testing.assert_allclose(np.asarray(out_bf16), np.asarray(ref),
                               rtol=3e-2, atol=3e-2)

    print("KERNEL_OK")
</pallas_src>

<mosaic_0001>
module attributes {stable_mosaic.version = 11 : i64} {
  func.func @kernel(%arg0: i32, %arg1: memref<16xi32, #tpu.memory_space<smem>>, %arg2: memref<8x16x768xf32, #tpu.memory_space<vmem>>, %arg3: memref<16x1xi32, #tpu.memory_space<vmem>>, %arg4: memref<5x768x128xf32, #tpu.memory_space<vmem>>, %arg5: memref<1x128xf32, #tpu.memory_space<vmem>>, %arg6: memref<32x128xf32, #tpu.memory_space<vmem>>, %arg7: memref<32x128xf32, #tpu.memory_space<vmem>>, %arg8: memref<1x128xf32, #tpu.memory_space<vmem>>, %arg9: memref<16x128xf32, #tpu.memory_space<vmem>>, %arg10: memref<8x16x128xf32, #tpu.memory_space<vmem>>) attributes {dimension_semantics = [#tpu.dimension_semantics<parallel>], iteration_bounds = array<i64: 1>, scalar_prefetch = 1 : i64, scratch_operands = 1 : i64, tpu.core_type = #tpu.core_type<tc>, window_params = [{transform_indices = @transform_0, window_bounds = array<i64: 8, 16, 768>}, {transform_indices = @transform_1, window_bounds = array<i64: 16, 1>}, {pipeline_mode = #tpu.pipeline_mode<synchronous>, transform_indices = @transform_2, window_bounds = array<i64: 5, 768, 128>}, {pipeline_mode = #tpu.pipeline_mode<synchronous>, transform_indices = @transform_3, window_bounds = array<i64: 1, 128>}, {pipeline_mode = #tpu.pipeline_mode<synchronous>, transform_indices = @transform_4, window_bounds = array<i64: 32, 128>}, {pipeline_mode = #tpu.pipeline_mode<synchronous>, transform_indices = @transform_5, window_bounds = array<i64: 32, 128>}, {pipeline_mode = #tpu.pipeline_mode<synchronous>, transform_indices = @transform_6, window_bounds = array<i64: 1, 128>}, {transform_indices = @transform_7, window_bounds = array<i64: 16, 128>}]} {
    %c0 = arith.constant 0 : index
    %c0_0 = arith.constant 0 : index
    %0 = vector.load %arg5[%c0, %c0_0] : memref<1x128xf32, #tpu.memory_space<vmem>>, vector<1x128xf32>
    %c0_1 = arith.constant 0 : index
    %c0_2 = arith.constant 0 : index
    %c0_3 = arith.constant 0 : index
    %1 = vector.load %arg2[%c0_1, %c0_2, %c0_3] : memref<8x16x768xf32, #tpu.memory_space<vmem>>, vector<8x16x768xf32>
    %2 = vector.shape_cast %1 : vector<8x16x768xf32> to vector<128x768xf32>
    %c2 = arith.constant 2 : index
    %c0_4 = arith.constant 0 : index
    %c0_5 = arith.constant 0 : index
    %3 = vector.load %arg4[%c2, %c0_4, %c0_5] : memref<5x768x128xf32, #tpu.memory_space<vmem>>, vector<1x768x128xf32>
    %4 = vector.shape_cast %3 : vector<1x768x128xf32> to vector<768x128xf32>
    %cst = arith.constant dense<0.000000e+00> : vector<128x128xf32>
    %5 = tpu.matmul %2, %4, %cst {dimension_numbers = #tpu.dot_dimension_numbers<[1], [0], [0], [1], [0, 0, 1, 1], [], []>} : vector<128x768xf32>, vector<768x128xf32>, vector<128x128xf32> -> vector<128x128xf32>
    %6 = vector.broadcast %0 : vector<1x128xf32> to vector<128x128xf32>
    %7 = arith.addf %5, %6 : vector<128x128xf32>
    %8 = vector.shape_cast %7 : vector<128x128xf32> to vector<8x16x128xf32>
    %c0_6 = arith.constant 0 : index
    %c0_7 = arith.constant 0 : index
    %c0_8 = arith.constant 0 : index
    %9 = vector.load %arg10[%c0_6, %c0_7, %c0_8] : memref<8x16x128xf32, #tpu.memory_space<vmem>>, vector<8x16x128xf32>
    tpu.vector_store %arg10[%c0_6, %c0_7, %c0_8], %8 {strides = array<i32>} : memref<8x16x128xf32, #tpu.memory_space<vmem>>, vector<8x16x128xf32>,
    %c0_9 = arith.constant 0 : index
    %c0_10 = arith.constant 0 : index
    %c0_11 = arith.constant 0 : index
    %10 = vector.load %arg2[%c0_9, %c0_10, %c0_11] : memref<8x16x768xf32, #tpu.memory_space<vmem>>, vector<6x16x768xf32>
    %11 = vector.shape_cast %10 : vector<6x16x768xf32> to vector<96x768xf32>
    %c0_12 = arith.constant 0 : index
    %c0_13 = arith.constant 0 : index
    %c0_14 = arith.constant 0 : index
    %12 = vector.load %arg4[%c0_12, %c0_13, %c0_14] : memref<5x768x128xf32, #tpu.memory_space<vmem>>, vector<1x768x128xf32>
    %13 = vector.shape_cast %12 : vector<1x768x128xf32> to vector<768x128xf32>
    %cst_15 = arith.constant dense<0.000000e+00> : vector<96x128xf32>
    %14 = tpu.matmul %11, %13, %cst_15 {dimension_numbers = #tpu.dot_dimension_numbers<[1], [0], [0], [1], [0, 0, 1, 1], [], []>} : vector<96x768xf32>, vector<768x128xf32>, vector<96x128xf32> -> vector<96x128xf32>
    %c2_16 = arith.constant 2 : index
    %c0_17 = arith.constant 0 : index
    %c0_18 = arith.constant 0 : index
    %15 = vector.load %arg10[%c2_16, %c0_17, %c0_18] : memref<8x16x128xf32, #tpu.memory_space<vmem>>, vector<6x16x128xf32>
    %16 = vector.shape_cast %14 : vector<96x128xf32> to vector<6x16x128xf32>
    %17 = arith.addf %15, %16 : vector<6x16x128xf32>
    %c2_19 = arith.constant 2 : index
    %c0_20 = arith.constant 0 : index
    %c0_21 = arith.constant 0 : index
    %18 = vector.load %arg10[%c2_19, %c0_20, %c0_21] : memref<8x16x128xf32, #tpu.memory_space<vmem>>, vector<6x16x128xf32>
    tpu.vector_store %arg10[%c2_19, %c0_20, %c0_21], %17 {strides = array<i32>} : memref<8x16x128xf32, #tpu.memory_space<vmem>>, vector<6x16x128xf32>,
    %c0_22 = arith.constant 0 : index
    %c0_23 = arith.constant 0 : index
    %c0_24 = arith.constant 0 : index
    %19 = vector.load %arg2[%c0_22, %c0_23, %c0_24] : memref<8x16x768xf32, #tpu.memory_space<vmem>>, vector<7x16x768xf32>
    %20 = vector.shape_cast %19 : vector<7x16x768xf32> to vector<112x768xf32>
    %c1 = arith.constant 1 : index
    %c0_25 = arith.constant 0 : index
    %c0_26 = arith.constant 0 : index
    %21 = vector.load %arg4[%c1, %c0_25, %c0_26] : memref<5x768x128xf32, #tpu.memory_space<vmem>>, vector<1x768x128xf32>
    %22 = vector.shape_cast %21 : vector<1x768x128xf32> to vector<768x128xf32>
    %cst_27 = arith.constant dense<0.000000e+00> : vector<112x128xf32>
    %23 = tpu.matmul %20, %22, %cst_27 {dimension_numbers = #tpu.dot_dimension_numbers<[1], [0], [0], [1], [0, 0, 1, 1], [], []>} : vector<112x768xf32>, vector<768x128xf32>, vector<112x128xf32> -> vector<112x128xf32>
    %c1_28 = arith.constant 1 : index
    %c0_29 = arith.constant 0 : index
    %c0_30 = arith.constant 0 : index
    %24 = vector.load %arg10[%c1_28, %c0_29, %c0_30] : memref<8x16x128xf32, #tpu.memory_space<vmem>>, vector<7x16x128xf32>
    %25 = vector.shape_cast %23 : vector<112x128xf32> to vector<7x16x128xf32>
    %26 = arith.addf %24, %25 : vector<7x16x128xf32>
    %c1_31 = arith.constant 1 : index
    %c0_32 = arith.constant 0 : index
    %c0_33 = arith.constant 0 : index
    %27 = vector.load %arg10[%c1_31, %c0_32, %c0_33] : memref<8x16x128xf32, #tpu.memory_space<vmem>>, vector<7x16x128xf32>
    tpu.vector_store %arg10[%c1_31, %c0_32, %c0_33], %26 {strides = array<i32>} : memref<8x16x128xf32, #tpu.memory_space<vmem>>, vector<7x16x128xf32>,
    %c1_34 = arith.constant 1 : index
    %c0_35 = arith.constant 0 : index
    %c0_36 = arith.constant 0 : index
    %28 = vector.load %arg2[%c1_34, %c0_35, %c0_36] : memref<8x16x768xf32, #tpu.memory_space<vmem>>, vector<7x16x768xf32>
    %29 = vector.shape_cast %28 : vector<7x16x768xf32> to vector<112x768xf32>
    %c3 = arith.constant 3 : index
    %c0_37 = arith.constant 0 : index
    %c0_38 = arith.constant 0 : index
    %30 = vector.load %arg4[%c3, %c0_37, %c0_38] : memref<5x768x128xf32, #tpu.memory_space<vmem>>, vector<1x768x128xf32>
    %31 = vector.shape_cast %30 : vector<1x768x128xf32> to vector<768x128xf32>
    %cst_39 = arith.constant dense<0.000000e+00> : vector<112x128xf32>
    %32 = tpu.matmul %29, %31, %cst_39 {dimension_numbers = #tpu.dot_dimension_numbers<[1], [0], [0], [1], [0, 0, 1, 1], [], []>} : vector<112x768xf32>, vector<768x128xf32>, vector<112x128xf32> -> vector<112x128xf32>
    %c0_40 = arith.constant 0 : index
    %c0_41 = arith.constant 0 : index
    %c0_42 = arith.constant 0 : index
    %33 = vector.load %arg10[%c0_40, %c0_41, %c0_42] : memref<8x16x128xf32, #tpu.memory_space<vmem>>, vector<7x16x128xf32>
    %34 = vector.shape_cast %32 : vector<112x128xf32> to vector<7x16x128xf32>
    %35 = arith.addf %33, %34 : vector<7x16x128xf32>
    %c0_43 = arith.constant 0 : index
    %c0_44 = arith.constant 0 : index
    %c0_45 = arith.constant 0 : index
    %36 = vector.load %arg10[%c0_43, %c0_44, %c0_45] : memref<8x16x128xf32, #tpu.memory_space<vmem>>, vector<7x16x128xf32>
    tpu.vector_store %arg10[%c0_43, %c0_44, %c0_45], %35 {strides = array<i32>} : memref<8x16x128xf32, #tpu.memory_space<vmem>>, vector<7x16x128xf32>,
    %c2_46 = arith.constant 2 : index
    %c0_47 = arith.constant 0 : index
    %c0_48 = arith.constant 0 : index
    %37 = vector.load %arg2[%c2_46, %c0_47, %c0_48] : memref<8x16x768xf32, #tpu.memory_space<vmem>>, vector<6x16x768xf32>
    %38 = vector.shape_cast %37 : vector<6x16x768xf32> to vector<96x768xf32>
    %c4 = arith.constant 4 : index
    %c0_49 = arith.constant 0 : index
    %c0_50 = arith.constant 0 : index
    %39 = vector.load %arg4[%c4, %c0_49, %c0_50] : memref<5x768x128xf32, #tpu.memory_space<vmem>>, vector<1x768x128xf32>
    %40 = vector.shape_cast %39 : vector<1x768x128xf32> to vector<768x128xf32>
    %cst_51 = arith.constant dense<0.000000e+00> : vector<96x128xf32>
    %41 = tpu.matmul %38, %40, %cst_51 {dimension_numbers = #tpu.dot_dimension_numbers<[1], [0], [0], [1], [0, 0, 1, 1], [], []>} : vector<96x768xf32>, vector<768x128xf32>, vector<96x128xf32> -> vector<96x128xf32>
    %c0_52 = arith.constant 0 : index
    %c0_53 = arith.constant 0 : index
    %c0_54 = arith.constant 0 : index
    %42 = vector.load %arg10[%c0_52, %c0_53, %c0_54] : memref<8x16x128xf32, #tpu.memory_space<vmem>>, vector<6x16x128xf32>
    %43 = vector.shape_cast %41 : vector<96x128xf32> to vector<6x16x128xf32>
    %44 = arith.addf %42, %43 : vector<6x16x128xf32>
    %c0_55 = arith.constant 0 : index
    %c0_56 = arith.constant 0 : index
    %c0_57 = arith.constant 0 : index
    %45 = vector.load %arg10[%c0_55, %c0_56, %c0_57] : memref<8x16x128xf32, #tpu.memory_space<vmem>>, vector<6x16x128xf32>
    tpu.vector_store %arg10[%c0_55, %c0_56, %c0_57], %44 {strides = array<i32>} : memref<8x16x128xf32, #tpu.memory_space<vmem>>, vector<6x16x128xf32>,
    %c0_58 = arith.constant 0 : index
    %c0_59 = arith.constant 0 : index
    %46 = vector.load %arg6[%c0_58, %c0_59] : memref<32x128xf32, #tpu.memory_space<vmem>>, vector<32x128xf32>
    %c0_60 = arith.constant 0 : index
    %c0_61 = arith.constant 0 : index
    %47 = vector.load %arg3[%c0_60, %c0_61] : memref<16x1xi32, #tpu.memory_space<vmem>>, vector<16x1xi32>
    %c16_i32 = arith.constant 16 : i32
    %48 = arith.muli %arg0, %c16_i32 : i32
    %49 = arith.index_cast %48 : i32 to index
    %50 = memref.load %arg1[%49] : memref<16xi32, #tpu.memory_space<smem>>
    %c16_i32_62 = arith.constant 16 : i32
    %51 = arith.muli %arg0, %c16_i32_62 : i32
    %c1_i32 = arith.constant 1 : i32
    %52 = arith.addi %51, %c1_i32 : i32
    %53 = arith.index_cast %52 : i32 to index
    %54 = memref.load %arg1[%53] : memref<16xi32, #tpu.memory_space<smem>>
    %55 = arith.maxsi %50, %54 : i32
    %c16_i32_63 = arith.constant 16 : i32
    %56 = arith.muli %arg0, %c16_i32_63 : i32
    %c2_i32 = arith.constant 2 : i32
    %57 = arith.addi %56, %c2_i32 : i32
    %58 = arith.index_cast %57 : i32 to index
    %59 = memref.load %arg1[%58] : memref<16xi32, #tpu.memory_space<smem>>
    %60 = arith.maxsi %55, %59 : i32
    %c16_i32_64 = arith.constant 16 : i32
    %61 = arith.muli %arg0, %c16_i32_64 : i32
    %c3_i32 = arith.constant 3 : i32
    %62 = arith.addi %61, %c3_i32 : i32
    %63 = arith.index_cast %62 : i32 to index
    %64 = memref.load %arg1[%63] : memref<16xi32, #tpu.memory_space<smem>>
    %65 = arith.maxsi %60, %64 : i32
    %c16_i32_65 = arith.constant 16 : i32
    %66 = arith.muli %arg0, %c16_i32_65 : i32
    %c4_i32 = arith.constant 4 : i32
    %67 = arith.addi %66, %c4_i32 : i32
    %68 = arith.index_cast %67 : i32 to index
    %69 = memref.load %arg1[%68] : memref<16xi32, #tpu.memory_space<smem>>
    %70 = arith.maxsi %65, %69 : i32
    %c16_i32_66 = arith.constant 16 : i32
    %71 = arith.muli %arg0, %c16_i32_66 : i32
    %c5_i32 = arith.constant 5 : i32
    %72 = arith.addi %71, %c5_i32 : i32
    %73 = arith.index_cast %72 : i32 to index
    %74 = memref.load %arg1[%73] : memref<16xi32, #tpu.memory_space<smem>>
    %75 = arith.maxsi %70, %74 : i32
    %c16_i32_67 = arith.constant 16 : i32
    %76 = arith.muli %arg0, %c16_i32_67 : i32
    %c6_i32 = arith.constant 6 : i32
    %77 = arith.addi %76, %c6_i32 : i32
    %78 = arith.index_cast %77 : i32 to index
    %79 = memref.load %arg1[%78] : memref<16xi32, #tpu.memory_space<smem>>
    %80 = arith.maxsi %75, %79 : i32
    %c16_i32_68 = arith.constant 16 : i32
    %81 = arith.muli %arg0, %c16_i32_68 : i32
    %c7_i32 = arith.constant 7 : i32
    %82 = arith.addi %81, %c7_i32 : i32
    %83 = arith.index_cast %82 : i32 to index
    %84 = memref.load %arg1[%83] : memref<16xi32, #tpu.memory_space<smem>>
    %85 = arith.maxsi %80, %84 : i32
    %c16_i32_69 = arith.constant 16 : i32
    %86 = arith.muli %arg0, %c16_i32_69 : i32
    %c8_i32 = arith.constant 8 : i32
    %87 = arith.addi %86, %c8_i32 : i32
    %88 = arith.index_cast %87 : i32 to index
    %89 = memref.load %arg1[%88] : memref<16xi32, #tpu.memory_space<smem>>
    %90 = arith.maxsi %85, %89 : i32
    %c16_i32_70 = arith.constant 16 : i32
    %91 = arith.muli %arg0, %c16_i32_70 : i32
    %c9_i32 = arith.constant 9 : i32
    %92 = arith.addi %91, %c9_i32 : i32
    %93 = arith.index_cast %92 : i32 to index
    %94 = memref.load %arg1[%93] : memref<16xi32, #tpu.memory_space<smem>>
    %95 = arith.maxsi %90, %94 : i32
    %c16_i32_71 = arith.constant 16 : i32
    %96 = arith.muli %arg0, %c16_i32_71 : i32
    %c10_i32 = arith.constant 10 : i32
    %97 = arith.addi %96, %c10_i32 : i32
    %98 = arith.index_cast %97 : i32 to index
    %99 = memref.load %arg1[%98] : memref<16xi32, #tpu.memory_space<smem>>
    %100 = arith.maxsi %95, %99 : i32
    %c16_i32_72 = arith.constant 16 : i32
    %101 = arith.muli %arg0, %c16_i32_72 : i32
    %c11_i32 = arith.constant 11 : i32
    %102 = arith.addi %101, %c11_i32 : i32
    %103 = arith.index_cast %102 : i32 to index
    %104 = memref.load %arg1[%103] : memref<16xi32, #tpu.memory_space<smem>>
    %105 = arith.maxsi %100, %104 : i32
    %c16_i32_73 = arith.constant 16 : i32
    %106 = arith.muli %arg0, %c16_i32_73 : i32
    %c12_i32 = arith.constant 12 : i32
    %107 = arith.addi %106, %c12_i32 : i32
    %108 = arith.index_cast %107 : i32 to index
    %109 = memref.load %arg1[%108] : memref<16xi32, #tpu.memory_space<smem>>
    %110 = arith.maxsi %105, %109 : i32
    %c16_i32_74 = arith.constant 16 : i32
    %111 = arith.muli %arg0, %c16_i32_74 : i32
    %c13_i32 = arith.constant 13 : i32
    %112 = arith.addi %111, %c13_i32 : i32
    %113 = arith.index_cast %112 : i32 to index
    %114 = memref.load %arg1[%113] : memref<16xi32, #tpu.memory_space<smem>>
    %115 = arith.maxsi %110, %114 : i32
    %c16_i32_75 = arith.constant 16 : i32
    %116 = arith.muli %arg0, %c16_i32_75 : i32
    %c14_i32 = arith.constant 14 : i32
    %117 = arith.addi %116, %c14_i32 : i32
    %118 = arith.index_cast %117 : i32 to index
    %119 = memref.load %arg1[%118] : memref<16xi32, #tpu.memory_space<smem>>
    %120 = arith.maxsi %115, %119 : i32
    %c16_i32_76 = arith.constant 16 : i32
    %121 = arith.muli %arg0, %c16_i32_76 : i32
    %c15_i32 = arith.constant 15 : i32
    %122 = arith.addi %121, %c15_i32 : i32
    %123 = arith.index_cast %122 : i32 to index
    %124 = memref.load %arg1[%123] : memref<16xi32, #tpu.memory_space<smem>>
    %125 = arith.maxsi %120, %124 : i32
    %cst_77 = arith.constant 0.000000e+00 : f32
    %126 = vector.broadcast %cst_77 : f32 to vector<16x32xf32>
    %cst_78 = arith.constant 0.000000e+00 : f32
    %127 = vector.broadcast %cst_78 : f32 to vector<16x32xf32>
    %c0_i32 = arith.constant 0 : i32
    %128 = arith.subi %125, %c0_i32 : i32
    %129 = arith.addi %c0_i32, %128 : i32
    %c1_i32_79 = arith.constant 1 : i32
    %130:2 = scf.for %arg11 = %c0_i32 to %129 step %c1_i32_79 iter_args(%arg12 = %126, %arg13 = %127) -> (vector<16x32xf32>, vector<16x32xf32>)  : i32 {
      %137 = arith.index_cast %arg11 : i32 to index
      %c0_87 = arith.constant 0 : index
      %c0_88 = arith.constant 0 : index
      %138 = vector.load %arg10[%137, %c0_87, %c0_88] : memref<8x16x128xf32, #tpu.memory_space<vmem>>, vector<1x16x128xf32>
      %139 = vector.shape_cast %138 : vector<1x16x128xf32> to vector<16x128xf32>
      %cst_89 = arith.constant dense<0.000000e+00> : vector<16x128xf32>
      %140 = tpu.matmul %arg12, %46, %cst_89 {dimension_numbers = #tpu.dot_dimension_numbers<[1], [0], [0], [1], [0, 0, 1, 1], [], []>} : vector<16x32xf32>, vector<32x128xf32>, vector<16x128xf32> -> vector<16x128xf32>
      %141 = arith.addf %139, %140 : vector<16x128xf32>
      %142 = vector.extract_strided_slice %141 {offsets = [0, 0], sizes = [16, 32], strides = [1, 1]} : vector<16x128xf32> to vector<16x32xf32>
      %143 = arith.negf %142 : vector<16x32xf32>
      %144 = math.exp %143 : vector<16x32xf32>
      %cst_90 = arith.constant 1.000000e+00 : f32
      %145 = vector.broadcast %cst_90 : f32 to vector<16x32xf32>
      %146 = arith.addf %145, %144 : vector<16x32xf32>
      %147 = arith.divf %145, %146 : vector<16x32xf32>
      %148 = vector.extract_strided_slice %141 {offsets = [0, 32], sizes = [16, 32], strides = [1, 1]} : vector<16x128xf32> to vector<16x32xf32>
      %149 = arith.negf %148 : vector<16x32xf32>
      %150 = math.exp %149 : vector<16x32xf32>
      %cst_91 = arith.constant 1.000000e+00 : f32
      %151 = vector.broadcast %cst_91 : f32 to vector<16x32xf32>
      %152 = arith.addf %151, %150 : vector<16x32xf32>
      %153 = arith.divf %151, %152 : vector<16x32xf32>
      %154 = vector.extract_strided_slice %141 {offsets = [0, 64], sizes = [16, 32], strides = [1, 1]} : vector<16x128xf32> to vector<16x32xf32>
      %155 = math.tanh %154 : vector<16x32xf32>
      %156 = vector.extract_strided_slice %141 {offsets = [0, 96], sizes = [16, 32], strides = [1, 1]} : vector<16x128xf32> to vector<16x32xf32>
      %157 = arith.negf %156 : vector<16x32xf32>
      %158 = math.exp %157 : vector<16x32xf32>
      %cst_92 = arith.constant 1.000000e+00 : f32
      %159 = vector.broadcast %cst_92 : f32 to vector<16x32xf32>
      %160 = arith.addf %159, %158 : vector<16x32xf32>
      %161 = arith.divf %159, %160 : vector<16x32xf32>
      %162 = arith.mulf %153, %arg13 : vector<16x32xf32>
      %163 = arith.mulf %147, %155 : vector<16x32xf32>
      %164 = arith.addf %162, %163 : vector<16x32xf32>
      %165 = math.tanh %164 : vector<16x32xf32>
      %166 = arith.mulf %161, %165 : vector<16x32xf32>
      %167 = vector.broadcast %arg11 : i32 to vector<16x1xi32>
      %168 = arith.cmpi slt, %167, %47 : vector<16x1xi32>
      %169 = vector.shape_cast %168 : vector<16x1xi1> to vector<16x1xi1>
      %170 = vector.broadcast %169 : vector<16x1xi1> to vector<16x32xi1>
      %171 = arith.select %170, %166, %arg12 : vector<16x32xi1>, vector<16x32xf32>
      %172 = vector.shape_cast %168 : vector<16x1xi1> to vector<16x1xi1>
      %173 = vector.broadcast %172 : vector<16x1xi1> to vector<16x32xi1>
      %174 = arith.select %173, %164, %arg13 : vector<16x32xi1>, vector<16x32xf32>
      scf.yield %171, %174 : vector<16x32xf32>, vector<16x32xf32>
    }
    %c0_80 = arith.constant 0 : index
    %c0_81 = arith.constant 0 : index
    %131 = vector.load %arg7[%c0_80, %c0_81] : memref<32x128xf32, #tpu.memory_space<vmem>>, vector<32x128xf32>
    %cst_82 = arith.constant dense<0.000000e+00> : vector<16x128xf32>
    %132 = tpu.matmul %130#0, %131, %cst_82 {dimension_numbers = #tpu.dot_dimension_numbers<[1], [0], [0], [1], [0, 0, 1, 1], [], []>} : vector<16x32xf32>, vector<32x128xf32>, vector<16x128xf32> -> vector<16x128xf32>
    %c0_83 = arith.constant 0 : index
    %c0_84 = arith.constant 0 : index
    %133 = vector.load %arg8[%c0_83, %c0_84] : memref<1x128xf32, #tpu.memory_space<vmem>>, vector<1x128xf32>
    %134 = vector.broadcast %133 : vector<1x128xf32> to vector<16x128xf32>
    %135 = arith.addf %132, %134 : vector<16x128xf32>
    %c0_85 = arith.constant 0 : index
    %c0_86 = arith.constant 0 : index
    %136 = vector.load %arg9[%c0_85, %c0_86] : memref<16x128xf32, #tpu.memory_space<vmem>>, vector<16x128xf32>
    tpu.vector_store %arg9[%c0_85, %c0_86], %135 {strides = array<i32>} : memref<16x128xf32, #tpu.memory_space<vmem>>, vector<16x128xf32>,
    return
  }
  func.func @transform_0(%arg0: i32, %arg1: memref<16xi32, #tpu.memory_space<smem>>) -> (i32, i32, i32) {
    %c0_i32 = arith.constant 0 : i32
    %c0_i32_0 = arith.constant 0 : i32
    %c0_i32_1 = arith.constant 0 : i32
    return %c0_i32, %arg0, %c0_i32_0 : i32, i32, i32
  }
  func.func @transform_1(%arg0: i32, %arg1: memref<16xi32, #tpu.memory_space<smem>>) -> (i32, i32) {
    %c0_i32 = arith.constant 0 : i32
    %c0_i32_0 = arith.constant 0 : i32
    return %arg0, %c0_i32 : i32, i32
  }
  func.func @transform_2(%arg0: i32, %arg1: memref<16xi32, #tpu.memory_space<smem>>) -> (i32, i32, i32) {
    %c0_i32 = arith.constant 0 : i32
    %c0_i32_0 = arith.constant 0 : i32
    %c0_i32_1 = arith.constant 0 : i32
    %c0_i32_2 = arith.constant 0 : i32
    return %c0_i32, %c0_i32_0, %c0_i32_1 : i32, i32, i32
  }
  func.func @transform_3(%arg0: i32, %arg1: memref<16xi32, #tpu.memory_space<smem>>) -> (i32, i32) {
    %c0_i32 = arith.constant 0 : i32
    %c0_i32_0 = arith.constant 0 : i32
    %c0_i32_1 = arith.constant 0 : i32
    return %c0_i32, %c0_i32_0 : i32, i32
  }
  func.func @transform_4(%arg0: i32, %arg1: memref<16xi32, #tpu.memory_space<smem>>) -> (i32, i32) {
    %c0_i32 = arith.constant 0 : i32
    %c0_i32_0 = arith.constant 0 : i32
    %c0_i32_1 = arith.constant 0 : i32
    return %c0_i32, %c0_i32_0 : i32, i32
  }
  func.func @transform_5(%arg0: i32, %arg1: memref<16xi32, #tpu.memory_space<smem>>) -> (i32, i32) {
    %c0_i32 = arith.constant 0 : i32
    %c0_i32_0 = arith.constant 0 : i32
    %c0_i32_1 = arith.constant 0 : i32
    return %c0_i32, %c0_i32_0 : i32, i32
  }
  func.func @transform_6(%arg0: i32, %arg1: memref<16xi32, #tpu.memory_space<smem>>) -> (i32, i32) {
    %c0_i32 = arith.constant 0 : i32
    %c0_i32_0 = arith.constant 0 : i32
    %c0_i32_1 = arith.constant 0 : i32
    return %c0_i32, %c0_i32_0 : i32, i32
  }
  func.func @transform_7(%arg0: i32, %arg1: memref<16xi32, #tpu.memory_space<smem>>) -> (i32, i32) {
    %c0_i32 = arith.constant 0 : i32
    %c0_i32_0 = arith.constant 0 : i32
    return %arg0, %c0_i32 : i32, i32
  }
}

</mosaic_0001>

<llo_original>
// kernel: cnn_lstm_forward.1
$region0: #{cnn_lstm_forward.1}
  #allocation0 [shape = 'u32[]', space=smem, size = 0x4, offset = 0x4, fixed_abs, tag = 'smem constant byte address 0x4 - core index']
  #allocation1 [shape = 'u32[144,128]{1,0:T(1,128)}', space=vmem, size = 0x12000, scoped, tag = 'internal scratch']
  #allocation2 [shape = 'f32[8,16,128]{2,1,0:T(8,128)}', space=vmem, size = 0x10000, scoped, tag = 'scratch operand']
  #allocation3 [shape = 's32[1]{0}', space=sflag, size = 0x4, scoped, tag = 'scoped memory for cnn_lstm_forward.1']
  #allocation4 [shape = 'u8[512]{0}', space=smem, size = 0x200, scoped, tag = 'prefetched SMEM operand 0']
  %s0 = inlined_call_operand.vmem [shape: s32[16], index: 0, kind: input, shape index: {}]
  %s1 = inlined_call_operand.vmem [shape: f32[8,16,768], index: 1, kind: input, shape index: {}]
  %s2 = inlined_call_operand.vmem [shape: s32[16,1], index: 2, kind: input, shape index: {}]
  %s3 = inlined_call_operand.vmem [shape: f32[5,768,128], index: 3, kind: input, shape index: {}]
  %s4 = inlined_call_operand.vmem [shape: f32[1,128], index: 4, kind: input, shape index: {}]
  %s5 = inlined_call_operand.vmem [shape: f32[32,128], index: 5, kind: input, shape index: {}]
  %s6 = inlined_call_operand.vmem [shape: f32[32,128], index: 6, kind: input, shape index: {}]
  %s7 = inlined_call_operand.vmem [shape: f32[1,128], index: 7, kind: input, shape index: {}]
  %s8 = inlined_call_operand.vmem [shape: f32[16,128], index: 8, kind: output, shape index: {}]
  %s9 = sld [smem:[#allocation0]]
  $region45: #{cnn_lstm_forward.1} parent=0
    _
  %s11 = ssub.s32 1, %s9
  %s12 = scalar_select 0, %s11, %s9
  %s13 = sshll.u32 %s0, 4
  %s14 = int_to_ptr.vmem [resolvable:$true] %s13
  %16 = dma.vmem_to_smem %s14, 16, [#allocation4], [#allocation3]
  %17 = dma.done [#allocation3], 16
  %18 = sfence
  // Predicated region
  $region2: #{cnn_lstm_forward.1} parent=0 // pred_check
    _
  $region3: #{cnn_lstm_forward.1} parent=0 // pred_check_branch
    %20 = sbr.rel (0) target = $region5
  $region4: #{cnn_lstm_forward.1} parent=0 // pred_region
    _
  $region5: #{cnn_lstm_forward.1} parent=0 // pred_fallthru
    _
  // Predicated region
  $region6: #{cnn_lstm_forward.1} parent=0 // pred_check
    _
  $region7: #{cnn_lstm_forward.1} parent=0 // pred_check_branch
    %22 = sbr.rel (0) target = $region9
  $region8: #{cnn_lstm_forward.1} parent=0 // pred_region
    _
  $region9: #{cnn_lstm_forward.1} parent=0 // pred_fallthru
    _
  // Predicated region
  $region10: #{cnn_lstm_forward.1} parent=0 // pred_check
    _
  $region11: #{cnn_lstm_forward.1} parent=0 // pred_check_branch
    %24 = sbr.rel (0) target = $region13
  $region12: #{cnn_lstm_forward.1} parent=0 // pred_region
    _
  $region13: #{cnn_lstm_forward.1} parent=0 // pred_fallthru
    _
  // Predicated region
  $region14: #{cnn_lstm_forward.1} parent=0 // pred_check
    _
  $region15: #{cnn_lstm_forward.1} parent=0 // pred_check_branch
    %26 = sbr.rel (0) target = $region17
  $region16: #{cnn_lstm_forward.1} parent=0 // pred_region
    _
  $region17: #{cnn_lstm_forward.1} parent=0 // pred_fallthru
    _
  // Predicated region
  $region18: #{cnn_lstm_forward.1} parent=0 // pred_check
    _
  $region19: #{cnn_lstm_forward.1} parent=0 // pred_check_branch
    %28 = sbr.rel (0) target = $region21
  $region20: #{cnn_lstm_forward.1} parent=0 // pred_region
    _
  $region21: #{cnn_lstm_forward.1} parent=0 // pred_fallthru
    _
  // Predicated region
  $region22: #{cnn_lstm_forward.1} parent=0 // pred_check
    _
  $region23: #{cnn_lstm_forward.1} parent=0 // pred_check_branch
    %30 = sbr.rel (0) target = $region25
  $region24: #{cnn_lstm_forward.1} parent=0 // pred_region
    _
  $region25: #{cnn_lstm_forward.1} parent=0 // pred_fallthru
    _
  // Predicated region
  $region26: #{cnn_lstm_forward.1} parent=0 // pred_check
    _
  $region27: #{cnn_lstm_forward.1} parent=0 // pred_check_branch
    %32 = sbr.rel (0) target = $region29
  $region28: #{cnn_lstm_forward.1} parent=0 // pred_region
    _
  $region29: #{cnn_lstm_forward.1} parent=0 // pred_fallthru
    _
  %v33 = vld [vmem:[%s4] sm:$0x1]
  %v34 = vld [vmem:[%s1] sm:$0xff]
  %v35 = vld [vmem:[%s1 + $0x8] sm:$0xff]
  %v36 = vld [vmem:[%s1 + $0x10] sm:$0xff]
  %v37 = vld [vmem:[%s1 + $0x18] sm:$0xff]
  %v38 = vld [vmem:[%s1 + $0x20] sm:$0xff]
  %v39 = vld [vmem:[%s1 + $0x28] sm:$0xff]
  %v40 = vld [vmem:[%s1 + $0x30] sm:$0xff]
  %v41 = vld [vmem:[%s1 + $0x38] sm:$0xff]
  %v42 = vld [vmem:[%s1 + $0x40] sm:$0xff]
  %v43 = vld [vmem:[%s1 + $0x48] sm:$0xff]
  %v44 = vld [vmem:[%s1 + $0x50] sm:$0xff]
  %v45 = vld [vmem:[%s1 + $0x58] sm:$0xff]
  %v46 = vld [vmem:[%s1 + $0x60] sm:$0xff]
  %v47 = vld [vmem:[%s1 + $0x68] sm:$0xff]
  %v48 = vld [vmem:[%s1 + $0x70] sm:$0xff]
  %v49 = vld [vmem:[%s1 + $0x78] sm:$0xff]
  %v50 = vld [vmem:[%s1 + $0x80] sm:$0xff]
  %v51 = vld [vmem:[%s1 + $0x88] sm:$0xff]
  %v52 = vld [vmem:[%s1 + $0x90] sm:$0xff]
  %v53 = vld [vmem:[%s1 + $0x98] sm:$0xff]
  %v54 = vld [vmem:[%s1 + $0xa0] sm:$0xff]
  %v55 = vld [vmem:[%s1 + $0xa8] sm:$0xff]
  %v56 = vld [vmem:[%s1 + $0xb0] sm:$0xff]
  %v57 = vld [vmem:[%s1 + $0xb8] sm:$0xff]
  %v58 = vld [vmem:[%s1 + $0xc0] sm:$0xff]
  %v59 = vld [vmem:[%s1 + $0xc8] sm:$0xff]
  %v60 = vld [vmem:[%s1 + $0xd0] sm:$0xff]
  %v61 = vld [vmem:[%s1 + $0xd8] sm:$0xff]
  %v62 = vld [vmem:[%s1 + $0xe0] sm:$0xff]
  %v63 = vld [vmem:[%s1 + $0xe8] sm:$0xff]
  %v64 = vld [vmem:[%s1 + $0xf0] sm:$0xff]
  %v65 = vld [vmem:[%s1 + $0xf8] sm:$0xff]
  %v66 = vld [vmem:[%s1 + $0x100] sm:$0xff]
  %v67 = vld [vmem:[%s1 + $0x108] sm:$0xff]
  %v68 = vld [vmem:[%s1 + $0x110] sm:$0xff]
  %v69 = vld [vmem:[%s1 + $0x118] sm:$0xff]
  %v70 = vld [vmem:[%s1 + $0x120] sm:$0xff]
  %v71 = vld [vmem:[%s1 + $0x128] sm:$0xff]
  %v72 = vld [vmem:[%s1 + $0x130] sm:$0xff]
  %v73 = vld [vmem:[%s1 + $0x138] sm:$0xff]
  %v74 = vld [vmem:[%s1 + $0x140] sm:$0xff]
  %v75 = vld [vmem:[%s1 + $0x148] sm:$0xff]
  %v76 = vld [vmem:[%s1 + $0x150] sm:$0xff]
  %v77 = vld [vmem:[%s1 + $0x158] sm:$0xff]
  %v78 = vld [vmem:[%s1 + $0x160] sm:$0xff]
  %v79 = vld [vmem:[%s1 + $0x168] sm:$0xff]
  %v80 = vld [vmem:[%s1 + $0x170] sm:$0xff]
  %v81 = vld [vmem:[%s1 + $0x178] sm:$0xff]
  %v82 = vld [vmem:[%s1 + $0x180] sm:$0xff]
  %v83 = vld [vmem:[%s1 + $0x188] sm:$0xff]
  %v84 = vld [vmem:[%s1 + $0x190] sm:$0xff]
  %v85 = vld [vmem:[%s1 + $0x198] sm:$0xff]
  %v86 = vld [vmem:[%s1 + $0x1a0] sm:$0xff]
  %v87 = vld [vmem:[%s1 + $0x1a8] sm:$0xff]
  %v88 = vld [vmem:[%s1 + $0x1b0] sm:$0xff]
  %v89 = vld [vmem:[%s1 + $0x1b8] sm:$0xff]
  %v90 = vld [vmem:[%s1 + $0x1c0] sm:$0xff]
  %v91 = vld [vmem:[%s1 + $0x1c8] sm:$0xff]
  %v92 = vld [vmem:[%s1 + $0x1d0] sm:$0xff]
  %v93 = vld [vmem:[%s1 + $0x1d8] sm:$0xff]
  %v94 = vld [vmem:[%s1 + $0x1e0] sm:$0xff]
  %v95 = vld [vmem:[%s1 + $0x1e8] sm:$0xff]
  %v96 = vld [vmem:[%s1 + $0x1f0] sm:$0xff]
  %v97 = vld [vmem:[%s1 + $0x1f8] sm:$0xff]
  %v98 = vld [vmem:[%s1 + $0x200] sm:$0xff]
  %v99 = vld [vmem:[%s1 + $0x208] sm:$0xff]
  %v100 = vld [vmem:[%s1 + $0x210] sm:$0xff]
  %v101 = vld [vmem:[%s1 + $0x218] sm:$0xff]
  %v102 = vld [vmem:[%s1 + $0x220] sm:$0xff]
  %v103 = vld [vmem:[%s1 + $0x228] sm:$0xff]
  %v104 = vld [vmem:[%s1 + $0x230] sm:$0xff]
  %v105 = vld [vmem:[%s1 + $0x238] sm:$0xff]
  %v106 = vld [vmem:[%s1 + $0x240] sm:$0xff]
  %v107 = vld [vmem:[%s1 + $0x248] sm:$0xff]
  %v108 = vld [vmem:[%s1 + $0x250] sm:$0xff]
  %v109 = vld [vmem:[%s1 + $0x258] sm:$0xff]
  %v110 = vld [vmem:[%s1 + $0x260] sm:$0xff]
  %v111 = vld [vmem:[%s1 + $0x268] sm:$0xff]
  %v112 = vld [vmem:[%s1 + $0x270] sm:$0xff]
  %v113 = vld [vmem:[%s1 + $0x278] sm:$0xff]
  %v114 = vld [vmem:[%s1 + $0x280] sm:$0xff]
  %v115 = vld [vmem:[%s1 + $0x288] sm:$0xff]
  %v116 = vld [vmem:[%s1 + $0x290] sm:$0xff]
  %v117 = vld [vmem:[%s1 + $0x298] sm:$0xff]
  %v118 = vld [vmem:[%s1 + $0x2a0] sm:$0xff]
  %v119 = vld [vmem:[%s1 + $0x2a8] sm:$0xff]
  %v120 = vld [vmem:[%s1 + $0x2b0] sm:$0xff]
  %v121 = vld [vmem:[%s1 + $0x2b8] sm:$0xff]
  %v122 = vld [vmem:[%s1 + $0x2c0] sm:$0xff]
  %v123 = vld [vmem:[%s1 + $0x2c8] sm:$0xff]
  %v124 = vld [vmem:[%s1 + $0x2d0] sm:$0xff]
  %v125 = vld [vmem:[%s1 + $0x2d8] sm:$0xff]
  %v126 = vld [vmem:[%s1 + $0x2e0] sm:$0xff]
  %v127 = vld [vmem:[%s1 + $0x2e8] sm:$0xff]
  %v128 = vld [vmem:[%s1 + $0x2f0] sm:$0xff]
  %v129 = vld [vmem:[%s1 + $0x2f8] sm:$0xff]
  %s130 = scalar_lea.vmem %s3, 1536
  %v131 = vld [vmem:[%s130] sm:$0xff]
  %v132 = vld [vmem:[%s130 + $0x8] sm:$0xff]
  %v133 = vld [vmem:[%s130 + $0x10] sm:$0xff]
  %v134 = vld [vmem:[%s130 + $0x18] sm:$0xff]
  %v135 = vld [vmem:[%s130 + $0x20] sm:$0xff]
  %v136 = vld [vmem:[%s130 + $0x28] sm:$0xff]
  %v137 = vld [vmem:[%s130 + $0x30] sm:$0xff]
  %v138 = vld [vmem:[%s130 + $0x38] sm:$0xff]
  %v139 = vld [vmem:[%s130 + $0x40] sm:$0xff]
  %v140 = vld [vmem:[%s130 + $0x48] sm:$0xff]
  %v141 = vld [vmem:[%s130 + $0x50] sm:$0xff]
  %v142 = vld [vmem:[%s130 + $0x58] sm:$0xff]
  %v143 = vld [vmem:[%s130 + $0x60] sm:$0xff]
  %v144 = vld [vmem:[%s130 + $0x68] sm:$0xff]
  %v145 = vld [vmem:[%s130 + $0x70] sm:$0xff]
  %v146 = vld [vmem:[%s130 + $0x78] sm:$0xff]
  %v147 = vld [vmem:[%s130 + $0x80] sm:$0xff]
  %v148 = vld [vmem:[%s130 + $0x88] sm:$0xff]
  %v149 = vld [vmem:[%s130 + $0x90] sm:$0xff]
  %v150 = vld [vmem:[%s130 + $0x98] sm:$0xff]
  %v151 = vld [vmem:[%s130 + $0xa0] sm:$0xff]
  %v152 = vld [vmem:[%s130 + $0xa8] sm:$0xff]
  %v153 = vld [vmem:[%s130 + $0xb0] sm:$0xff]
  %v154 = vld [vmem:[%s130 + $0xb8] sm:$0xff]
  %v155 = vld [vmem:[%s130 + $0xc0] sm:$0xff]
  %v156 = vld [vmem:[%s130 + $0xc8] sm:$0xff]
  %v157 = vld [vmem:[%s130 + $0xd0] sm:$0xff]
  %v158 = vld [vmem:[%s130 + $0xd8] sm:$0xff]
  %v159 = vld [vmem:[%s130 + $0xe0] sm:$0xff]
  %v160 = vld [vmem:[%s130 + $0xe8] sm:$0xff]
  %v161 = vld [vmem:[%s130 + $0xf0] sm:$0xff]
  %v162 = vld [vmem:[%s130 + $0xf8] sm:$0xff]
  %v163 = vld [vmem:[%s130 + $0x100] sm:$0xff]
  %v164 = vld [vmem:[%s130 + $0x108] sm:$0xff]
  %v165 = vld [vmem:[%s130 + $0x110] sm:$0xff]
  %v166 = vld [vmem:[%s130 + $0x118] sm:$0xff]
  %v167 = vld [vmem:[%s130 + $0x120] sm:$0xff]
  %v168 = vld [vmem:[%s130 + $0x128] sm:$0xff]
  %v169 = vld [vmem:[%s130 + $0x130] sm:$0xff]
  %v170 = vld [vmem:[%s130 + $0x138] sm:$0xff]
  %v171 = vld [vmem:[%s130 + $0x140] sm:$0xff]
  %v172 = vld [vmem:[%s130 + $0x148] sm:$0xff]
  %v173 = vld [vmem:[%s130 + $0x150] sm:$0xff]
  %v174 = vld [vmem:[%s130 + $0x158] sm:$0xff]
  %v175 = vld [vmem:[%s130 + $0x160] sm:$0xff]
  %v176 = vld [vmem:[%s130 + $0x168] sm:$0xff]
  %v177 = vld [vmem:[%s130 + $0x170] sm:$0xff]
  %v178 = vld [vmem:[%s130 + $0x178] sm:$0xff]
  %v179 = vld [vmem:[%s130 + $0x180] sm:$0xff]
  %v180 = vld [vmem:[%s130 + $0x188] sm:$0xff]
  %v181 = vld [vmem:[%s130 + $0x190] sm:$0xff]
  %v182 = vld [vmem:[%s130 + $0x198] sm:$0xff]
  %v183 = vld [vmem:[%s130 + $0x1a0] sm:$0xff]
  %v184 = vld [vmem:[%s130 + $0x1a8] sm:$0xff]
  %v185 = vld [vmem:[%s130 + $0x1b0] sm:$0xff]
  %v186 = vld [vmem:[%s130 + $0x1b8] sm:$0xff]
  %v187 = vld [vmem:[%s130 + $0x1c0] sm:$0xff]
  %v188 = vld [vmem:[%s130 + $0x1c8] sm:$0xff]
  %v189 = vld [vmem:[%s130 + $0x1d0] sm:$0xff]
  %v190 = vld [vmem:[%s130 + $0x1d8] sm:$0xff]
  %v191 = vld [vmem:[%s130 + $0x1e0] sm:$0xff]
  %v192 = vld [vmem:[%s130 + $0x1e8] sm:$0xff]
  %v193 = vld [vmem:[%s130 + $0x1f0] sm:$0xff]
  %v194 = vld [vmem:[%s130 + $0x1f8] sm:$0xff]
  %v195 = vld [vmem:[%s130 + $0x200] sm:$0xff]
  %v196 = vld [vmem:[%s130 + $0x208] sm:$0xff]
  %v197 = vld [vmem:[%s130 + $0x210] sm:$0xff]
  %v198 = vld [vmem:[%s130 + $0x218] sm:$0xff]
  %v199 = vld [vmem:[%s130 + $0x220] sm:$0xff]
  %v200 = vld [vmem:[%s130 + $0x228] sm:$0xff]
  %v201 = vld [vmem:[%s130 + $0x230] sm:$0xff]
  %v202 = vld [vmem:[%s130 + $0x238] sm:$0xff]
  %v203 = vld [vmem:[%s130 + $0x240] sm:$0xff]
  %v204 = vld [vmem:[%s130 + $0x248] sm:$0xff]
  %v205 = vld [vmem:[%s130 + $0x250] sm:$0xff]
  %v206 = vld [vmem:[%s130 + $0x258] sm:$0xff]
  %v207 = vld [vmem:[%s130 + $0x260] sm:$0xff]
  %v208 = vld [vmem:[%s130 + $0x268] sm:$0xff]
  %v209 = vld [vmem:[%s130 + $0x270] sm:$0xff]
  %v210 = vld [vmem:[%s130 + $0x278] sm:$0xff]
  %v211 = vld [vmem:[%s130 + $0x280] sm:$0xff]
  %v212 = vld [vmem:[%s130 + $0x288] sm:$0xff]
  %v213 = vld [vmem:[%s130 + $0x290] sm:$0xff]
  %v214 = vld [vmem:[%s130 + $0x298] sm:$0xff]
  %v215 = vld [vmem:[%s130 + $0x2a0] sm:$0xff]
  %v216 = vld [vmem:[%s130 + $0x2a8] sm:$0xff]
  %v217 = vld [vmem:[%s130 + $0x2b0] sm:$0xff]
  %v218 = vld [vmem:[%s130 + $0x2b8] sm:$0xff]
  %v219 = vld [vmem:[%s130 + $0x2c0] sm:$0xff]
  %v220 = vld [vmem:[%s130 + $0x2c8] sm:$0xff]
  %v221 = vld [vmem:[%s130 + $0x2d0] sm:$0xff]
  %v222 = vld [vmem:[%s130 + $0x2d8] sm:$0xff]
  %v223 = vld [vmem:[%s130 + $0x2e0] sm:$0xff]
  %v224 = vld [vmem:[%s130 + $0x2e8] sm:$0xff]
  %v225 = vld [vmem:[%s130 + $0x2f0] sm:$0xff]
  %v226 = vld [vmem:[%s130 + $0x2f8] sm:$0xff]
  %v228 = vlaneseq
  %v229 = vshrl.u32 %v228, 7
  %v230 = vsub.s32 0, %v229
  %v231 = vrot.slane %v33, %v230
  %233 = vmatprep.subr.mxu0 0.0
  %234 = vmatpush1.msra.mxu0 %v146
  %235 = vmatprep.subr.mxu0 0.0
  %236 = vmatpush1.msra.mxu0 %v145
  %237 = vmatprep.subr.mxu0 0.0
  %238 = vmatpush1.msra.mxu0 %v144
  %239 = vmatprep.subr.mxu0 0.0
  %240 = vmatpush1.msra.mxu0 %v143
  %241 = vmatprep.subr.mxu0 0.0
  %242 = vmatpush1.msra.mxu0 %v142
  %243 = vmatprep.subr.mxu0 0.0
  %244 = vmatpush1.msra.mxu0 %v141
  %245 = vmatprep.subr.mxu0 0.0
  %246 = vmatpush1.msra.mxu0 %v140
  %247 = vmatprep.subr.mxu0 0.0
  %248 = vmatpush1.msra.mxu0 %v139
  %249 = vmatprep.subr.mxu0 0.0
  %250 = vmatpush1.msra.mxu0 %v138
  %251 = vmatprep.subr.mxu0 0.0
  %252 = vmatpush1.msra.mxu0 %v137
  %253 = vmatprep.subr.mxu0 0.0
  %254 = vmatpush1.msra.mxu0 %v136
  %255 = vmatprep.subr.mxu0 0.0
  %256 = vmatpush1.msra.mxu0 %v135
  %257 = vmatprep.subr.mxu0 0.0
  %258 = vmatpush1.msra.mxu0 %v134
  %259 = vmatprep.subr.mxu0 0.0
  %260 = vmatpush1.msra.mxu0 %v133
  %261 = vmatprep.subr.mxu0 0.0
  %262 = vmatpush1.msra.mxu0 %v132
  %263 = vmatprep.subr.mxu0 0.0
  %264 = vmatpush1.msra.mxu0 %v131
  %265 = vmatprep.subr.mxu0 0.0
  %266 = vmatpush2.msra.mxu0 %v162
  %267 = vmatprep.subr.mxu0 0.0
  %268 = vmatpush2.msra.mxu0 %v161
  %269 = vmatprep.subr.mxu0 0.0
  %270 = vmatpush2.msra.mxu0 %v160
  %271 = vmatprep.subr.mxu0 0.0
  %272 = vmatpush2.msra.mxu0 %v159
  %273 = vmatprep.subr.mxu0 0.0
  %274 = vmatpush2.msra.mxu0 %v158
  %275 = vmatprep.subr.mxu0 0.0
  %276 = vmatpush2.msra.mxu0 %v157
  %277 = vmatprep.subr.mxu0 0.0
  %278 = vmatpush2.msra.mxu0 %v156
  %279 = vmatprep.subr.mxu0 0.0
  %280 = vmatpush2.msra.mxu0 %v155
  %281 = vmatprep.subr.mxu0 0.0
  %282 = vmatpush2.msra.mxu0 %v154
  %283 = vmatprep.subr.mxu0 0.0
  %284 = vmatpush2.msra.mxu0 %v153
  %285 = vmatprep.subr.mxu0 0.0
  %286 = vmatpush2.msra.mxu0 %v152
  %287 = vmatprep.subr.mxu0 0.0
  %288 = vmatpush2.msra.mxu0 %v151
  %289 = vmatprep.subr.mxu0 0.0
  %290 = vmatpush2.msra.mxu0 %v150
  %291 = vmatprep.subr.mxu0 0.0
  %292 = vmatpush2.msra.mxu0 %v149
  %293 = vmatprep.subr.mxu0 0.0
  %294 = vmatpush2.msra.mxu0 %v148
  %295 = vmatprep.subr.mxu0 0.0
  %296 = vmatpush2.msra.mxu0 %v147
  %297 = vmatprep.mubr.f32.mxu0 %v35
  %298 = vmatmul.mubr.f32.gmra.mxu0 %v34
  %v299 = vpop.f32.mrf.mxu0
  %v300 = vadd.f32 %v231, %v299
  %v301 = vpop.f32.mrf.mxu0
  %302 = vmatprep.mubr.f32.mxu0 %v41
  %303 = vmatmul.mubr.f32.gmra.mxu0 %v40
  %v304 = vpop.f32.mrf.mxu0
  %v305 = vadd.f32 %v231, %v304
  %v306 = vpop.f32.mrf.mxu0
  %307 = vmatprep.mubr.f32.mxu0 %v47
  %308 = vmatmul.mubr.f32.gmra.mxu0 %v46
  %v309 = vpop.f32.mrf.mxu0
  %v310 = vadd.f32 %v231, %v309
  %v311 = vpop.f32.mrf.mxu0
  %312 = vmatprep.mubr.f32.mxu0 %v53
  %313 = vmatmul.mubr.f32.gmra.mxu0 %v52
  %v314 = vpop.f32.mrf.mxu0
  %v315 = vadd.f32 %v231, %v314
  %v316 = vpop.f32.mrf.mxu0
  %317 = vmatprep.mubr.f32.mxu0 %v59
  %318 = vmatmul.mubr.f32.gmra.mxu0 %v58
  %v319 = vpop.f32.mrf.mxu0
  %v320 = vadd.f32 %v231, %v319
  %v321 = vpop.f32.mrf.mxu0
  %322 = vmatprep.mubr.f32.mxu0 %v65
  %323 = vmatmul.mubr.f32.gmra.mxu0 %v64
  %v324 = vpop.f32.mrf.mxu0
  %v325 = vadd.f32 %v231, %v324
  %v326 = vpop.f32.mrf.mxu0
  %327 = vmatprep.mubr.f32.mxu0 %v71
  %328 = vmatmul.mubr.f32.gmra.mxu0 %v70
  %v329 = vpop.f32.mrf.mxu0
  %v330 = vadd.f32 %v231, %v329
  %v331 = vpop.f32.mrf.mxu0
  %332 = vmatprep.mubr.f32.mxu0 %v77
  %333 = vmatmul.mubr.f32.gmra.mxu0 %v76
  %v334 = vpop.f32.mrf.mxu0
  %v335 = vadd.f32 %v231, %v334
  %v336 = vpop.f32.mrf.mxu0
  %337 = vmatprep.mubr.f32.mxu0 %v83
  %338 = vmatmul.mubr.f32.gmra.mxu0 %v82
  %v339 = vpop.f32.mrf.mxu0
  %v340 = vadd.f32 %v231, %v339
  %v341 = vpop.f32.mrf.mxu0
  %342 = vmatprep.mubr.f32.mxu0 %v89
  %343 = vmatmul.mubr.f32.gmra.mxu0 %v88
  %v344 = vpop.f32.mrf.mxu0
  %v345 = vadd.f32 %v231, %v344
  %v346 = vpop.f32.mrf.mxu0
  %347 = vmatprep.mubr.f32.mxu0 %v95
  %348 = vmatmul.mubr.f32.gmra.mxu0 %v94
  %v349 = vpop.f32.mrf.mxu0
  %v350 = vadd.f32 %v231, %v349
  %v351 = vpop.f32.mrf.mxu0
  %352 = vmatprep.mubr.f32.mxu0 %v101
  %353 = vmatmul.mubr.f32.gmra.mxu0 %v100
  %v354 = vpop.f32.mrf.mxu0
  %v355 = vadd.f32 %v231, %v354
  %v356 = vpop.f32.mrf.mxu0
  %357 = vmatprep.mubr.f32.mxu0 %v107
  %358 = vmatmul.mubr.f32.gmra.mxu0 %v106
  %v359 = vpop.f32.mrf.mxu0
  %v360 = vadd.f32 %v231, %v359
  %v361 = vpop.f32.mrf.mxu0
  %362 = vmatprep.mubr.f32.mxu0 %v113
  %363 = vmatmul.mubr.f32.gmra.mxu0 %v112
  %v364 = vpop.f32.mrf.mxu0
  %v365 = vadd.f32 %v231, %v364
  %v366 = vpop.f32.mrf.mxu0
  %367 = vmatprep.mubr.f32.mxu0 %v119
  %368 = vmatmul.mubr.f32.gmra.mxu0 %v118
  %v369 = vpop.f32.mrf.mxu0
  %v370 = vadd.f32 %v231, %v369
  %v371 = vpop.f32.mrf.mxu0
  %372 = vmatprep.mubr.f32.mxu0 %v125
  %373 = vmatmul.mubr.f32.gmra.mxu0 %v124
  %v374 = vpop.f32.mrf.mxu0
  %v375 = vadd.f32 %v231, %v374
  %v376 = vpop.f32.mrf.mxu0
  %377 = vdwg.mxu0
  %378 = vmatprep.subr.mxu0 0.0
  %379 = vmatpush1.msra.mxu0 %v178
  %380 = vmatprep.subr.mxu0 0.0
  %381 = vmatpush1.msra.mxu0 %v177
  %382 = vmatprep.subr.mxu0 0.0
  %383 = vmatpush1.msra.mxu0 %v176
  %384 = vmatprep.subr.mxu0 0.0
  %385 = vmatpush1.msra.mxu0 %v175
  %386 = vmatprep.subr.mxu0 0.0
  %387 = vmatpush1.msra.mxu0 %v174
  %388 = vmatprep.subr.mxu0 0.0
  %389 = vmatpush1.msra.mxu0 %v173
  %390 = vmatprep.subr.mxu0 0.0
  %391 = vmatpush1.msra.mxu0 %v172
  %392 = vmatprep.subr.mxu0 0.0
  %393 = vmatpush1.msra.mxu0 %v171
  %394 = vmatprep.subr.mxu0 0.0
  %395 = vmatpush1.msra.mxu0 %v170
  %396 = vmatprep.subr.mxu0 0.0
  %397 = vmatpush1.msra.mxu0 %v169
  %398 = vmatprep.subr.mxu0 0.0
  %399 = vmatpush1.msra.mxu0 %v168
  %400 = vmatprep.subr.mxu0 0.0
  %401 = vmatpush1.msra.mxu0 %v167
  %402 = vmatprep.subr.mxu0 0.0
  %403 = vmatpush1.msra.mxu0 %v166
  %404 = vmatprep.subr.mxu0 0.0
  %405 = vmatpush1.msra.mxu0 %v165
  %406 = vmatprep.subr.mxu0 0.0
  %407 = vmatpush1.msra.mxu0 %v164
  %408 = vmatprep.subr.mxu0 0.0
  %409 = vmatpush1.msra.mxu0 %v163
  %410 = vmatprep.subr.mxu0 0.0
  %411 = vmatpush2.msra.mxu0 %v194
  %412 = vmatprep.subr.mxu0 0.0
  %413 = vmatpush2.msra.mxu0 %v193
  %414 = vmatprep.subr.mxu0 0.0
  %415 = vmatpush2.msra.mxu0 %v192
  %416 = vmatprep.subr.mxu0 0.0
  %417 = vmatpush2.msra.mxu0 %v191
  %418 = vmatprep.subr.mxu0 0.0
  %419 = vmatpush2.msra.mxu0 %v190
  %420 = vmatprep.subr.mxu0 0.0
  %421 = vmatpush2.msra.mxu0 %v189
  %422 = vmatprep.subr.mxu0 0.0
  %423 = vmatpush2.msra.mxu0 %v188
  %424 = vmatprep.subr.mxu0 0.0
  %425 = vmatpush2.msra.mxu0 %v187
  %426 = vmatprep.subr.mxu0 0.0
  %427 = vmatpush2.msra.mxu0 %v186
  %428 = vmatprep.subr.mxu0 0.0
  %429 = vmatpush2.msra.mxu0 %v185
  %430 = vmatprep.subr.mxu0 0.0
  %431 = vmatpush2.msra.mxu0 %v184
  %432 = vmatprep.subr.mxu0 0.0
  %433 = vmatpush2.msra.mxu0 %v183
  %434 = vmatprep.subr.mxu0 0.0
  %435 = vmatpush2.msra.mxu0 %v182
  %436 = vmatprep.subr.mxu0 0.0
  %437 = vmatpush2.msra.mxu0 %v181
  %438 = vmatprep.subr.mxu0 0.0
  %439 = vmatpush2.msra.mxu0 %v180
  %440 = vmatprep.subr.mxu0 0.0
  %441 = vmatpush2.msra.mxu0 %v179
  %442 = vmatprep.mubr.f32.mxu0 %v37
  %443 = vmatmul.mubr.f32.gmra.mxu0 %v36
  %v444 = vpop.f32.mrf.mxu0
  %v445 = vadd.f32 %v300, %v444
  %v446 = vpop.f32.mrf.mxu0
  %447 = vmatprep.mubr.f32.mxu0 %v43
  %448 = vmatmul.mubr.f32.gmra.mxu0 %v42
  %v449 = vpop.f32.mrf.mxu0
  %v450 = vadd.f32 %v305, %v449
  %v451 = vpop.f32.mrf.mxu0
  %452 = vmatprep.mubr.f32.mxu0 %v49
  %453 = vmatmul.mubr.f32.gmra.mxu0 %v48
  %v454 = vpop.f32.mrf.mxu0
  %v455 = vadd.f32 %v310, %v454
  %v456 = vpop.f32.mrf.mxu0
  %457 = vmatprep.mubr.f32.mxu0 %v55
  %458 = vmatmul.mubr.f32.gmra.mxu0 %v54
  %v459 = vpop.f32.mrf.mxu0
  %v460 = vadd.f32 %v315, %v459
  %v461 = vpop.f32.mrf.mxu0
  %462 = vmatprep.mubr.f32.mxu0 %v61
  %463 = vmatmul.mubr.f32.gmra.mxu0 %v60
  %v464 = vpop.f32.mrf.mxu0
  %v465 = vadd.f32 %v320, %v464
  %v466 = vpop.f32.mrf.mxu0
  %467 = vmatprep.mubr.f32.mxu0 %v67
  %468 = vmatmul.mubr.f32.gmra.mxu0 %v66
  %v469 = vpop.f32.mrf.mxu0
  %v470 = vadd.f32 %v325, %v469
  %v471 = vpop.f32.mrf.mxu0
  %472 = vmatprep.mubr.f32.mxu0 %v73
  %473 = vmatmul.mubr.f32.gmra.mxu0 %v72
  %v474 = vpop.f32.mrf.mxu0
  %v475 = vadd.f32 %v330, %v474
  %v476 = vpop.f32.mrf.mxu0
  %477 = vmatprep.mubr.f32.mxu0 %v79
  %478 = vmatmul.mubr.f32.gmra.mxu0 %v78
  %v479 = vpop.f32.mrf.mxu0
  %v480 = vadd.f32 %v335, %v479
  %v481 = vpop.f32.mrf.mxu0
  %482 = vmatprep.mubr.f32.mxu0 %v85
  %483 = vmatmul.mubr.f32.gmra.mxu0 %v84
  %v484 = vpop.f32.mrf.mxu0
  %v485 = vadd.f32 %v340, %v484
  %v486 = vpop.f32.mrf.mxu0
  %487 = vmatprep.mubr.f32.mxu0 %v91
  %488 = vmatmul.mubr.f32.gmra.mxu0 %v90
  %v489 = vpop.f32.mrf.mxu0
  %v490 = vadd.f32 %v345, %v489
  %v491 = vpop.f32.mrf.mxu0
  %492 = vmatprep.mubr.f32.mxu0 %v97
  %493 = vmatmul.mubr.f32.gmra.mxu0 %v96
  %v494 = vpop.f32.mrf.mxu0
  %v495 = vadd.f32 %v350, %v494
  %v496 = vpop.f32.mrf.mxu0
  %497 = vmatprep.mubr.f32.mxu0 %v103
  %498 = vmatmul.mubr.f32.gmra.mxu0 %v102
  %v499 = vpop.f32.mrf.mxu0
  %v500 = vadd.f32 %v355, %v499
  %v501 = vpop.f32.mrf.mxu0
  %502 = vmatprep.mubr.f32.mxu0 %v109
  %503 = vmatmul.mubr.f32.gmra.mxu0 %v108
  %v504 = vpop.f32.mrf.mxu0
  %v505 = vadd.f32 %v360, %v504
  %v506 = vpop.f32.mrf.mxu0
  %507 = vmatprep.mubr.f32.mxu0 %v115
  %508 = vmatmul.mubr.f32.gmra.mxu0 %v114
  %v509 = vpop.f32.mrf.mxu0
  %v510 = vadd.f32 %v365, %v509
  %v511 = vpop.f32.mrf.mxu0
  %512 = vmatprep.mubr.f32.mxu0 %v121
  %513 = vmatmul.mubr.f32.gmra.mxu0 %v120
  %v514 = vpop.f32.mrf.mxu0
  %v515 = vadd.f32 %v370, %v514
  %v516 = vpop.f32.mrf.mxu0
  %517 = vmatprep.mubr.f32.mxu0 %v127
  %518 = vmatmul.mubr.f32.gmra.mxu0 %v126
  %v519 = vpop.f32.mrf.mxu0
  %v520 = vadd.f32 %v375, %v519
  %v521 = vpop.f32.mrf.mxu0
  %522 = vdwg.mxu0
  %523 = vmatprep.subr.mxu0 0.0
  %524 = vmatpush1.msra.mxu0 %v210
  %525 = vmatprep.subr.mxu0 0.0
  %526 = vmatpush1.msra.mxu0 %v209
  %527 = vmatprep.subr.mxu0 0.0
  %528 = vmatpush1.msra.mxu0 %v208
  %529 = vmatprep.subr.mxu0 0.0
  %530 = vmatpush1.msra.mxu0 %v207
  %531 = vmatprep.subr.mxu0 0.0
  %532 = vmatpush1.msra.mxu0 %v206
  %533 = vmatprep.subr.mxu0 0.0
  %534 = vmatpush1.msra.mxu0 %v205
  %535 = vmatprep.subr.mxu0 0.0
  %536 = vmatpush1.msra.mxu0 %v204
  %537 = vmatprep.subr.mxu0 0.0
  %538 = vmatpush1.msra.mxu0 %v203
  %539 = vmatprep.subr.mxu0 0.0
  %540 = vmatpush1.msra.mxu0 %v202
  %541 = vmatprep.subr.mxu0 0.0
  %542 = vmatpush1.msra.mxu0 %v201
  %543 = vmatprep.subr.mxu0 0.0
  %544 = vmatpush1.msra.mxu0 %v200
  %545 = vmatprep.subr.mxu0 0.0
  %546 = vmatpush1.msra.mxu0 %v199
  %547 = vmatprep.subr.mxu0 0.0
  %548 = vmatpush1.msra.mxu0 %v198
  %549 = vmatprep.subr.mxu0 0.0
  %550 = vmatpush1.msra.mxu0 %v197
  %551 = vmatprep.subr.mxu0 0.0
  %552 = vmatpush1.msra.mxu0 %v196
  %553 = vmatprep.subr.mxu0 0.0
  %554 = vmatpush1.msra.mxu0 %v195
  %555 = vmatprep.subr.mxu0 0.0
  %556 = vmatpush2.msra.mxu0 %v226
  %557 = vmatprep.subr.mxu0 0.0
  %558 = vmatpush2.msra.mxu0 %v225
  %559 = vmatprep.subr.mxu0 0.0
  %560 = vmatpush2.msra.mxu0 %v224
  %561 = vmatprep.subr.mxu0 0.0
  %562 = vmatpush2.msra.mxu0 %v223
  %563 = vmatprep.subr.mxu0 0.0
  %564 = vmatpush2.msra.mxu0 %v222
  %565 = vmatprep.subr.mxu0 0.0
  %566 = vmatpush2.msra.mxu0 %v221
  %567 = vmatprep.subr.mxu0 0.0
  %568 = vmatpush2.msra.mxu0 %v220
  %569 = vmatprep.subr.mxu0 0.0
  %570 = vmatpush2.msra.mxu0 %v219
  %571 = vmatprep.subr.mxu0 0.0
  %572 = vmatpush2.msra.mxu0 %v218
  %573 = vmatprep.subr.mxu0 0.0
  %574 = vmatpush2.msra.mxu0 %v217
  %575 = vmatprep.subr.mxu0 0.0
  %576 = vmatpush2.msra.mxu0 %v216
  %577 = vmatprep.subr.mxu0 0.0
  %578 = vmatpush2.msra.mxu0 %v215
  %579 = vmatprep.subr.mxu0 0.0
  %580 = vmatpush2.msra.mxu0 %v214
  %581 = vmatprep.subr.mxu0 0.0
  %582 = vmatpush2.msra.mxu0 %v213
  %583 = vmatprep.subr.mxu0 0.0
  %584 = vmatpush2.msra.mxu0 %v212
  %585 = vmatprep.subr.mxu0 0.0
  %586 = vmatpush2.msra.mxu0 %v211
  %587 = vmatprep.mubr.f32.mxu0 %v39
  %588 = vmatmul.mubr.f32.gmra.mxu0 %v38
  %v589 = vpop.f32.mrf.mxu0
  %v590 = vadd.f32 %v445, %v589
  %v591 = vpop.f32.mrf.mxu0
  %592 = vmatprep.mubr.f32.mxu0 %v45
  %593 = vmatmul.mubr.f32.gmra.mxu0 %v44
  %v594 = vpop.f32.mrf.mxu0
  %v595 = vadd.f32 %v450, %v594
  %v596 = vpop.f32.mrf.mxu0
  %597 = vmatprep.mubr.f32.mxu0 %v51
  %598 = vmatmul.mubr.f32.gmra.mxu0 %v50
  %v599 = vpop.f32.mrf.mxu0
  %v600 = vadd.f32 %v455, %v599
  %v601 = vpop.f32.mrf.mxu0
  %602 = vmatprep.mubr.f32.mxu0 %v57
  %603 = vmatmul.mubr.f32.gmra.mxu0 %v56
  %v604 = vpop.f32.mrf.mxu0
  %v605 = vadd.f32 %v460, %v604
  %v606 = vpop.f32.mrf.mxu0
  %607 = vmatprep.mubr.f32.mxu0 %v63
  %608 = vmatmul.mubr.f32.gmra.mxu0 %v62
  %v609 = vpop.f32.mrf.mxu0
  %v610 = vadd.f32 %v465, %v609
  %v611 = vpop.f32.mrf.mxu0
  %612 = vmatprep.mubr.f32.mxu0 %v69
  %613 = vmatmul.mubr.f32.gmra.mxu0 %v68
  %v614 = vpop.f32.mrf.mxu0
  %v615 = vadd.f32 %v470, %v614
  %v616 = vpop.f32.mrf.mxu0
  %617 = vmatprep.mubr.f32.mxu0 %v75
  %618 = vmatmul.mubr.f32.gmra.mxu0 %v74
  %v619 = vpop.f32.mrf.mxu0
  %v620 = vadd.f32 %v475, %v619
  %v621 = vpop.f32.mrf.mxu0
  %622 = vmatprep.mubr.f32.mxu0 %v81
  %623 = vmatmul.mubr.f32.gmra.mxu0 %v80
  %v624 = vpop.f32.mrf.mxu0
  %v625 = vadd.f32 %v480, %v624
  %v626 = vpop.f32.mrf.mxu0
  %627 = vmatprep.mubr.f32.mxu0 %v87
  %628 = vmatmul.mubr.f32.gmra.mxu0 %v86
  %v629 = vpop.f32.mrf.mxu0
  %v630 = vadd.f32 %v485, %v629
  %v631 = vpop.f32.mrf.mxu0
  %632 = vmatprep.mubr.f32.mxu0 %v93
  %633 = vmatmul.mubr.f32.gmra.mxu0 %v92
  %v634 = vpop.f32.mrf.mxu0
  %v635 = vadd.f32 %v490, %v634
  %v636 = vpop.f32.mrf.mxu0
  %637 = vmatprep.mubr.f32.mxu0 %v99
  %638 = vmatmul.mubr.f32.gmra.mxu0 %v98
  %v639 = vpop.f32.mrf.mxu0
  %v640 = vadd.f32 %v495, %v639
  %v641 = vpop.f32.mrf.mxu0
  %642 = vmatprep.mubr.f32.mxu0 %v105
  %643 = vmatmul.mubr.f32.gmra.mxu0 %v104
  %v644 = vpop.f32.mrf.mxu0
  %v645 = vadd.f32 %v500, %v644
  %v646 = vpop.f32.mrf.mxu0
  %647 = vmatprep.mubr.f32.mxu0 %v111
  %648 = vmatmul.mubr.f32.gmra.mxu0 %v110
  %v649 = vpop.f32.mrf.mxu0
  %v650 = vadd.f32 %v505, %v649
  %v651 = vpop.f32.mrf.mxu0
  %652 = vmatprep.mubr.f32.mxu0 %v117
  %653 = vmatmul.mubr.f32.gmra.mxu0 %v116
  %v654 = vpop.f32.mrf.mxu0
  %v655 = vadd.f32 %v510, %v654
  %v656 = vpop.f32.mrf.mxu0
  %657 = vmatprep.mubr.f32.mxu0 %v123
  %658 = vmatmul.mubr.f32.gmra.mxu0 %v122
  %v659 = vpop.f32.mrf.mxu0
  %v660 = vadd.f32 %v515, %v659
  %v661 = vpop.f32.mrf.mxu0
  %662 = vmatprep.mubr.f32.mxu0 %v129
  %663 = vmatmul.mubr.f32.gmra.mxu0 %v128
  %v664 = vpop.f32.mrf.mxu0
  %v665 = vadd.f32 %v520, %v664
  %v666 = vpop.f32.mrf.mxu0
  %667 = vdwg.mxu0
  %668 = vst [vmem:[#allocation2] sm:$0xff] %v590
  %669 = vst [vmem:[#allocation2 + $0x8] sm:$0xff] %v595
  %670 = vst [vmem:[#allocation2 + $0x10] sm:$0xff] %v600
  %671 = vst [vmem:[#allocation2 + $0x18] sm:$0xff] %v605
  %672 = vst [vmem:[#allocation2 + $0x20] sm:$0xff] %v610
  %673 = vst [vmem:[#allocation2 + $0x28] sm:$0xff] %v615
  %674 = vst [vmem:[#allocation2 + $0x30] sm:$0xff] %v620
  %675 = vst [vmem:[#allocation2 + $0x38] sm:$0xff] %v625
  %676 = vst [vmem:[#allocation2 + $0x40] sm:$0xff] %v630
  %677 = vst [vmem:[#allocation2 + $0x48] sm:$0xff] %v635
  %678 = vst [vmem:[#allocation2 + $0x50] sm:$0xff] %v640
  %679 = vst [vmem:[#allocation2 + $0x58] sm:$0xff] %v645
  %680 = vst [vmem:[#allocation2 + $0x60] sm:$0xff] %v650
  %681 = vst [vmem:[#allocation2 + $0x68] sm:$0xff] %v655
  %682 = vst [vmem:[#allocation2 + $0x70] sm:$0xff] %v660
  %683 = vst [vmem:[#allocation2 + $0x78] sm:$0xff] %v665
  %v684 = vld [vmem:[%s1] sm:$0xff]
  %v685 = vld [vmem:[%s1 + $0x8] sm:$0xff]
  %v686 = vld [vmem:[%s1 + $0x10] sm:$0xff]
  %v687 = vld [vmem:[%s1 + $0x18] sm:$0xff]
  %v688 = vld [vmem:[%s1 + $0x20] sm:$0xff]
  %v689 = vld [vmem:[%s1 + $0x28] sm:$0xff]
  %v690 = vld [vmem:[%s1 + $0x30] sm:$0xff]
  %v691 = vld [vmem:[%s1 + $0x38] sm:$0xff]
  %v692 = vld [vmem:[%s1 + $0x40] sm:$0xff]
  %v693 = vld [vmem:[%s1 + $0x48] sm:$0xff]
  %v694 = vld [vmem:[%s1 + $0x50] sm:$0xff]
  %v695 = vld [vmem:[%s1 + $0x58] sm:$0xff]
  %v696 = vld [vmem:[%s1 + $0x60] sm:$0xff]
  %v697 = vld [vmem:[%s1 + $0x68] sm:$0xff]
  %v698 = vld [vmem:[%s1 + $0x70] sm:$0xff]
  %v699 = vld [vmem:[%s1 + $0x78] sm:$0xff]
  %v700 = vld [vmem:[%s1 + $0x80] sm:$0xff]
  %v701 = vld [vmem:[%s1 + $0x88] sm:$0xff]
  %v702 = vld [vmem:[%s1 + $0x90] sm:$0xff]
  %v703 = vld [vmem:[%s1 + $0x98] sm:$0xff]
  %v704 = vld [vmem:[%s1 + $0xa0] sm:$0xff]
  %v705 = vld [vmem:[%s1 + $0xa8] sm:$0xff]
  %v706 = vld [vmem:[%s1 + $0xb0] sm:$0xff]
  %v707 = vld [vmem:[%s1 + $0xb8] sm:$0xff]
  %v708 = vld [vmem:[%s1 + $0xc0] sm:$0xff]
  %v709 = vld [vmem:[%s1 + $0xc8] sm:$0xff]
  %v710 = vld [vmem:[%s1 + $0xd0] sm:$0xff]
  %v711 = vld [vmem:[%s1 + $0xd8] sm:$0xff]
  %v712 = vld [vmem:[%s1 + $0xe0] sm:$0xff]
  %v713 = vld [vmem:[%s1 + $0xe8] sm:$0xff]
  %v714 = vld [vmem:[%s1 + $0xf0] sm:$0xff]
  %v715 = vld [vmem:[%s1 + $0xf8] sm:$0xff]
  %v716 = vld [vmem:[%s1 + $0x100] sm:$0xff]
  %v717 = vld [vmem:[%s1 + $0x108] sm:$0xff]
  %v718 = vld [vmem:[%s1 + $0x110] sm:$0xff]
  %v719 = vld [vmem:[%s1 + $0x118] sm:$0xff]
  %v720 = vld [vmem:[%s1 + $0x120] sm:$0xff]
  %v721 = vld [vmem:[%s1 + $0x128] sm:$0xff]
  %v722 = vld [vmem:[%s1 + $0x130] sm:$0xff]
  %v723 = vld [vmem:[%s1 + $0x138] sm:$0xff]
  %v724 = vld [vmem:[%s1 + $0x140] sm:$0xff]
  %v725 = vld [vmem:[%s1 + $0x148] sm:$0xff]
  %v726 = vld [vmem:[%s1 + $0x150] sm:$0xff]
  %v727 = vld [vmem:[%s1 + $0x158] sm:$0xff]
  %v728 = vld [vmem:[%s1 + $0x160] sm:$0xff]
  %v729 = vld [vmem:[%s1 + $0x168] sm:$0xff]
  %v730 = vld [vmem:[%s1 + $0x170] sm:$0xff]
  %v731 = vld [vmem:[%s1 + $0x178] sm:$0xff]
  %v732 = vld [vmem:[%s1 + $0x180] sm:$0xff]
  %v733 = vld [vmem:[%s1 + $0x188] sm:$0xff]
  %v734 = vld [vmem:[%s1 + $0x190] sm:$0xff]
  %v735 = vld [vmem:[%s1 + $0x198] sm:$0xff]
  %v736 = vld [vmem:[%s1 + $0x1a0] sm:$0xff]
  %v737 = vld [vmem:[%s1 + $0x1a8] sm:$0xff]
  %v738 = vld [vmem:[%s1 + $0x1b0] sm:$0xff]
  %v739 = vld [vmem:[%s1 + $0x1b8] sm:$0xff]
  %v740 = vld [vmem:[%s1 + $0x1c0] sm:$0xff]
  %v741 = vld [vmem:[%s1 + $0x1c8] sm:$0xff]
  %v742 = vld [vmem:[%s1 + $0x1d0] sm:$0xff]
  %v743 = vld [vmem:[%s1 + $0x1d8] sm:$0xff]
  %v744 = vld [vmem:[%s1 + $0x1e0] sm:$0xff]
  %v745 = vld [vmem:[%s1 + $0x1e8] sm:$0xff]
  %v746 = vld [vmem:[%s1 + $0x1f0] sm:$0xff]
  %v747 = vld [vmem:[%s1 + $0x1f8] sm:$0xff]
  %v748 = vld [vmem:[%s1 + $0x200] sm:$0xff]
  %v749 = vld [vmem:[%s1 + $0x208] sm:$0xff]
  %v750 = vld [vmem:[%s1 + $0x210] sm:$0xff]
  %v751 = vld [vmem:[%s1 + $0x218] sm:$0xff]
  %v752 = vld [vmem:[%s1 + $0x220] sm:$0xff]
  %v753 = vld [vmem:[%s1 + $0x228] sm:$0xff]
  %v754 = vld [vmem:[%s1 + $0x230] sm:$0xff]
  %v755 = vld [vmem:[%s1 + $0x238] sm:$0xff]
  %v756 = vld [vmem:[%s3] sm:$0xff]
  %v757 = vld [vmem:[%s3 + $0x8] sm:$0xff]
  %v758 = vld [vmem:[%s3 + $0x10] sm:$0xff]
  %v759 = vld [vmem:[%s3 + $0x18] sm:$0xff]
  %v760 = vld [vmem:[%s3 + $0x20] sm:$0xff]
  %v761 = vld [vmem:[%s3 + $0x28] sm:$0xff]
  %v762 = vld [vmem:[%s3 + $0x30] sm:$0xff]
  %v763 = vld [vmem:[%s3 + $0x38] sm:$0xff]
  %v764 = vld [vmem:[%s3 + $0x40] sm:$0xff]
  %v765 = vld [vmem:[%s3 + $0x48] sm:$0xff]
  %v766 = vld [vmem:[%s3 + $0x50] sm:$0xff]
  %v767 = vld [vmem:[%s3 + $0x58] sm:$0xff]
  %v768 = vld [vmem:[%s3 + $0x60] sm:$0xff]
  %v769 = vld [vmem:[%s3 + $0x68] sm:$0xff]
  %v770 = vld [vmem:[%s3 + $0x70] sm:$0xff]
  %v771 = vld [vmem:[%s3 + $0x78] sm:$0xff]
  %v772 = vld [vmem:[%s3 + $0x80] sm:$0xff]
  %v773 = vld [vmem:[%s3 + $0x88] sm:$0xff]
  %v774 = vld [vmem:[%s3 + $0x90] sm:$0xff]
  %v775 = vld [vmem:[%s3 + $0x98] sm:$0xff]
  %v776 = vld [vmem:[%s3 + $0xa0] sm:$0xff]
  %v777 = vld [vmem:[%s3 + $0xa8] sm:$0xff]
  %v778 = vld [vmem:[%s3 + $0xb0] sm:$0xff]
  %v779 = vld [vmem:[%s3 + $0xb8] sm:$0xff]
  %v780 = vld [vmem:[%s3 + $0xc0] sm:$0xff]
  %v781 = vld [vmem:[%s3 + $0xc8] sm:$0xff]
  %v782 = vld [vmem:[%s3 + $0xd0] sm:$0xff]
  %v783 = vld [vmem:[%s3 + $0xd8] sm:$0xff]
  %v784 = vld [vmem:[%s3 + $0xe0] sm:$0xff]
  %v785 = vld [vmem:[%s3 + $0xe8] sm:$0xff]
  %v786 = vld [vmem:[%s3 + $0xf0] sm:$0xff]
  %v787 = vld [vmem:[%s3 + $0xf8] sm:$0xff]
  %v788 = vld [vmem:[%s3 + $0x100] sm:$0xff]
  %v789 = vld [vmem:[%s3 + $0x108] sm:$0xff]
  %v790 = vld [vmem:[%s3 + $0x110] sm:$0xff]
  %v791 = vld [vmem:[%s3 + $0x118] sm:$0xff]
  %v792 = vld [vmem:[%s3 + $0x120] sm:$0xff]
  %v793 = vld [vmem:[%s3 + $0x128] sm:$0xff]
  %v794 = vld [vmem:[%s3 + $0x130] sm:$0xff]
  %v795 = vld [vmem:[%s3 + $0x138] sm:$0xff]
  %v796 = vld [vmem:[%s3 + $0x140] sm:$0xff]
  %v797 = vld [vmem:[%s3 + $0x148] sm:$0xff]
  %v798 = vld [vmem:[%s3 + $0x150] sm:$0xff]
  %v799 = vld [vmem:[%s3 + $0x158] sm:$0xff]
  %v800 = vld [vmem:[%s3 + $0x160] sm:$0xff]
  %v801 = vld [vmem:[%s3 + $0x168] sm:$0xff]
  %v802 = vld [vmem:[%s3 + $0x170] sm:$0xff]
  %v803 = vld [vmem:[%s3 + $0x178] sm:$0xff]
  %v804 = vld [vmem:[%s3 + $0x180] sm:$0xff]
  %v805 = vld [vmem:[%s3 + $0x188] sm:$0xff]
  %v806 = vld [vmem:[%s3 + $0x190] sm:$0xff]
  %v807 = vld [vmem:[%s3 + $0x198] sm:$0xff]
  %v808 = vld [vmem:[%s3 + $0x1a0] sm:$0xff]
  %v809 = vld [vmem:[%s3 + $0x1a8] sm:$0xff]
  %v810 = vld [vmem:[%s3 + $0x1b0] sm:$0xff]
  %v811 = vld [vmem:[%s3 + $0x1b8] sm:$0xff]
  %v812 = vld [vmem:[%s3 + $0x1c0] sm:$0xff]
  %v813 = vld [vmem:[%s3 + $0x1c8] sm:$0xff]
  %v814 = vld [vmem:[%s3 + $0x1d0] sm:$0xff]
  %v815 = vld [vmem:[%s3 + $0x1d8] sm:$0xff]
  %v816 = vld [vmem:[%s3 + $0x1e0] sm:$0xff]
  %v817 = vld [vmem:[%s3 + $0x1e8] sm:$0xff]
  %v818 = vld [vmem:[%s3 + $0x1f0] sm:$0xff]
  %v819 = vld [vmem:[%s3 + $0x1f8] sm:$0xff]
  %v820 = vld [vmem:[%s3 + $0x200] sm:$0xff]
  %v821 = vld [vmem:[%s3 + $0x208] sm:$0xff]
  %v822 = vld [vmem:[%s3 + $0x210] sm:$0xff]
  %v823 = vld [vmem:[%s3 + $0x218] sm:$0xff]
  %v824 = vld [vmem:[%s3 + $0x220] sm:$0xff]
  %v825 = vld [vmem:[%s3 + $0x228] sm:$0xff]
  %v826 = vld [vmem:[%s3 + $0x230] sm:$0xff]
  %v827 = vld [vmem:[%s3 + $0x238] sm:$0xff]
  %v828 = vld [vmem:[%s3 + $0x240] sm:$0xff]
  %v829 = vld [vmem:[%s3 + $0x248] sm:$0xff]
  %v830 = vld [vmem:[%s3 + $0x250] sm:$0xff]
  %v831 = vld [vmem:[%s3 + $0x258] sm:$0xff]
  %v832 = vld [vmem:[%s3 + $0x260] sm:$0xff]
  %v833 = vld [vmem:[%s3 + $0x268] sm:$0xff]
  %v834 = vld [vmem:[%s3 + $0x270] sm:$0xff]
  %v835 = vld [vmem:[%s3 + $0x278] sm:$0xff]
  %v836 = vld [vmem:[%s3 + $0x280] sm:$0xff]
  %v837 = vld [vmem:[%s3 + $0x288] sm:$0xff]
  %v838 = vld [vmem:[%s3 + $0x290] sm:$0xff]
  %v839 = vld [vmem:[%s3 + $0x298] sm:$0xff]
  %v840 = vld [vmem:[%s3 + $0x2a0] sm:$0xff]
  %v841 = vld [vmem:[%s3 + $0x2a8] sm:$0xff]
  %v842 = vld [vmem:[%s3 + $0x2b0] sm:$0xff]
  %v843 = vld [vmem:[%s3 + $0x2b8] sm:$0xff]
  %v844 = vld [vmem:[%s3 + $0x2c0] sm:$0xff]
  %v845 = vld [vmem:[%s3 + $0x2c8] sm:$0xff]
  %v846 = vld [vmem:[%s3 + $0x2d0] sm:$0xff]
  %v847 = vld [vmem:[%s3 + $0x2d8] sm:$0xff]
  %v848 = vld [vmem:[%s3 + $0x2e0] sm:$0xff]
  %v849 = vld [vmem:[%s3 + $0x2e8] sm:$0xff]
  %v850 = vld [vmem:[%s3 + $0x2f0] sm:$0xff]
  %v851 = vld [vmem:[%s3 + $0x2f8] sm:$0xff]
  %852 = vmatprep.subr.mxu0 0.0
  %853 = vmatpush1.msra.mxu0 %v771
  %854 = vmatprep.subr.mxu0 0.0
  %855 = vmatpush1.msra.mxu0 %v770
  %856 = vmatprep.subr.mxu0 0.0
  %857 = vmatpush1.msra.mxu0 %v769
  %858 = vmatprep.subr.mxu0 0.0
  %859 = vmatpush1.msra.mxu0 %v768
  %860 = vmatprep.subr.mxu0 0.0
  %861 = vmatpush1.msra.mxu0 %v767
  %862 = vmatprep.subr.mxu0 0.0
  %863 = vmatpush1.msra.mxu0 %v766
  %864 = vmatprep.subr.mxu0 0.0
  %865 = vmatpush1.msra.mxu0 %v765
  %866 = vmatprep.subr.mxu0 0.0
  %867 = vmatpush1.msra.mxu0 %v764
  %868 = vmatprep.subr.mxu0 0.0
  %869 = vmatpush1.msra.mxu0 %v763
  %870 = vmatprep.subr.mxu0 0.0
  %871 = vmatpush1.msra.mxu0 %v762
  %872 = vmatprep.subr.mxu0 0.0
  %873 = vmatpush1.msra.mxu0 %v761
  %874 = vmatprep.subr.mxu0 0.0
  %875 = vmatpush1.msra.mxu0 %v760
  %876 = vmatprep.subr.mxu0 0.0
  %877 = vmatpush1.msra.mxu0 %v759
  %878 = vmatprep.subr.mxu0 0.0
  %879 = vmatpush1.msra.mxu0 %v758
  %880 = vmatprep.subr.mxu0 0.0
  %881 = vmatpush1.msra.mxu0 %v757
  %882 = vmatprep.subr.mxu0 0.0
  %883 = vmatpush1.msra.mxu0 %v756
  %884 = vmatprep.subr.mxu0 0.0
  %885 = vmatpush2.msra.mxu0 %v787
  %886 = vmatprep.subr.mxu0 0.0
  %887 = vmatpush2.msra.mxu0 %v786
  %888 = vmatprep.subr.mxu0 0.0
  %889 = vmatpush2.msra.mxu0 %v785
  %890 = vmatprep.subr.mxu0 0.0
  %891 = vmatpush2.msra.mxu0 %v784
  %892 = vmatprep.subr.mxu0 0.0
  %893 = vmatpush2.msra.mxu0 %v783
  %894 = vmatprep.subr.mxu0 0.0
  %895 = vmatpush2.msra.mxu0 %v782
  %896 = vmatprep.subr.mxu0 0.0
  %897 = vmatpush2.msra.mxu0 %v781
  %898 = vmatprep.subr.mxu0 0.0
  %899 = vmatpush2.msra.mxu0 %v780
  %900 = vmatprep.subr.mxu0 0.0
  %901 = vmatpush2.msra.mxu0 %v779
  %902 = vmatprep.subr.mxu0 0.0
  %903 = vmatpush2.msra.mxu0 %v778
  %904 = vmatprep.subr.mxu0 0.0
  %905 = vmatpush2.msra.mxu0 %v777
  %906 = vmatprep.subr.mxu0 0.0
  %907 = vmatpush2.msra.mxu0 %v776
  %908 = vmatprep.subr.mxu0 0.0
  %909 = vmatpush2.msra.mxu0 %v775
  %910 = vmatprep.subr.mxu0 0.0
  %911 = vmatpush2.msra.mxu0 %v774
  %912 = vmatprep.subr.mxu0 0.0
  %913 = vmatpush2.msra.mxu0 %v773
  %914 = vmatprep.subr.mxu0 0.0
  %915 = vmatpush2.msra.mxu0 %v772
  %916 = vmatprep.mubr.f32.mxu0 %v685
  %917 = vmatmul.mubr.f32.gmra.mxu0 %v684
  %v918 = vpop.f32.mrf.mxu0
  %v919 = vadd.f32 0.0, %v918
  %v920 = vpop.f32.mrf.mxu0
  %921 = vmatprep.mubr.f32.mxu0 %v691
  %922 = vmatmul.mubr.f32.gmra.mxu0 %v690
  %v923 = vpop.f32.mrf.mxu0
  %v924 = vadd.f32 0.0, %v923
  %v925 = vpop.f32.mrf.mxu0
  %926 = vmatprep.mubr.f32.mxu0 %v697
  %927 = vmatmul.mubr.f32.gmra.mxu0 %v696
  %v928 = vpop.f32.mrf.mxu0
  %v929 = vadd.f32 0.0, %v928
  %v930 = vpop.f32.mrf.mxu0
  %931 = vmatprep.mubr.f32.mxu0 %v703
  %932 = vmatmul.mubr.f32.gmra.mxu0 %v702
  %v933 = vpop.f32.mrf.mxu0
  %v934 = vadd.f32 0.0, %v933
  %v935 = vpop.f32.mrf.mxu0
  %936 = vmatprep.mubr.f32.mxu0 %v709
  %937 = vmatmul.mubr.f32.gmra.mxu0 %v708
  %v938 = vpop.f32.mrf.mxu0
  %v939 = vadd.f32 0.0, %v938
  %v940 = vpop.f32.mrf.mxu0
  %941 = vmatprep.mubr.f32.mxu0 %v715
  %942 = vmatmul.mubr.f32.gmra.mxu0 %v714
  %v943 = vpop.f32.mrf.mxu0
  %v944 = vadd.f32 0.0, %v943
  %v945 = vpop.f32.mrf.mxu0
  %946 = vmatprep.mubr.f32.mxu0 %v721
  %947 = vmatmul.mubr.f32.gmra.mxu0 %v720
  %v948 = vpop.f32.mrf.mxu0
  %v949 = vadd.f32 0.0, %v948
  %v950 = vpop.f32.mrf.mxu0
  %951 = vmatprep.mubr.f32.mxu0 %v727
  %952 = vmatmul.mubr.f32.gmra.mxu0 %v726
  %v953 = vpop.f32.mrf.mxu0
  %v954 = vadd.f32 0.0, %v953
  %v955 = vpop.f32.mrf.mxu0
  %956 = vmatprep.mubr.f32.mxu0 %v733
  %957 = vmatmul.mubr.f32.gmra.mxu0 %v732
  %v958 = vpop.f32.mrf.mxu0
  %v959 = vadd.f32 0.0, %v958
  %v960 = vpop.f32.mrf.mxu0
  %961 = vmatprep.mubr.f32.mxu0 %v739
  %962 = vmatmul.mubr.f32.gmra.mxu0 %v738
  %v963 = vpop.f32.mrf.mxu0
  %v964 = vadd.f32 0.0, %v963
  %v965 = vpop.f32.mrf.mxu0
  %966 = vmatprep.mubr.f32.mxu0 %v745
  %967 = vmatmul.mubr.f32.gmra.mxu0 %v744
  %v968 = vpop.f32.mrf.mxu0
  %v969 = vadd.f32 0.0, %v968
  %v970 = vpop.f32.mrf.mxu0
  %971 = vmatprep.mubr.f32.mxu0 %v751
  %972 = vmatmul.mubr.f32.gmra.mxu0 %v750
  %v973 = vpop.f32.mrf.mxu0
  %v974 = vadd.f32 0.0, %v973
  %v975 = vpop.f32.mrf.mxu0
  %976 = vdwg.mxu0
  %977 = vmatprep.subr.mxu0 0.0
  %978 = vmatpush1.msra.mxu0 %v803
  %979 = vmatprep.subr.mxu0 0.0
  %980 = vmatpush1.msra.mxu0 %v802
  %981 = vmatprep.subr.mxu0 0.0
  %982 = vmatpush1.msra.mxu0 %v801
  %983 = vmatprep.subr.mxu0 0.0
  %984 = vmatpush1.msra.mxu0 %v800
  %985 = vmatprep.subr.mxu0 0.0
  %986 = vmatpush1.msra.mxu0 %v799
  %987 = vmatprep.subr.mxu0 0.0
  %988 = vmatpush1.msra.mxu0 %v798
  %989 = vmatprep.subr.mxu0 0.0
  %990 = vmatpush1.msra.mxu0 %v797
  %991 = vmatprep.subr.mxu0 0.0
  %992 = vmatpush1.msra.mxu0 %v796
  %993 = vmatprep.subr.mxu0 0.0
  %994 = vmatpush1.msra.mxu0 %v795
  %995 = vmatprep.subr.mxu0 0.0
  %996 = vmatpush1.msra.mxu0 %v794
  %997 = vmatprep.subr.mxu0 0.0
  %998 = vmatpush1.msra.mxu0 %v793
  %999 = vmatprep.subr.mxu0 0.0
  %1000 = vmatpush1.msra.mxu0 %v792
  %1001 = vmatprep.subr.mxu0 0.0
  %1002 = vmatpush1.msra.mxu0 %v791
  %1003 = vmatprep.subr.mxu0 0.0
  %1004 = vmatpush1.msra.mxu0 %v790
  %1005 = vmatprep.subr.mxu0 0.0
  %1006 = vmatpush1.msra.mxu0 %v789
  %1007 = vmatprep.subr.mxu0 0.0
  %1008 = vmatpush1.msra.mxu0 %v788
  %1009 = vmatprep.subr.mxu0 0.0
  %1010 = vmatpush2.msra.mxu0 %v819
  %1011 = vmatprep.subr.mxu0 0.0
  %1012 = vmatpush2.msra.mxu0 %v818
  %1013 = vmatprep.subr.mxu0 0.0
  %1014 = vmatpush2.msra.mxu0 %v817
  %1015 = vmatprep.subr.mxu0 0.0
  %1016 = vmatpush2.msra.mxu0 %v816
  %1017 = vmatprep.subr.mxu0 0.0
  %1018 = vmatpush2.msra.mxu0 %v815
  %1019 = vmatprep.subr.mxu0 0.0
  %1020 = vmatpush2.msra.mxu0 %v814
  %1021 = vmatprep.subr.mxu0 0.0
  %1022 = vmatpush2.msra.mxu0 %v813
  %1023 = vmatprep.subr.mxu0 0.0
  %1024 = vmatpush2.msra.mxu0 %v812
  %1025 = vmatprep.subr.mxu0 0.0
  %1026 = vmatpush2.msra.mxu0 %v811
  %1027 = vmatprep.subr.mxu0 0.0
  %1028 = vmatpush2.msra.mxu0 %v810
  %1029 = vmatprep.subr.mxu0 0.0
  %1030 = vmatpush2.msra.mxu0 %v809
  %1031 = vmatprep.subr.mxu0 0.0
  %1032 = vmatpush2.msra.mxu0 %v808
  %1033 = vmatprep.subr.mxu0 0.0
  %1034 = vmatpush2.msra.mxu0 %v807
  %1035 = vmatprep.subr.mxu0 0.0
  %1036 = vmatpush2.msra.mxu0 %v806
  %1037 = vmatprep.subr.mxu0 0.0
  %1038 = vmatpush2.msra.mxu0 %v805
  %1039 = vmatprep.subr.mxu0 0.0
  %1040 = vmatpush2.msra.mxu0 %v804
  %1041 = vmatprep.mubr.f32.mxu0 %v687
  %1042 = vmatmul.mubr.f32.gmra.mxu0 %v686
  %v1043 = vpop.f32.mrf.mxu0
  %v1044 = vadd.f32 %v919, %v1043
  %v1045 = vpop.f32.mrf.mxu0
  %1046 = vmatprep.mubr.f32.mxu0 %v693
  %1047 = vmatmul.mubr.f32.gmra.mxu0 %v692
  %v1048 = vpop.f32.mrf.mxu0
  %v1049 = vadd.f32 %v924, %v1048
  %v1050 = vpop.f32.mrf.mxu0
  %1051 = vmatprep.mubr.f32.mxu0 %v699
  %1052 = vmatmul.mubr.f32.gmra.mxu0 %v698
  %v1053 = vpop.f32.mrf.mxu0
  %v1054 = vadd.f32 %v929, %v1053
  %v1055 = vpop.f32.mrf.mxu0
  %1056 = vmatprep.mubr.f32.mxu0 %v705
  %1057 = vmatmul.mubr.f32.gmra.mxu0 %v704
  %v1058 = vpop.f32.mrf.mxu0
  %v1059 = vadd.f32 %v934, %v1058
  %v1060 = vpop.f32.mrf.mxu0
  %1061 = vmatprep.mubr.f32.mxu0 %v711
  %1062 = vmatmul.mubr.f32.gmra.mxu0 %v710
  %v1063 = vpop.f32.mrf.mxu0
  %v1064 = vadd.f32 %v939, %v1063
  %v1065 = vpop.f32.mrf.mxu0
  %1066 = vmatprep.mubr.f32.mxu0 %v717
  %1067 = vmatmul.mubr.f32.gmra.mxu0 %v716
  %v1068 = vpop.f32.mrf.mxu0
  %v1069 = vadd.f32 %v944, %v1068
  %v1070 = vpop.f32.mrf.mxu0
  %1071 = vmatprep.mubr.f32.mxu0 %v723
  %1072 = vmatmul.mubr.f32.gmra.mxu0 %v722
  %v1073 = vpop.f32.mrf.mxu0
  %v1074 = vadd.f32 %v949, %v1073
  %v1075 = vpop.f32.mrf.mxu0
  %1076 = vmatprep.mubr.f32.mxu0 %v729
  %1077 = vmatmul.mubr.f32.gmra.mxu0 %v728
  %v1078 = vpop.f32.mrf.mxu0
  %v1079 = vadd.f32 %v954, %v1078
  %v1080 = vpop.f32.mrf.mxu0
  %1081 = vmatprep.mubr.f32.mxu0 %v735
  %1082 = vmatmul.mubr.f32.gmra.mxu0 %v734
  %v1083 = vpop.f32.mrf.mxu0
  %v1084 = vadd.f32 %v959, %v1083
  %v1085 = vpop.f32.mrf.mxu0
  %1086 = vmatprep.mubr.f32.mxu0 %v741
  %1087 = vmatmul.mubr.f32.gmra.mxu0 %v740
  %v1088 = vpop.f32.mrf.mxu0
  %v1089 = vadd.f32 %v964, %v1088
  %v1090 = vpop.f32.mrf.mxu0
  %1091 = vmatprep.mubr.f32.mxu0 %v747
  %1092 = vmatmul.mubr.f32.gmra.mxu0 %v746
  %v1093 = vpop.f32.mrf.mxu0
  %v1094 = vadd.f32 %v969, %v1093
  %v1095 = vpop.f32.mrf.mxu0
  %1096 = vmatprep.mubr.f32.mxu0 %v753
  %1097 = vmatmul.mubr.f32.gmra.mxu0 %v752
  %v1098 = vpop.f32.mrf.mxu0
  %v1099 = vadd.f32 %v974, %v1098
  %v1100 = vpop.f32.mrf.mxu0
  %1101 = vdwg.mxu0
  %1102 = vmatprep.subr.mxu0 0.0
  %1103 = vmatpush1.msra.mxu0 %v835
  %1104 = vmatprep.subr.mxu0 0.0
  %1105 = vmatpush1.msra.mxu0 %v834
  %1106 = vmatprep.subr.mxu0 0.0
  %1107 = vmatpush1.msra.mxu0 %v833
  %1108 = vmatprep.subr.mxu0 0.0
  %1109 = vmatpush1.msra.mxu0 %v832
  %1110 = vmatprep.subr.mxu0 0.0
  %1111 = vmatpush1.msra.mxu0 %v831
  %1112 = vmatprep.subr.mxu0 0.0
  %1113 = vmatpush1.msra.mxu0 %v830
  %1114 = vmatprep.subr.mxu0 0.0
  %1115 = vmatpush1.msra.mxu0 %v829
  %1116 = vmatprep.subr.mxu0 0.0
  %1117 = vmatpush1.msra.mxu0 %v828
  %1118 = vmatprep.subr.mxu0 0.0
  %1119 = vmatpush1.msra.mxu0 %v827
  %1120 = vmatprep.subr.mxu0 0.0
  %1121 = vmatpush1.msra.mxu0 %v826
  %1122 = vmatprep.subr.mxu0 0.0
  %1123 = vmatpush1.msra.mxu0 %v825
  %1124 = vmatprep.subr.mxu0 0.0
  %1125 = vmatpush1.msra.mxu0 %v824
  %1126 = vmatprep.subr.mxu0 0.0
  %1127 = vmatpush1.msra.mxu0 %v823
  %1128 = vmatprep.subr.mxu0 0.0
  %1129 = vmatpush1.msra.mxu0 %v822
  %1130 = vmatprep.subr.mxu0 0.0
  %1131 = vmatpush1.msra.mxu0 %v821
  %1132 = vmatprep.subr.mxu0 0.0
  %1133 = vmatpush1.msra.mxu0 %v820
  %1134 = vmatprep.subr.mxu0 0.0
  %1135 = vmatpush2.msra.mxu0 %v851
  %1136 = vmatprep.subr.mxu0 0.0
  %1137 = vmatpush2.msra.mxu0 %v850
  %1138 = vmatprep.subr.mxu0 0.0
  %1139 = vmatpush2.msra.mxu0 %v849
  %1140 = vmatprep.subr.mxu0 0.0
  %1141 = vmatpush2.msra.mxu0 %v848
  %1142 = vmatprep.subr.mxu0 0.0
  %1143 = vmatpush2.msra.mxu0 %v847
  %1144 = vmatprep.subr.mxu0 0.0
  %1145 = vmatpush2.msra.mxu0 %v846
  %1146 = vmatprep.subr.mxu0 0.0
  %1147 = vmatpush2.msra.mxu0 %v845
  %1148 = vmatprep.subr.mxu0 0.0
  %1149 = vmatpush2.msra.mxu0 %v844
  %1150 = vmatprep.subr.mxu0 0.0
  %1151 = vmatpush2.msra.mxu0 %v843
  %1152 = vmatprep.subr.mxu0 0.0
  %1153 = vmatpush2.msra.mxu0 %v842
  %1154 = vmatprep.subr.mxu0 0.0
  %1155 = vmatpush2.msra.mxu0 %v841
  %1156 = vmatprep.subr.mxu0 0.0
  %1157 = vmatpush2.msra.mxu0 %v840
  %1158 = vmatprep.subr.mxu0 0.0
  %1159 = vmatpush2.msra.mxu0 %v839
  %1160 = vmatprep.subr.mxu0 0.0
  %1161 = vmatpush2.msra.mxu0 %v838
  %1162 = vmatprep.subr.mxu0 0.0
  %1163 = vmatpush2.msra.mxu0 %v837
  %1164 = vmatprep.subr.mxu0 0.0
  %1165 = vmatpush2.msra.mxu0 %v836
  %1166 = vmatprep.mubr.f32.mxu0 %v689
  %1167 = vmatmul.mubr.f32.gmra.mxu0 %v688
  %v1168 = vpop.f32.mrf.mxu0
  %v1169 = vadd.f32 %v1044, %v1168
  %v1170 = vpop.f32.mrf.mxu0
  %1171 = vmatprep.mubr.f32.mxu0 %v695
  %1172 = vmatmul.mubr.f32.gmra.mxu0 %v694
  %v1173 = vpop.f32.mrf.mxu0
  %v1174 = vadd.f32 %v1049, %v1173
  %v1175 = vpop.f32.mrf.mxu0
  %1176 = vmatprep.mubr.f32.mxu0 %v701
  %1177 = vmatmul.mubr.f32.gmra.mxu0 %v700
  %v1178 = vpop.f32.mrf.mxu0
  %v1179 = vadd.f32 %v1054, %v1178
  %v1180 = vpop.f32.mrf.mxu0
  %1181 = vmatprep.mubr.f32.mxu0 %v707
  %1182 = vmatmul.mubr.f32.gmra.mxu0 %v706
  %v1183 = vpop.f32.mrf.mxu0
  %v1184 = vadd.f32 %v1059, %v1183
  %v1185 = vpop.f32.mrf.mxu0
  %1186 = vmatprep.mubr.f32.mxu0 %v713
  %1187 = vmatmul.mubr.f32.gmra.mxu0 %v712
  %v1188 = vpop.f32.mrf.mxu0
  %v1189 = vadd.f32 %v1064, %v1188
  %v1190 = vpop.f32.mrf.mxu0
  %1191 = vmatprep.mubr.f32.mxu0 %v719
  %1192 = vmatmul.mubr.f32.gmra.mxu0 %v718
  %v1193 = vpop.f32.mrf.mxu0
  %v1194 = vadd.f32 %v1069, %v1193
  %v1195 = vpop.f32.mrf.mxu0
  %1196 = vmatprep.mubr.f32.mxu0 %v725
  %1197 = vmatmul.mubr.f32.gmra.mxu0 %v724
  %v1198 = vpop.f32.mrf.mxu0
  %v1199 = vadd.f32 %v1074, %v1198
  %v1200 = vpop.f32.mrf.mxu0
  %1201 = vmatprep.mubr.f32.mxu0 %v731
  %1202 = vmatmul.mubr.f32.gmra.mxu0 %v730
  %v1203 = vpop.f32.mrf.mxu0
  %v1204 = vadd.f32 %v1079, %v1203
  %v1205 = vpop.f32.mrf.mxu0
  %1206 = vmatprep.mubr.f32.mxu0 %v737
  %1207 = vmatmul.mubr.f32.gmra.mxu0 %v736
  %v1208 = vpop.f32.mrf.mxu0
  %v1209 = vadd.f32 %v1084, %v1208
  %v1210 = vpop.f32.mrf.mxu0
  %1211 = vmatprep.mubr.f32.mxu0 %v743
  %1212 = vmatmul.mubr.f32.gmra.mxu0 %v742
  %v1213 = vpop.f32.mrf.mxu0
  %v1214 = vadd.f32 %v1089, %v1213
  %v1215 = vpop.f32.mrf.mxu0
  %1216 = vmatprep.mubr.f32.mxu0 %v749
  %1217 = vmatmul.mubr.f32.gmra.mxu0 %v748
  %v1218 = vpop.f32.mrf.mxu0
  %v1219 = vadd.f32 %v1094, %v1218
  %v1220 = vpop.f32.mrf.mxu0
  %1221 = vmatprep.mubr.f32.mxu0 %v755
  %1222 = vmatmul.mubr.f32.gmra.mxu0 %v754
  %v1223 = vpop.f32.mrf.mxu0
  %v1224 = vadd.f32 %v1099, %v1223
  %v1225 = vpop.f32.mrf.mxu0
  %1226 = vdwg.mxu0
  %s1227 = scalar_lea.vmem [#allocation2], 32
  %v1228 = vld [vmem:[%s1227] sm:$0xff]
  %v1229 = vld [vmem:[%s1227 + $0x8] sm:$0xff]
  %v1230 = vld [vmem:[%s1227 + $0x10] sm:$0xff]
  %v1231 = vld [vmem:[%s1227 + $0x18] sm:$0xff]
  %v1232 = vld [vmem:[%s1227 + $0x20] sm:$0xff]
  %v1233 = vld [vmem:[%s1227 + $0x28] sm:$0xff]
  %v1234 = vld [vmem:[%s1227 + $0x30] sm:$0xff]
  %v1235 = vld [vmem:[%s1227 + $0x38] sm:$0xff]
  %v1236 = vld [vmem:[%s1227 + $0x40] sm:$0xff]
  %v1237 = vld [vmem:[%s1227 + $0x48] sm:$0xff]
  %v1238 = vld [vmem:[%s1227 + $0x50] sm:$0xff]
  %v1239 = vld [vmem:[%s1227 + $0x58] sm:$0xff]
  %v1240 = vadd.f32 %v1228, %v1169
  %v1241 = vadd.f32 %v1229, %v1174
  %v1242 = vadd.f32 %v1230, %v1179
  %v1243 = vadd.f32 %v1231, %v1184
  %v1244 = vadd.f32 %v1232, %v1189
  %v1245 = vadd.f32 %v1233, %v1194
  %v1246 = vadd.f32 %v1234, %v1199
  %v1247 = vadd.f32 %v1235, %v1204
  %v1248 = vadd.f32 %v1236, %v1209
  %v1249 = vadd.f32 %v1237, %v1214
  %v1250 = vadd.f32 %v1238, %v1219
  %v1251 = vadd.f32 %v1239, %v1224
  %1252 = vst [vmem:[%s1227] sm:$0xff] %v1240
  %1253 = vst [vmem:[%s1227 + $0x8] sm:$0xff] %v1241
  %1254 = vst [vmem:[%s1227 + $0x10] sm:$0xff] %v1242
  %1255 = vst [vmem:[%s1227 + $0x18] sm:$0xff] %v1243
  %1256 = vst [vmem:[%s1227 + $0x20] sm:$0xff] %v1244
  %1257 = vst [vmem:[%s1227 + $0x28] sm:$0xff] %v1245
  %1258 = vst [vmem:[%s1227 + $0x30] sm:$0xff] %v1246
  %1259 = vst [vmem:[%s1227 + $0x38] sm:$0xff] %v1247
  %1260 = vst [vmem:[%s1227 + $0x40] sm:$0xff] %v1248
  %1261 = vst [vmem:[%s1227 + $0x48] sm:$0xff] %v1249
  %1262 = vst [vmem:[%s1227 + $0x50] sm:$0xff] %v1250
  %1263 = vst [vmem:[%s1227 + $0x58] sm:$0xff] %v1251
  %v1264 = vld [vmem:[%s1] sm:$0xff]
  %v1265 = vld [vmem:[%s1 + $0x8] sm:$0xff]
  %v1266 = vld [vmem:[%s1 + $0x10] sm:$0xff]
  %v1267 = vld [vmem:[%s1 + $0x18] sm:$0xff]
  %v1268 = vld [vmem:[%s1 + $0x20] sm:$0xff]
  %v1269 = vld [vmem:[%s1 + $0x28] sm:$0xff]
  %v1270 = vld [vmem:[%s1 + $0x30] sm:$0xff]
  %v1271 = vld [vmem:[%s1 + $0x38] sm:$0xff]
  %v1272 = vld [vmem:[%s1 + $0x40] sm:$0xff]
  %v1273 = vld [vmem:[%s1 + $0x48] sm:$0xff]
  %v1274 = vld [vmem:[%s1 + $0x50] sm:$0xff]
  %v1275 = vld [vmem:[%s1 + $0x58] sm:$0xff]
  %v1276 = vld [vmem:[%s1 + $0x60] sm:$0xff]
  %v1277 = vld [vmem:[%s1 + $0x68] sm:$0xff]
  %v1278 = vld [vmem:[%s1 + $0x70] sm:$0xff]
  %v1279 = vld [vmem:[%s1 + $0x78] sm:$0xff]
  %v1280 = vld [vmem:[%s1 + $0x80] sm:$0xff]
  %v1281 = vld [vmem:[%s1 + $0x88] sm:$0xff]
  %v1282 = vld [vmem:[%s1 + $0x90] sm:$0xff]
  %v1283 = vld [vmem:[%s1 + $0x98] sm:$0xff]
  %v1284 = vld [vmem:[%s1 + $0xa0] sm:$0xff]
  %v1285 = vld [vmem:[%s1 + $0xa8] sm:$0xff]
  %v1286 = vld [vmem:[%s1 + $0xb0] sm:$0xff]
  %v1287 = vld [vmem:[%s1 + $0xb8] sm:$0xff]
  %v1288 = vld [vmem:[%s1 + $0xc0] sm:$0xff]
  %v1289 = vld [vmem:[%s1 + $0xc8] sm:$0xff]
  %v1290 = vld [vmem:[%s1 + $0xd0] sm:$0xff]
  %v1291 = vld [vmem:[%s1 + $0xd8] sm:$0xff]
  %v1292 = vld [vmem:[%s1 + $0xe0] sm:$0xff]
  %v1293 = vld [vmem:[%s1 + $0xe8] sm:$0xff]
  %v1294 = vld [vmem:[%s1 + $0xf0] sm:$0xff]
  %v1295 = vld [vmem:[%s1 + $0xf8] sm:$0xff]
  %v1296 = vld [vmem:[%s1 + $0x100] sm:$0xff]
  %v1297 = vld [vmem:[%s1 + $0x108] sm:$0xff]
  %v1298 = vld [vmem:[%s1 + $0x110] sm:$0xff]
  %v1299 = vld [vmem:[%s1 + $0x118] sm:$0xff]
  %v1300 = vld [vmem:[%s1 + $0x120] sm:$0xff]
  %v1301 = vld [vmem:[%s1 + $0x128] sm:$0xff]
  %v1302 = vld [vmem:[%s1 + $0x130] sm:$0xff]
  %v1303 = vld [vmem:[%s1 + $0x138] sm:$0xff]
  %v1304 = vld [vmem:[%s1 + $0x140] sm:$0xff]
  %v1305 = vld [vmem:[%s1 + $0x148] sm:$0xff]
  %v1306 = vld [vmem:[%s1 + $0x150] sm:$0xff]
  %v1307 = vld [vmem:[%s1 + $0x158] sm:$0xff]
  %v1308 = vld [vmem:[%s1 + $0x160] sm:$0xff]
  %v1309 = vld [vmem:[%s1 + $0x168] sm:$0xff]
  %v1310 = vld [vmem:[%s1 + $0x170] sm:$0xff]
  %v1311 = vld [vmem:[%s1 + $0x178] sm:$0xff]
  %v1312 = vld [vmem:[%s1 + $0x180] sm:$0xff]
  %v1313 = vld [vmem:[%s1 + $0x188] sm:$0xff]
  %v1314 = vld [vmem:[%s1 + $0x190] sm:$0xff]
  %v1315 = vld [vmem:[%s1 + $0x198] sm:$0xff]
  %v1316 = vld [vmem:[%s1 + $0x1a0] sm:$0xff]
  %v1317 = vld [vmem:[%s1 + $0x1a8] sm:$0xff]
  %v1318 = vld [vmem:[%s1 + $0x1b0] sm:$0xff]
  %v1319 = vld [vmem:[%s1 + $0x1b8] sm:$0xff]
  %v1320 = vld [vmem:[%s1 + $0x1c0] sm:$0xff]
  %v1321 = vld [vmem:[%s1 + $0x1c8] sm:$0xff]
  %v1322 = vld [vmem:[%s1 + $0x1d0] sm:$0xff]
  %v1323 = vld [vmem:[%s1 + $0x1d8] sm:$0xff]
  %v1324 = vld [vmem:[%s1 + $0x1e0] sm:$0xff]
  %v1325 = vld [vmem:[%s1 + $0x1e8] sm:$0xff]
  %v1326 = vld [vmem:[%s1 + $0x1f0] sm:$0xff]
  %v1327 = vld [vmem:[%s1 + $0x1f8] sm:$0xff]
  %v1328 = vld [vmem:[%s1 + $0x200] sm:$0xff]
  %v1329 = vld [vmem:[%s1 + $0x208] sm:$0xff]
  %v1330 = vld [vmem:[%s1 + $0x210] sm:$0xff]
  %v1331 = vld [vmem:[%s1 + $0x218] sm:$0xff]
  %v1332 = vld [vmem:[%s1 + $0x220] sm:$0xff]
  %v1333 = vld [vmem:[%s1 + $0x228] sm:$0xff]
  %v1334 = vld [vmem:[%s1 + $0x230] sm:$0xff]
  %v1335 = vld [vmem:[%s1 + $0x238] sm:$0xff]
  %v1336 = vld [vmem:[%s1 + $0x240] sm:$0xff]
  %v1337 = vld [vmem:[%s1 + $0x248] sm:$0xff]
  %v1338 = vld [vmem:[%s1 + $0x250] sm:$0xff]
  %v1339 = vld [vmem:[%s1 + $0x258] sm:$0xff]
  %v1340 = vld [vmem:[%s1 + $0x260] sm:$0xff]
  %v1341 = vld [vmem:[%s1 + $0x268] sm:$0xff]
  %v1342 = vld [vmem:[%s1 + $0x270] sm:$0xff]
  %v1343 = vld [vmem:[%s1 + $0x278] sm:$0xff]
  %v1344 = vld [vmem:[%s1 + $0x280] sm:$0xff]
  %v1345 = vld [vmem:[%s1 + $0x288] sm:$0xff]
  %v1346 = vld [vmem:[%s1 + $0x290] sm:$0xff]
  %v1347 = vld [vmem:[%s1 + $0x298] sm:$0xff]
  %s1348 = scalar_lea.vmem %s3, 768
  %v1349 = vld [vmem:[%s1348] sm:$0xff]
  %v1350 = vld [vmem:[%s1348 + $0x8] sm:$0xff]
  %v1351 = vld [vmem:[%s1348 + $0x10] sm:$0xff]
  %v1352 = vld [vmem:[%s1348 + $0x18] sm:$0xff]
  %v1353 = vld [vmem:[%s1348 + $0x20] sm:$0xff]
  %v1354 = vld [vmem:[%s1348 + $0x28] sm:$0xff]
  %v1355 = vld [vmem:[%s1348 + $0x30] sm:$0xff]
  %v1356 = vld [vmem:[%s1348 + $0x38] sm:$0xff]
  %v1357 = vld [vmem:[%s1348 + $0x40] sm:$0xff]
  %v1358 = vld [vmem:[%s1348 + $0x48] sm:$0xff]
  %v1359 = vld [vmem:[%s1348 + $0x50] sm:$0xff]
  %v1360 = vld [vmem:[%s1348 + $0x58] sm:$0xff]
  %v1361 = vld [vmem:[%s1348 + $0x60] sm:$0xff]
  %v1362 = vld [vmem:[%s1348 + $0x68] sm:$0xff]
  %v1363 = vld [vmem:[%s1348 + $0x70] sm:$0xff]
  %v1364 = vld [vmem:[%s1348 + $0x78] sm:$0xff]
  %v1365 = vld [vmem:[%s1348 + $0x80] sm:$0xff]
  %v1366 = vld [vmem:[%s1348 + $0x88] sm:$0xff]
  %v1367 = vld [vmem:[%s1348 + $0x90] sm:$0xff]
  %v1368 = vld [vmem:[%s1348 + $0x98] sm:$0xff]
  %v1369 = vld [vmem:[%s1348 + $0xa0] sm:$0xff]
  %v1370 = vld [vmem:[%s1348 + $0xa8] sm:$0xff]
  %v1371 = vld [vmem:[%s1348 + $0xb0] sm:$0xff]
  %v1372 = vld [vmem:[%s1348 + $0xb8] sm:$0xff]
  %v1373 = vld [vmem:[%s1348 + $0xc0] sm:$0xff]
  %v1374 = vld [vmem:[%s1348 + $0xc8] sm:$0xff]
  %v1375 = vld [vmem:[%s1348 + $0xd0] sm:$0xff]
  %v1376 = vld [vmem:[%s1348 + $0xd8] sm:$0xff]
  %v1377 = vld [vmem:[%s1348 + $0xe0] sm:$0xff]
  %v1378 = vld [vmem:[%s1348 + $0xe8] sm:$0xff]
  %v1379 = vld [vmem:[%s1348 + $0xf0] sm:$0xff]
  %v1380 = vld [vmem:[%s1348 + $0xf8] sm:$0xff]
  %v1381 = vld [vmem:[%s1348 + $0x100] sm:$0xff]
  %v1382 = vld [vmem:[%s1348 + $0x108] sm:$0xff]
  %v1383 = vld [vmem:[%s1348 + $0x110] sm:$0xff]
  %v1384 = vld [vmem:[%s1348 + $0x118] sm:$0xff]
  %v1385 = vld [vmem:[%s1348 + $0x120] sm:$0xff]
  %v1386 = vld [vmem:[%s1348 + $0x128] sm:$0xff]
  %v1387 = vld [vmem:[%s1348 + $0x130] sm:$0xff]
  %v1388 = vld [vmem:[%s1348 + $0x138] sm:$0xff]
  %v1389 = vld [vmem:[%s1348 + $0x140] sm:$0xff]
  %v1390 = vld [vmem:[%s1348 + $0x148] sm:$0xff]
  %v1391 = vld [vmem:[%s1348 + $0x150] sm:$0xff]
  %v1392 = vld [vmem:[%s1348 + $0x158] sm:$0xff]
  %v1393 = vld [vmem:[%s1348 + $0x160] sm:$0xff]
  %v1394 = vld [vmem:[%s1348 + $0x168] sm:$0xff]
  %v1395 = vld [vmem:[%s1348 + $0x170] sm:$0xff]
  %v1396 = vld [vmem:[%s1348 + $0x178] sm:$0xff]
  %v1397 = vld [vmem:[%s1348 + $0x180] sm:$0xff]
  %v1398 = vld [vmem:[%s1348 + $0x188] sm:$0xff]
  %v1399 = vld [vmem:[%s1348 + $0x190] sm:$0xff]
  %v1400 = vld [vmem:[%s1348 + $0x198] sm:$0xff]
  %v1401 = vld [vmem:[%s1348 + $0x1a0] sm:$0xff]
  %v1402 = vld [vmem:[%s1348 + $0x1a8] sm:$0xff]
  %v1403 = vld [vmem:[%s1348 + $0x1b0] sm:$0xff]
  %v1404 = vld [vmem:[%s1348 + $0x1b8] sm:$0xff]
  %v1405 = vld [vmem:[%s1348 + $0x1c0] sm:$0xff]
  %v1406 = vld [vmem:[%s1348 + $0x1c8] sm:$0xff]
  %v1407 = vld [vmem:[%s1348 + $0x1d0] sm:$0xff]
  %v1408 = vld [vmem:[%s1348 + $0x1d8] sm:$0xff]
  %v1409 = vld [vmem:[%s1348 + $0x1e0] sm:$0xff]
  %v1410 = vld [vmem:[%s1348 + $0x1e8] sm:$0xff]
  %v1411 = vld [vmem:[%s1348 + $0x1f0] sm:$0xff]
  %v1412 = vld [vmem:[%s1348 + $0x1f8] sm:$0xff]
  %v1413 = vld [vmem:[%s1348 + $0x200] sm:$0xff]
  %v1414 = vld [vmem:[%s1348 + $0x208] sm:$0xff]
  %v1415 = vld [vmem:[%s1348 + $0x210] sm:$0xff]
  %v1416 = vld [vmem:[%s1348 + $0x218] sm:$0xff]
  %v1417 = vld [vmem:[%s1348 + $0x220] sm:$0xff]
  %v1418 = vld [vmem:[%s1348 + $0x228] sm:$0xff]
  %v1419 = vld [vmem:[%s1348 + $0x230] sm:$0xff]
  %v1420 = vld [vmem:[%s1348 + $0x238] sm:$0xff]
  %v1421 = vld [vmem:[%s1348 + $0x240] sm:$0xff]
  %v1422 = vld [vmem:[%s1348 + $0x248] sm:$0xff]
  %v1423 = vld [vmem:[%s1348 + $0x250] sm:$0xff]
  %v1424 = vld [vmem:[%s1348 + $0x258] sm:$0xff]
  %v1425 = vld [vmem:[%s1348 + $0x260] sm:$0xff]
  %v1426 = vld [vmem:[%s1348 + $0x268] sm:$0xff]
  %v1427 = vld [vmem:[%s1348 + $0x270] sm:$0xff]
  %v1428 = vld [vmem:[%s1348 + $0x278] sm:$0xff]
  %v1429 = vld [vmem:[%s1348 + $0x280] sm:$0xff]
  %v1430 = vld [vmem:[%s1348 + $0x288] sm:$0xff]
  %v1431 = vld [vmem:[%s1348 + $0x290] sm:$0xff]
  %v1432 = vld [vmem:[%s1348 + $0x298] sm:$0xff]
  %v1433 = vld [vmem:[%s1348 + $0x2a0] sm:$0xff]
  %v1434 = vld [vmem:[%s1348 + $0x2a8] sm:$0xff]
  %v1435 = vld [vmem:[%s1348 + $0x2b0] sm:$0xff]
  %v1436 = vld [vmem:[%s1348 + $0x2b8] sm:$0xff]
  %v1437 = vld [vmem:[%s1348 + $0x2c0] sm:$0xff]
  %v1438 = vld [vmem:[%s1348 + $0x2c8] sm:$0xff]
  %v1439 = vld [vmem:[%s1348 + $0x2d0] sm:$0xff]
  %v1440 = vld [vmem:[%s1348 + $0x2d8] sm:$0xff]
  %v1441 = vld [vmem:[%s1348 + $0x2e0] sm:$0xff]
  %v1442 = vld [vmem:[%s1348 + $0x2e8] sm:$0xff]
  %v1443 = vld [vmem:[%s1348 + $0x2f0] sm:$0xff]
  %v1444 = vld [vmem:[%s1348 + $0x2f8] sm:$0xff]
  %1445 = vmatprep.subr.mxu0 0.0
  %1446 = vmatpush1.msra.mxu0 %v1364
  %1447 = vmatprep.subr.mxu0 0.0
  %1448 = vmatpush1.msra.mxu0 %v1363
  %1449 = vmatprep.subr.mxu0 0.0
  %1450 = vmatpush1.msra.mxu0 %v1362
  %1451 = vmatprep.subr.mxu0 0.0
  %1452 = vmatpush1.msra.mxu0 %v1361
  %1453 = vmatprep.subr.mxu0 0.0
  %1454 = vmatpush1.msra.mxu0 %v1360
  %1455 = vmatprep.subr.mxu0 0.0
  %1456 = vmatpush1.msra.mxu0 %v1359
  %1457 = vmatprep.subr.mxu0 0.0
  %1458 = vmatpush1.msra.mxu0 %v1358
  %1459 = vmatprep.subr.mxu0 0.0
  %1460 = vmatpush1.msra.mxu0 %v1357
  %1461 = vmatprep.subr.mxu0 0.0
  %1462 = vmatpush1.msra.mxu0 %v1356
  %1463 = vmatprep.subr.mxu0 0.0
  %1464 = vmatpush1.msra.mxu0 %v1355
  %1465 = vmatprep.subr.mxu0 0.0
  %1466 = vmatpush1.msra.mxu0 %v1354
  %1467 = vmatprep.subr.mxu0 0.0
  %1468 = vmatpush1.msra.mxu0 %v1353
  %1469 = vmatprep.subr.mxu0 0.0
  %1470 = vmatpush1.msra.mxu0 %v1352
  %1471 = vmatprep.subr.mxu0 0.0
  %1472 = vmatpush1.msra.mxu0 %v1351
  %1473 = vmatprep.subr.mxu0 0.0
  %1474 = vmatpush1.msra.mxu0 %v1350
  %1475 = vmatprep.subr.mxu0 0.0
  %1476 = vmatpush1.msra.mxu0 %v1349
  %1477 = vmatprep.subr.mxu0 0.0
  %1478 = vmatpush2.msra.mxu0 %v1380
  %1479 = vmatprep.subr.mxu0 0.0
  %1480 = vmatpush2.msra.mxu0 %v1379
  %1481 = vmatprep.subr.mxu0 0.0
  %1482 = vmatpush2.msra.mxu0 %v1378
  %1483 = vmatprep.subr.mxu0 0.0
  %1484 = vmatpush2.msra.mxu0 %v1377
  %1485 = vmatprep.subr.mxu0 0.0
  %1486 = vmatpush2.msra.mxu0 %v1376
  %1487 = vmatprep.subr.mxu0 0.0
  %1488 = vmatpush2.msra.mxu0 %v1375
  %1489 = vmatprep.subr.mxu0 0.0
  %1490 = vmatpush2.msra.mxu0 %v1374
  %1491 = vmatprep.subr.mxu0 0.0
  %1492 = vmatpush2.msra.mxu0 %v1373
  %1493 = vmatprep.subr.mxu0 0.0
  %1494 = vmatpush2.msra.mxu0 %v1372
  %1495 = vmatprep.subr.mxu0 0.0
  %1496 = vmatpush2.msra.mxu0 %v1371
  %1497 = vmatprep.subr.mxu0 0.0
  %1498 = vmatpush2.msra.mxu0 %v1370
  %1499 = vmatprep.subr.mxu0 0.0
  %1500 = vmatpush2.msra.mxu0 %v1369
  %1501 = vmatprep.subr.mxu0 0.0
  %1502 = vmatpush2.msra.mxu0 %v1368
  %1503 = vmatprep.subr.mxu0 0.0
  %1504 = vmatpush2.msra.mxu0 %v1367
  %1505 = vmatprep.subr.mxu0 0.0
  %1506 = vmatpush2.msra.mxu0 %v1366
  %1507 = vmatprep.subr.mxu0 0.0
  %1508 = vmatpush2.msra.mxu0 %v1365
  %1509 = vmatprep.mubr.f32.mxu0 %v1265
  %1510 = vmatmul.mubr.f32.gmra.mxu0 %v1264
  %v1511 = vpop.f32.mrf.mxu0
  %v1512 = vadd.f32 0.0, %v1511
  %v1513 = vpop.f32.mrf.mxu0
  %1514 = vmatprep.mubr.f32.mxu0 %v1271
  %1515 = vmatmul.mubr.f32.gmra.mxu0 %v1270
  %v1516 = vpop.f32.mrf.mxu0
  %v1517 = vadd.f32 0.0, %v1516
  %v1518 = vpop.f32.mrf.mxu0
  %1519 = vmatprep.mubr.f32.mxu0 %v1277
  %1520 = vmatmul.mubr.f32.gmra.mxu0 %v1276
  %v1521 = vpop.f32.mrf.mxu0
  %v1522 = vadd.f32 0.0, %v1521
  %v1523 = vpop.f32.mrf.mxu0
  %1524 = vmatprep.mubr.f32.mxu0 %v1283
  %1525 = vmatmul.mubr.f32.gmra.mxu0 %v1282
  %v1526 = vpop.f32.mrf.mxu0
  %v1527 = vadd.f32 0.0, %v1526
  %v1528 = vpop.f32.mrf.mxu0
  %1529 = vmatprep.mubr.f32.mxu0 %v1289
  %1530 = vmatmul.mubr.f32.gmra.mxu0 %v1288
  %v1531 = vpop.f32.mrf.mxu0
  %v1532 = vadd.f32 0.0, %v1531
  %v1533 = vpop.f32.mrf.mxu0
  %1534 = vmatprep.mubr.f32.mxu0 %v1295
  %1535 = vmatmul.mubr.f32.gmra.mxu0 %v1294
  %v1536 = vpop.f32.mrf.mxu0
  %v1537 = vadd.f32 0.0, %v1536
  %v1538 = vpop.f32.mrf.mxu0
  %1539 = vmatprep.mubr.f32.mxu0 %v1301
  %1540 = vmatmul.mubr.f32.gmra.mxu0 %v1300
  %v1541 = vpop.f32.mrf.mxu0
  %v1542 = vadd.f32 0.0, %v1541
  %v1543 = vpop.f32.mrf.mxu0
  %1544 = vmatprep.mubr.f32.mxu0 %v1307
  %1545 = vmatmul.mubr.f32.gmra.mxu0 %v1306
  %v1546 = vpop.f32.mrf.mxu0
  %v1547 = vadd.f32 0.0, %v1546
  %v1548 = vpop.f32.mrf.mxu0
  %1549 = vmatprep.mubr.f32.mxu0 %v1313
  %1550 = vmatmul.mubr.f32.gmra.mxu0 %v1312
  %v1551 = vpop.f32.mrf.mxu0
  %v1552 = vadd.f32 0.0, %v1551
  %v1553 = vpop.f32.mrf.mxu0
  %1554 = vmatprep.mubr.f32.mxu0 %v1319
  %1555 = vmatmul.mubr.f32.gmra.mxu0 %v1318
  %v1556 = vpop.f32.mrf.mxu0
  %v1557 = vadd.f32 0.0, %v1556
  %v1558 = vpop.f32.mrf.mxu0
  %1559 = vmatprep.mubr.f32.mxu0 %v1325
  %1560 = vmatmul.mubr.f32.gmra.mxu0 %v1324
  %v1561 = vpop.f32.mrf.mxu0
  %v1562 = vadd.f32 0.0, %v1561
  %v1563 = vpop.f32.mrf.mxu0
  %1564 = vmatprep.mubr.f32.mxu0 %v1331
  %1565 = vmatmul.mubr.f32.gmra.mxu0 %v1330
  %v1566 = vpop.f32.mrf.mxu0
  %v1567 = vadd.f32 0.0, %v1566
  %v1568 = vpop.f32.mrf.mxu0
  %1569 = vmatprep.mubr.f32.mxu0 %v1337
  %1570 = vmatmul.mubr.f32.gmra.mxu0 %v1336
  %v1571 = vpop.f32.mrf.mxu0
  %v1572 = vadd.f32 0.0, %v1571
  %v1573 = vpop.f32.mrf.mxu0
  %1574 = vmatprep.mubr.f32.mxu0 %v1343
  %1575 = vmatmul.mubr.f32.gmra.mxu0 %v1342
  %v1576 = vpop.f32.mrf.mxu0
  %v1577 = vadd.f32 0.0, %v1576
  %v1578 = vpop.f32.mrf.mxu0
  %1579 = vdwg.mxu0
  %1580 = vmatprep.subr.mxu0 0.0
  %1581 = vmatpush1.msra.mxu0 %v1396
  %1582 = vmatprep.subr.mxu0 0.0
  %1583 = vmatpush1.msra.mxu0 %v1395
  %1584 = vmatprep.subr.mxu0 0.0
  %1585 = vmatpush1.msra.mxu0 %v1394
  %1586 = vmatprep.subr.mxu0 0.0
  %1587 = vmatpush1.msra.mxu0 %v1393
  %1588 = vmatprep.subr.mxu0 0.0
  %1589 = vmatpush1.msra.mxu0 %v1392
  %1590 = vmatprep.subr.mxu0 0.0
  %1591 = vmatpush1.msra.mxu0 %v1391
  %1592 = vmatprep.subr.mxu0 0.0
  %1593 = vmatpush1.msra.mxu0 %v1390
  %1594 = vmatprep.subr.mxu0 0.0
  %1595 = vmatpush1.msra.mxu0 %v1389
  %1596 = vmatprep.subr.mxu0 0.0
  %1597 = vmatpush1.msra.mxu0 %v1388
  %1598 = vmatprep.subr.mxu0 0.0
  %1599 = vmatpush1.msra.mxu0 %v1387
  %1600 = vmatprep.subr.mxu0 0.0
  %1601 = vmatpush1.msra.mxu0 %v1386
  %1602 = vmatprep.subr.mxu0 0.0
  %1603 = vmatpush1.msra.mxu0 %v1385
  %1604 = vmatprep.subr.mxu0 0.0
  %1605 = vmatpush1.msra.mxu0 %v1384
  %1606 = vmatprep.subr.mxu0 0.0
  %1607 = vmatpush1.msra.mxu0 %v1383
  %1608 = vmatprep.subr.mxu0 0.0
  %1609 = vmatpush1.msra.mxu0 %v1382
  %1610 = vmatprep.subr.mxu0 0.0
  %1611 = vmatpush1.msra.mxu0 %v1381
  %1612 = vmatprep.subr.mxu0 0.0
  %1613 = vmatpush2.msra.mxu0 %v1412
  %1614 = vmatprep.subr.mxu0 0.0
  %1615 = vmatpush2.msra.mxu0 %v1411
  %1616 = vmatprep.subr.mxu0 0.0
  %1617 = vmatpush2.msra.mxu0 %v1410
  %1618 = vmatprep.subr.mxu0 0.0
  %1619 = vmatpush2.msra.mxu0 %v1409
  %1620 = vmatprep.subr.mxu0 0.0
  %1621 = vmatpush2.msra.mxu0 %v1408
  %1622 = vmatprep.subr.mxu0 0.0
  %1623 = vmatpush2.msra.mxu0 %v1407
  %1624 = vmatprep.subr.mxu0 0.0
  %1625 = vmatpush2.msra.mxu0 %v1406
  %1626 = vmatprep.subr.mxu0 0.0
  %1627 = vmatpush2.msra.mxu0 %v1405
  %1628 = vmatprep.subr.mxu0 0.0
  %1629 = vmatpush2.msra.mxu0 %v1404
  %1630 = vmatprep.subr.mxu0 0.0
  %1631 = vmatpush2.msra.mxu0 %v1403
  %1632 = vmatprep.subr.mxu0 0.0
  %1633 = vmatpush2.msra.mxu0 %v1402
  %1634 = vmatprep.subr.mxu0 0.0
  %1635 = vmatpush2.msra.mxu0 %v1401
  %1636 = vmatprep.subr.mxu0 0.0
  %1637 = vmatpush2.msra.mxu0 %v1400
  %1638 = vmatprep.subr.mxu0 0.0
  %1639 = vmatpush2.msra.mxu0 %v1399
  %1640 = vmatprep.subr.mxu0 0.0
  %1641 = vmatpush2.msra.mxu0 %v1398
  %1642 = vmatprep.subr.mxu0 0.0
  %1643 = vmatpush2.msra.mxu0 %v1397
  %1644 = vmatprep.mubr.f32.mxu0 %v1267
  %1645 = vmatmul.mubr.f32.gmra.mxu0 %v1266
  %v1646 = vpop.f32.mrf.mxu0
  %v1647 = vadd.f32 %v1512, %v1646
  %v1648 = vpop.f32.mrf.mxu0
  %1649 = vmatprep.mubr.f32.mxu0 %v1273
  %1650 = vmatmul.mubr.f32.gmra.mxu0 %v1272
  %v1651 = vpop.f32.mrf.mxu0
  %v1652 = vadd.f32 %v1517, %v1651
  %v1653 = vpop.f32.mrf.mxu0
  %1654 = vmatprep.mubr.f32.mxu0 %v1279
  %1655 = vmatmul.mubr.f32.gmra.mxu0 %v1278
  %v1656 = vpop.f32.mrf.mxu0
  %v1657 = vadd.f32 %v1522, %v1656
  %v1658 = vpop.f32.mrf.mxu0
  %1659 = vmatprep.mubr.f32.mxu0 %v1285
  %1660 = vmatmul.mubr.f32.gmra.mxu0 %v1284
  %v1661 = vpop.f32.mrf.mxu0
  %v1662 = vadd.f32 %v1527, %v1661
  %v1663 = vpop.f32.mrf.mxu0
  %1664 = vmatprep.mubr.f32.mxu0 %v1291
  %1665 = vmatmul.mubr.f32.gmra.mxu0 %v1290
  %v1666 = vpop.f32.mrf.mxu0
  %v1667 = vadd.f32 %v1532, %v1666
  %v1668 = vpop.f32.mrf.mxu0
  %1669 = vmatprep.mubr.f32.mxu0 %v1297
  %1670 = vmatmul.mubr.f32.gmra.mxu0 %v1296
  %v1671 = vpop.f32.mrf.mxu0
  %v1672 = vadd.f32 %v1537, %v1671
  %v1673 = vpop.f32.mrf.mxu0
  %1674 = vmatprep.mubr.f32.mxu0 %v1303
  %1675 = vmatmul.mubr.f32.gmra.mxu0 %v1302
  %v1676 = vpop.f32.mrf.mxu0
  %v1677 = vadd.f32 %v1542, %v1676
  %v1678 = vpop.f32.mrf.mxu0
  %1679 = vmatprep.mubr.f32.mxu0 %v1309
  %1680 = vmatmul.mubr.f32.gmra.mxu0 %v1308
  %v1681 = vpop.f32.mrf.mxu0
  %v1682 = vadd.f32 %v1547, %v1681
  %v1683 = vpop.f32.mrf.mxu0
  %1684 = vmatprep.mubr.f32.mxu0 %v1315
  %1685 = vmatmul.mubr.f32.gmra.mxu0 %v1314
  %v1686 = vpop.f32.mrf.mxu0
  %v1687 = vadd.f32 %v1552, %v1686
  %v1688 = vpop.f32.mrf.mxu0
  %1689 = vmatprep.mubr.f32.mxu0 %v1321
  %1690 = vmatmul.mubr.f32.gmra.mxu0 %v1320
  %v1691 = vpop.f32.mrf.mxu0
  %v1692 = vadd.f32 %v1557, %v1691
  %v1693 = vpop.f32.mrf.mxu0
  %1694 = vmatprep.mubr.f32.mxu0 %v1327
  %1695 = vmatmul.mubr.f32.gmra.mxu0 %v1326
  %v1696 = vpop.f32.mrf.mxu0
  %v1697 = vadd.f32 %v1562, %v1696
  %v1698 = vpop.f32.mrf.mxu0
  %1699 = vmatprep.mubr.f32.mxu0 %v1333
  %1700 = vmatmul.mubr.f32.gmra.mxu0 %v1332
  %v1701 = vpop.f32.mrf.mxu0
  %v1702 = vadd.f32 %v1567, %v1701
  %v1703 = vpop.f32.mrf.mxu0
  %1704 = vmatprep.mubr.f32.mxu0 %v1339
  %1705 = vmatmul.mubr.f32.gmra.mxu0 %v1338
  %v1706 = vpop.f32.mrf.mxu0
  %v1707 = vadd.f32 %v1572, %v1706
  %v1708 = vpop.f32.mrf.mxu0
  %1709 = vmatprep.mubr.f32.mxu0 %v1345
  %1710 = vmatmul.mubr.f32.gmra.mxu0 %v1344
  %v1711 = vpop.f32.mrf.mxu0
  %v1712 = vadd.f32 %v1577, %v1711
  %v1713 = vpop.f32.mrf.mxu0
  %1714 = vdwg.mxu0
  %1715 = vmatprep.subr.mxu0 0.0
  %1716 = vmatpush1.msra.mxu0 %v1428
  %1717 = vmatprep.subr.mxu0 0.0
  %1718 = vmatpush1.msra.mxu0 %v1427
  %1719 = vmatprep.subr.mxu0 0.0
  %1720 = vmatpush1.msra.mxu0 %v1426
  %1721 = vmatprep.subr.mxu0 0.0
  %1722 = vmatpush1.msra.mxu0 %v1425
  %1723 = vmatprep.subr.mxu0 0.0
  %1724 = vmatpush1.msra.mxu0 %v1424
  %1725 = vmatprep.subr.mxu0 0.0
  %1726 = vmatpush1.msra.mxu0 %v1423
  %1727 = vmatprep.subr.mxu0 0.0
  %1728 = vmatpush1.msra.mxu0 %v1422
  %1729 = vmatprep.subr.mxu0 0.0
  %1730 = vmatpush1.msra.mxu0 %v1421
  %1731 = vmatprep.subr.mxu0 0.0
  %1732 = vmatpush1.msra.mxu0 %v1420
  %1733 = vmatprep.subr.mxu0 0.0
  %1734 = vmatpush1.msra.mxu0 %v1419
  %1735 = vmatprep.subr.mxu0 0.0
  %1736 = vmatpush1.msra.mxu0 %v1418
  %1737 = vmatprep.subr.mxu0 0.0
  %1738 = vmatpush1.msra.mxu0 %v1417
  %1739 = vmatprep.subr.mxu0 0.0
  %1740 = vmatpush1.msra.mxu0 %v1416
  %1741 = vmatprep.subr.mxu0 0.0
  %1742 = vmatpush1.msra.mxu0 %v1415
  %1743 = vmatprep.subr.mxu0 0.0
  %1744 = vmatpush1.msra.mxu0 %v1414
  %1745 = vmatprep.subr.mxu0 0.0
  %1746 = vmatpush1.msra.mxu0 %v1413
  %1747 = vmatprep.subr.mxu0 0.0
  %1748 = vmatpush2.msra.mxu0 %v1444
  %1749 = vmatprep.subr.mxu0 0.0
  %1750 = vmatpush2.msra.mxu0 %v1443
  %1751 = vmatprep.subr.mxu0 0.0
  %1752 = vmatpush2.msra.mxu0 %v1442
  %1753 = vmatprep.subr.mxu0 0.0
  %1754 = vmatpush2.msra.mxu0 %v1441
  %1755 = vmatprep.subr.mxu0 0.0
  %1756 = vmatpush2.msra.mxu0 %v1440
  %1757 = vmatprep.subr.mxu0 0.0
  %1758 = vmatpush2.msra.mxu0 %v1439
  %1759 = vmatprep.subr.mxu0 0.0
  %1760 = vmatpush2.msra.mxu0 %v1438
  %1761 = vmatprep.subr.mxu0 0.0
  %1762 = vmatpush2.msra.mxu0 %v1437
  %1763 = vmatprep.subr.mxu0 0.0
  %1764 = vmatpush2.msra.mxu0 %v1436
  %1765 = vmatprep.subr.mxu0 0.0
  %1766 = vmatpush2.msra.mxu0 %v1435
  %1767 = vmatprep.subr.mxu0 0.0
  %1768 = vmatpush2.msra.mxu0 %v1434
  %1769 = vmatprep.subr.mxu0 0.0
  %1770 = vmatpush2.msra.mxu0 %v1433
  %1771 = vmatprep.subr.mxu0 0.0
  %1772 = vmatpush2.msra.mxu0 %v1432
  %1773 = vmatprep.subr.mxu0 0.0
  %1774 = vmatpush2.msra.mxu0 %v1431
  %1775 = vmatprep.subr.mxu0 0.0
  %1776 = vmatpush2.msra.mxu0 %v1430
  %1777 = vmatprep.subr.mxu0 0.0
  %1778 = vmatpush2.msra.mxu0 %v1429
  %1779 = vmatprep.mubr.f32.mxu0 %v1269
  %1780 = vmatmul.mubr.f32.gmra.mxu0 %v1268
  %v1781 = vpop.f32.mrf.mxu0
  %v1782 = vadd.f32 %v1647, %v1781
  %v1783 = vpop.f32.mrf.mxu0
  %1784 = vmatprep.mubr.f32.mxu0 %v1275
  %1785 = vmatmul.mubr.f32.gmra.mxu0 %v1274
  %v1786 = vpop.f32.mrf.mxu0
  %v1787 = vadd.f32 %v1652, %v1786
  %v1788 = vpop.f32.mrf.mxu0
  %1789 = vmatprep.mubr.f32.mxu0 %v1281
  %1790 = vmatmul.mubr.f32.gmra.mxu0 %v1280
  %v1791 = vpop.f32.mrf.mxu0
  %v1792 = vadd.f32 %v1657, %v1791
  %v1793 = vpop.f32.mrf.mxu0
  %1794 = vmatprep.mubr.f32.mxu0 %v1287
  %1795 = vmatmul.mubr.f32.gmra.mxu0 %v1286
  %v1796 = vpop.f32.mrf.mxu0
  %v1797 = vadd.f32 %v1662, %v1796
  %v1798 = vpop.f32.mrf.mxu0
  %1799 = vmatprep.mubr.f32.mxu0 %v1293
  %1800 = vmatmul.mubr.f32.gmra.mxu0 %v1292
  %v1801 = vpop.f32.mrf.mxu0
  %v1802 = vadd.f32 %v1667, %v1801
  %v1803 = vpop.f32.mrf.mxu0
  %1804 = vmatprep.mubr.f32.mxu0 %v1299
  %1805 = vmatmul.mubr.f32.gmra.mxu0 %v1298
  %v1806 = vpop.f32.mrf.mxu0
  %v1807 = vadd.f32 %v1672, %v1806
  %v1808 = vpop.f32.mrf.mxu0
  %1809 = vmatprep.mubr.f32.mxu0 %v1305
  %1810 = vmatmul.mubr.f32.gmra.mxu0 %v1304
  %v1811 = vpop.f32.mrf.mxu0
  %v1812 = vadd.f32 %v1677, %v1811
  %v1813 = vpop.f32.mrf.mxu0
  %1814 = vmatprep.mubr.f32.mxu0 %v1311
  %1815 = vmatmul.mubr.f32.gmra.mxu0 %v1310
  %v1816 = vpop.f32.mrf.mxu0
  %v1817 = vadd.f32 %v1682, %v1816
  %v1818 = vpop.f32.mrf.mxu0
  %1819 = vmatprep.mubr.f32.mxu0 %v1317
  %1820 = vmatmul.mubr.f32.gmra.mxu0 %v1316
  %v1821 = vpop.f32.mrf.mxu0
  %v1822 = vadd.f32 %v1687, %v1821
  %v1823 = vpop.f32.mrf.mxu0
  %1824 = vmatprep.mubr.f32.mxu0 %v1323
  %1825 = vmatmul.mubr.f32.gmra.mxu0 %v1322
  %v1826 = vpop.f32.mrf.mxu0
  %v1827 = vadd.f32 %v1692, %v1826
  %v1828 = vpop.f32.mrf.mxu0
  %1829 = vmatprep.mubr.f32.mxu0 %v1329
  %1830 = vmatmul.mubr.f32.gmra.mxu0 %v1328
  %v1831 = vpop.f32.mrf.mxu0
  %v1832 = vadd.f32 %v1697, %v1831
  %v1833 = vpop.f32.mrf.mxu0
  %1834 = vmatprep.mubr.f32.mxu0 %v1335
  %1835 = vmatmul.mubr.f32.gmra.mxu0 %v1334
  %v1836 = vpop.f32.mrf.mxu0
  %v1837 = vadd.f32 %v1702, %v1836
  %v1838 = vpop.f32.mrf.mxu0
  %1839 = vmatprep.mubr.f32.mxu0 %v1341
  %1840 = vmatmul.mubr.f32.gmra.mxu0 %v1340
  %v1841 = vpop.f32.mrf.mxu0
  %v1842 = vadd.f32 %v1707, %v1841
  %v1843 = vpop.f32.mrf.mxu0
  %1844 = vmatprep.mubr.f32.mxu0 %v1347
  %1845 = vmatmul.mubr.f32.gmra.mxu0 %v1346
  %v1846 = vpop.f32.mrf.mxu0
  %v1847 = vadd.f32 %v1712, %v1846
  %v1848 = vpop.f32.mrf.mxu0
  %1849 = vdwg.mxu0
  %s1850 = scalar_lea.vmem [#allocation2], 16
  %v1851 = vld [vmem:[%s1850] sm:$0xff]
  %v1852 = vld [vmem:[%s1850 + $0x8] sm:$0xff]
  %v1853 = vld [vmem:[%s1850 + $0x10] sm:$0xff]
  %v1854 = vld [vmem:[%s1850 + $0x18] sm:$0xff]
  %v1855 = vld [vmem:[%s1850 + $0x20] sm:$0xff]
  %v1856 = vld [vmem:[%s1850 + $0x28] sm:$0xff]
  %v1857 = vld [vmem:[%s1850 + $0x30] sm:$0xff]
  %v1858 = vld [vmem:[%s1850 + $0x38] sm:$0xff]
  %v1859 = vld [vmem:[%s1850 + $0x40] sm:$0xff]
  %v1860 = vld [vmem:[%s1850 + $0x48] sm:$0xff]
  %v1861 = vld [vmem:[%s1850 + $0x50] sm:$0xff]
  %v1862 = vld [vmem:[%s1850 + $0x58] sm:$0xff]
  %v1863 = vld [vmem:[%s1850 + $0x60] sm:$0xff]
  %v1864 = vld [vmem:[%s1850 + $0x68] sm:$0xff]
  %v1865 = vadd.f32 %v1851, %v1782
  %v1866 = vadd.f32 %v1852, %v1787
  %v1867 = vadd.f32 %v1853, %v1792
  %v1868 = vadd.f32 %v1854, %v1797
  %v1869 = vadd.f32 %v1855, %v1802
  %v1870 = vadd.f32 %v1856, %v1807
  %v1871 = vadd.f32 %v1857, %v1812
  %v1872 = vadd.f32 %v1858, %v1817
  %v1873 = vadd.f32 %v1859, %v1822
  %v1874 = vadd.f32 %v1860, %v1827
  %v1875 = vadd.f32 %v1861, %v1832
  %v1876 = vadd.f32 %v1862, %v1837
  %v1877 = vadd.f32 %v1863, %v1842
  %v1878 = vadd.f32 %v1864, %v1847
  %1879 = vst [vmem:[%s1850] sm:$0xff] %v1865
  %1880 = vst [vmem:[%s1850 + $0x8] sm:$0xff] %v1866
  %1881 = vst [vmem:[%s1850 + $0x10] sm:$0xff] %v1867
  %1882 = vst [vmem:[%s1850 + $0x18] sm:$0xff] %v1868
  %1883 = vst [vmem:[%s1850 + $0x20] sm:$0xff] %v1869
  %1884 = vst [vmem:[%s1850 + $0x28] sm:$0xff] %v1870
  %1885 = vst [vmem:[%s1850 + $0x30] sm:$0xff] %v1871
  %1886 = vst [vmem:[%s1850 + $0x38] sm:$0xff] %v1872
  %1887 = vst [vmem:[%s1850 + $0x40] sm:$0xff] %v1873
  %1888 = vst [vmem:[%s1850 + $0x48] sm:$0xff] %v1874
  %1889 = vst [vmem:[%s1850 + $0x50] sm:$0xff] %v1875
  %1890 = vst [vmem:[%s1850 + $0x58] sm:$0xff] %v1876
  %1891 = vst [vmem:[%s1850 + $0x60] sm:$0xff] %v1877
  %1892 = vst [vmem:[%s1850 + $0x68] sm:$0xff] %v1878
  %s1893 = scalar_lea.vmem %s1, 96
  %v1894 = vld [vmem:[%s1893] sm:$0xff]
  %v1895 = vld [vmem:[%s1893 + $0x8] sm:$0xff]
  %v1896 = vld [vmem:[%s1893 + $0x10] sm:$0xff]
  %v1897 = vld [vmem:[%s1893 + $0x18] sm:$0xff]
  %v1898 = vld [vmem:[%s1893 + $0x20] sm:$0xff]
  %v1899 = vld [vmem:[%s1893 + $0x28] sm:$0xff]
  %v1900 = vld [vmem:[%s1893 + $0x30] sm:$0xff]
  %v1901 = vld [vmem:[%s1893 + $0x38] sm:$0xff]
  %v1902 = vld [vmem:[%s1893 + $0x40] sm:$0xff]
  %v1903 = vld [vmem:[%s1893 + $0x48] sm:$0xff]
  %v1904 = vld [vmem:[%s1893 + $0x50] sm:$0xff]
  %v1905 = vld [vmem:[%s1893 + $0x58] sm:$0xff]
  %v1906 = vld [vmem:[%s1893 + $0x60] sm:$0xff]
  %v1907 = vld [vmem:[%s1893 + $0x68] sm:$0xff]
  %v1908 = vld [vmem:[%s1893 + $0x70] sm:$0xff]
  %v1909 = vld [vmem:[%s1893 + $0x78] sm:$0xff]
  %v1910 = vld [vmem:[%s1893 + $0x80] sm:$0xff]
  %v1911 = vld [vmem:[%s1893 + $0x88] sm:$0xff]
  %v1912 = vld [vmem:[%s1893 + $0x90] sm:$0xff]
  %v1913 = vld [vmem:[%s1893 + $0x98] sm:$0xff]
  %v1914 = vld [vmem:[%s1893 + $0xa0] sm:$0xff]
  %v1915 = vld [vmem:[%s1893 + $0xa8] sm:$0xff]
  %v1916 = vld [vmem:[%s1893 + $0xb0] sm:$0xff]
  %v1917 = vld [vmem:[%s1893 + $0xb8] sm:$0xff]
  %v1918 = vld [vmem:[%s1893 + $0xc0] sm:$0xff]
  %v1919 = vld [vmem:[%s1893 + $0xc8] sm:$0xff]
  %v1920 = vld [vmem:[%s1893 + $0xd0] sm:$0xff]
  %v1921 = vld [vmem:[%s1893 + $0xd8] sm:$0xff]
  %v1922 = vld [vmem:[%s1893 + $0xe0] sm:$0xff]
  %v1923 = vld [vmem:[%s1893 + $0xe8] sm:$0xff]
  %v1924 = vld [vmem:[%s1893 + $0xf0] sm:$0xff]
  %v1925 = vld [vmem:[%s1893 + $0xf8] sm:$0xff]
  %v1926 = vld [vmem:[%s1893 + $0x100] sm:$0xff]
  %v1927 = vld [vmem:[%s1893 + $0x108] sm:$0xff]
  %v1928 = vld [vmem:[%s1893 + $0x110] sm:$0xff]
  %v1929 = vld [vmem:[%s1893 + $0x118] sm:$0xff]
  %v1930 = vld [vmem:[%s1893 + $0x120] sm:$0xff]
  %v1931 = vld [vmem:[%s1893 + $0x128] sm:$0xff]
  %v1932 = vld [vmem:[%s1893 + $0x130] sm:$0xff]
  %v1933 = vld [vmem:[%s1893 + $0x138] sm:$0xff]
  %v1934 = vld [vmem:[%s1893 + $0x140] sm:$0xff]
  %v1935 = vld [vmem:[%s1893 + $0x148] sm:$0xff]
  %v1936 = vld [vmem:[%s1893 + $0x150] sm:$0xff]
  %v1937 = vld [vmem:[%s1893 + $0x158] sm:$0xff]
  %v1938 = vld [vmem:[%s1893 + $0x160] sm:$0xff]
  %v1939 = vld [vmem:[%s1893 + $0x168] sm:$0xff]
  %v1940 = vld [vmem:[%s1893 + $0x170] sm:$0xff]
  %v1941 = vld [vmem:[%s1893 + $0x178] sm:$0xff]
  %v1942 = vld [vmem:[%s1893 + $0x180] sm:$0xff]
  %v1943 = vld [vmem:[%s1893 + $0x188] sm:$0xff]
  %v1944 = vld [vmem:[%s1893 + $0x190] sm:$0xff]
  %v1945 = vld [vmem:[%s1893 + $0x198] sm:$0xff]
  %v1946 = vld [vmem:[%s1893 + $0x1a0] sm:$0xff]
  %v1947 = vld [vmem:[%s1893 + $0x1a8] sm:$0xff]
  %v1948 = vld [vmem:[%s1893 + $0x1b0] sm:$0xff]
  %v1949 = vld [vmem:[%s1893 + $0x1b8] sm:$0xff]
  %v1950 = vld [vmem:[%s1893 + $0x1c0] sm:$0xff]
  %v1951 = vld [vmem:[%s1893 + $0x1c8] sm:$0xff]
  %v1952 = vld [vmem:[%s1893 + $0x1d0] sm:$0xff]
  %v1953 = vld [vmem:[%s1893 + $0x1d8] sm:$0xff]
  %v1954 = vld [vmem:[%s1893 + $0x1e0] sm:$0xff]
  %v1955 = vld [vmem:[%s1893 + $0x1e8] sm:$0xff]
  %v1956 = vld [vmem:[%s1893 + $0x1f0] sm:$0xff]
  %v1957 = vld [vmem:[%s1893 + $0x1f8] sm:$0xff]
  %v1958 = vld [vmem:[%s1893 + $0x200] sm:$0xff]
  %v1959 = vld [vmem:[%s1893 + $0x208] sm:$0xff]
  %v1960 = vld [vmem:[%s1893 + $0x210] sm:$0xff]
  %v1961 = vld [vmem:[%s1893 + $0x218] sm:$0xff]
  %v1962 = vld [vmem:[%s1893 + $0x220] sm:$0xff]
  %v1963 = vld [vmem:[%s1893 + $0x228] sm:$0xff]
  %v1964 = vld [vmem:[%s1893 + $0x230] sm:$0xff]
  %v1965 = vld [vmem:[%s1893 + $0x238] sm:$0xff]
  %v1966 = vld [vmem:[%s1893 + $0x240] sm:$0xff]
  %v1967 = vld [vmem:[%s1893 + $0x248] sm:$0xff]
  %v1968 = vld [vmem:[%s1893 + $0x250] sm:$0xff]
  %v1969 = vld [vmem:[%s1893 + $0x258] sm:$0xff]
  %v1970 = vld [vmem:[%s1893 + $0x260] sm:$0xff]
  %v1971 = vld [vmem:[%s1893 + $0x268] sm:$0xff]
  %v1972 = vld [vmem:[%s1893 + $0x270] sm:$0xff]
  %v1973 = vld [vmem:[%s1893 + $0x278] sm:$0xff]
  %v1974 = vld [vmem:[%s1893 + $0x280] sm:$0xff]
  %v1975 = vld [vmem:[%s1893 + $0x288] sm:$0xff]
  %v1976 = vld [vmem:[%s1893 + $0x290] sm:$0xff]
  %v1977 = vld [vmem:[%s1893 + $0x298] sm:$0xff]
  %s1978 = scalar_lea.vmem %s3, 2304
  %v1979 = vld [vmem:[%s1978] sm:$0xff]
  %v1980 = vld [vmem:[%s1978 + $0x8] sm:$0xff]
  %v1981 = vld [vmem:[%s1978 + $0x10] sm:$0xff]
  %v1982 = vld [vmem:[%s1978 + $0x18] sm:$0xff]
  %v1983 = vld [vmem:[%s1978 + $0x20] sm:$0xff]
  %v1984 = vld [vmem:[%s1978 + $0x28] sm:$0xff]
  %v1985 = vld [vmem:[%s1978 + $0x30] sm:$0xff]
  %v1986 = vld [vmem:[%s1978 + $0x38] sm:$0xff]
  %v1987 = vld [vmem:[%s1978 + $0x40] sm:$0xff]
  %v1988 = vld [vmem:[%s1978 + $0x48] sm:$0xff]
  %v1989 = vld [vmem:[%s1978 + $0x50] sm:$0xff]
  %v1990 = vld [vmem:[%s1978 + $0x58] sm:$0xff]
  %v1991 = vld [vmem:[%s1978 + $0x60] sm:$0xff]
  %v1992 = vld [vmem:[%s1978 + $0x68] sm:$0xff]
  %v1993 = vld [vmem:[%s1978 + $0x70] sm:$0xff]
  %v1994 = vld [vmem:[%s1978 + $0x78] sm:$0xff]
  %v1995 = vld [vmem:[%s1978 + $0x80] sm:$0xff]
  %v1996 = vld [vmem:[%s1978 + $0x88] sm:$0xff]
  %v1997 = vld [vmem:[%s1978 + $0x90] sm:$0xff]
  %v1998 = vld [vmem:[%s1978 + $0x98] sm:$0xff]
  %v1999 = vld [vmem:[%s1978 + $0xa0] sm:$0xff]
  %v2000 = vld [vmem:[%s1978 + $0xa8] sm:$0xff]
  %v2001 = vld [vmem:[%s1978 + $0xb0] sm:$0xff]
  %v2002 = vld [vmem:[%s1978 + $0xb8] sm:$0xff]
  %v2003 = vld [vmem:[%s1978 + $0xc0] sm:$0xff]
  %v2004 = vld [vmem:[%s1978 + $0xc8] sm:$0xff]
  %v2005 = vld [vmem:[%s1978 + $0xd0] sm:$0xff]
  %v2006 = vld [vmem:[%s1978 + $0xd8] sm:$0xff]
  %v2007 = vld [vmem:[%s1978 + $0xe0] sm:$0xff]
  %v2008 = vld [vmem:[%s1978 + $0xe8] sm:$0xff]
  %v2009 = vld [vmem:[%s1978 + $0xf0] sm:$0xff]
  %v2010 = vld [vmem:[%s1978 + $0xf8] sm:$0xff]
  %v2011 = vld [vmem:[%s1978 + $0x100] sm:$0xff]
  %v2012 = vld [vmem:[%s1978 + $0x108] sm:$0xff]
  %v2013 = vld [vmem:[%s1978 + $0x110] sm:$0xff]
  %v2014 = vld [vmem:[%s1978 + $0x118] sm:$0xff]
  %v2015 = vld [vmem:[%s1978 + $0x120] sm:$0xff]
  %v2016 = vld [vmem:[%s1978 + $0x128] sm:$0xff]
  %v2017 = vld [vmem:[%s1978 + $0x130] sm:$0xff]
  %v2018 = vld [vmem:[%s1978 + $0x138] sm:$0xff]
  %v2019 = vld [vmem:[%s1978 + $0x140] sm:$0xff]
  %v2020 = vld [vmem:[%s1978 + $0x148] sm:$0xff]
  %v2021 = vld [vmem:[%s1978 + $0x150] sm:$0xff]
  %v2022 = vld [vmem:[%s1978 + $0x158] sm:$0xff]
  %v2023 = vld [vmem:[%s1978 + $0x160] sm:$0xff]
  %v2024 = vld [vmem:[%s1978 + $0x168] sm:$0xff]
  %v2025 = vld [vmem:[%s1978 + $0x170] sm:$0xff]
  %v2026 = vld [vmem:[%s1978 + $0x178] sm:$0xff]
  %v2027 = vld [vmem:[%s1978 + $0x180] sm:$0xff]
  %v2028 = vld [vmem:[%s1978 + $0x188] sm:$0xff]
  %v2029 = vld [vmem:[%s1978 + $0x190] sm:$0xff]
  %v2030 = vld [vmem:[%s1978 + $0x198] sm:$0xff]
  %v2031 = vld [vmem:[%s1978 + $0x1a0] sm:$0xff]
  %v2032 = vld [vmem:[%s1978 + $0x1a8] sm:$0xff]
  %v2033 = vld [vmem:[%s1978 + $0x1b0] sm:$0xff]
  %v2034 = vld [vmem:[%s1978 + $0x1b8] sm:$0xff]
  %v2035 = vld [vmem:[%s1978 + $0x1c0] sm:$0xff]
  %v2036 = vld [vmem:[%s1978 + $0x1c8] sm:$0xff]
  %v2037 = vld [vmem:[%s1978 + $0x1d0] sm:$0xff]
  %v2038 = vld [vmem:[%s1978 + $0x1d8] sm:$0xff]
  %v2039 = vld [vmem:[%s1978 + $0x1e0] sm:$0xff]
  %v2040 = vld [vmem:[%s1978 + $0x1e8] sm:$0xff]
  %v2041 = vld [vmem:[%s1978 + $0x1f0] sm:$0xff]
  %v2042 = vld [vmem:[%s1978 + $0x1f8] sm:$0xff]
  %v2043 = vld [vmem:[%s1978 + $0x200] sm:$0xff]
  %v2044 = vld [vmem:[%s1978 + $0x208] sm:$0xff]
  %v2045 = vld [vmem:[%s1978 + $0x210] sm:$0xff]
  %v2046 = vld [vmem:[%s1978 + $0x218] sm:$0xff]
  %v2047 = vld [vmem:[%s1978 + $0x220] sm:$0xff]
  %v2048 = vld [vmem:[%s1978 + $0x228] sm:$0xff]
  %v2049 = vld [vmem:[%s1978 + $0x230] sm:$0xff]
  %v2050 = vld [vmem:[%s1978 + $0x238] sm:$0xff]
  %v2051 = vld [vmem:[%s1978 + $0x240] sm:$0xff]
  %v2052 = vld [vmem:[%s1978 + $0x248] sm:$0xff]
  %v2053 = vld [vmem:[%s1978 + $0x250] sm:$0xff]
  %v2054 = vld [vmem:[%s1978 + $0x258] sm:$0xff]
  %v2055 = vld [vmem:[%s1978 + $0x260] sm:$0xff]
  %v2056 = vld [vmem:[%s1978 + $0x268] sm:$0xff]
  %v2057 = vld [vmem:[%s1978 + $0x270] sm:$0xff]
  %v2058 = vld [vmem:[%s1978 + $0x278] sm:$0xff]
  %v2059 = vld [vmem:[%s1978 + $0x280] sm:$0xff]
  %v2060 = vld [vmem:[%s1978 + $0x288] sm:$0xff]
  %v2061 = vld [vmem:[%s1978 + $0x290] sm:$0xff]
  %v2062 = vld [vmem:[%s1978 + $0x298] sm:$0xff]
  %v2063 = vld [vmem:[%s1978 + $0x2a0] sm:$0xff]
  %v2064 = vld [vmem:[%s1978 + $0x2a8] sm:$0xff]
  %v2065 = vld [vmem:[%s1978 + $0x2b0] sm:$0xff]
  %v2066 = vld [vmem:[%s1978 + $0x2b8] sm:$0xff]
  %v2067 = vld [vmem:[%s1978 + $0x2c0] sm:$0xff]
  %v2068 = vld [vmem:[%s1978 + $0x2c8] sm:$0xff]
  %v2069 = vld [vmem:[%s1978 + $0x2d0] sm:$0xff]
  %v2070 = vld [vmem:[%s1978 + $0x2d8] sm:$0xff]
  %v2071 = vld [vmem:[%s1978 + $0x2e0] sm:$0xff]
  %v2072 = vld [vmem:[%s1978 + $0x2e8] sm:$0xff]
  %v2073 = vld [vmem:[%s1978 + $0x2f0] sm:$0xff]
  %v2074 = vld [vmem:[%s1978 + $0x2f8] sm:$0xff]
  %2075 = vmatprep.subr.mxu0 0.0
  %2076 = vmatpush1.msra.mxu0 %v1994
  %2077 = vmatprep.subr.mxu0 0.0
  %2078 = vmatpush1.msra.mxu0 %v1993
  %2079 = vmatprep.subr.mxu0 0.0
  %2080 = vmatpush1.msra.mxu0 %v1992
  %2081 = vmatprep.subr.mxu0 0.0
  %2082 = vmatpush1.msra.mxu0 %v1991
  %2083 = vmatprep.subr.mxu0 0.0
  %2084 = vmatpush1.msra.mxu0 %v1990
  %2085 = vmatprep.subr.mxu0 0.0
  %2086 = vmatpush1.msra.mxu0 %v1989
  %2087 = vmatprep.subr.mxu0 0.0
  %2088 = vmatpush1.msra.mxu0 %v1988
  %2089 = vmatprep.subr.mxu0 0.0
  %2090 = vmatpush1.msra.mxu0 %v1987
  %2091 = vmatprep.subr.mxu0 0.0
  %2092 = vmatpush1.msra.mxu0 %v1986
  %2093 = vmatprep.subr.mxu0 0.0
  %2094 = vmatpush1.msra.mxu0 %v1985
  %2095 = vmatprep.subr.mxu0 0.0
  %2096 = vmatpush1.msra.mxu0 %v1984
  %2097 = vmatprep.subr.mxu0 0.0
  %2098 = vmatpush1.msra.mxu0 %v1983
  %2099 = vmatprep.subr.mxu0 0.0
  %2100 = vmatpush1.msra.mxu0 %v1982
  %2101 = vmatprep.subr.mxu0 0.0
  %2102 = vmatpush1.msra.mxu0 %v1981
  %2103 = vmatprep.subr.mxu0 0.0
  %2104 = vmatpush1.msra.mxu0 %v1980
  %2105 = vmatprep.subr.mxu0 0.0
  %2106 = vmatpush1.msra.mxu0 %v1979
  %2107 = vmatprep.subr.mxu0 0.0
  %2108 = vmatpush2.msra.mxu0 %v2010
  %2109 = vmatprep.subr.mxu0 0.0
  %2110 = vmatpush2.msra.mxu0 %v2009
  %2111 = vmatprep.subr.mxu0 0.0
  %2112 = vmatpush2.msra.mxu0 %v2008
  %2113 = vmatprep.subr.mxu0 0.0
  %2114 = vmatpush2.msra.mxu0 %v2007
  %2115 = vmatprep.subr.mxu0 0.0
  %2116 = vmatpush2.msra.mxu0 %v2006
  %2117 = vmatprep.subr.mxu0 0.0
  %2118 = vmatpush2.msra.mxu0 %v2005
  %2119 = vmatprep.subr.mxu0 0.0
  %2120 = vmatpush2.msra.mxu0 %v2004
  %2121 = vmatprep.subr.mxu0 0.0
  %2122 = vmatpush2.msra.mxu0 %v2003
  %2123 = vmatprep.subr.mxu0 0.0
  %2124 = vmatpush2.msra.mxu0 %v2002
  %2125 = vmatprep.subr.mxu0 0.0
  %2126 = vmatpush2.msra.mxu0 %v2001
  %2127 = vmatprep.subr.mxu0 0.0
  %2128 = vmatpush2.msra.mxu0 %v2000
  %2129 = vmatprep.subr.mxu0 0.0
  %2130 = vmatpush2.msra.mxu0 %v1999
  %2131 = vmatprep.subr.mxu0 0.0
  %2132 = vmatpush2.msra.mxu0 %v1998
  %2133 = vmatprep.subr.mxu0 0.0
  %2134 = vmatpush2.msra.mxu0 %v1997
  %2135 = vmatprep.subr.mxu0 0.0
  %2136 = vmatpush2.msra.mxu0 %v1996
  %2137 = vmatprep.subr.mxu0 0.0
  %2138 = vmatpush2.msra.mxu0 %v1995
  %2139 = vmatprep.mubr.f32.mxu0 %v1895
  %2140 = vmatmul.mubr.f32.gmra.mxu0 %v1894
  %v2141 = vpop.f32.mrf.mxu0
  %v2142 = vadd.f32 0.0, %v2141
  %v2143 = vpop.f32.mrf.mxu0
  %2144 = vmatprep.mubr.f32.mxu0 %v1901
  %2145 = vmatmul.mubr.f32.gmra.mxu0 %v1900
  %v2146 = vpop.f32.mrf.mxu0
  %v2147 = vadd.f32 0.0, %v2146
  %v2148 = vpop.f32.mrf.mxu0
  %2149 = vmatprep.mubr.f32.mxu0 %v1907
  %2150 = vmatmul.mubr.f32.gmra.mxu0 %v1906
  %v2151 = vpop.f32.mrf.mxu0
  %v2152 = vadd.f32 0.0, %v2151
  %v2153 = vpop.f32.mrf.mxu0
  %2154 = vmatprep.mubr.f32.mxu0 %v1913
  %2155 = vmatmul.mubr.f32.gmra.mxu0 %v1912
  %v2156 = vpop.f32.mrf.mxu0
  %v2157 = vadd.f32 0.0, %v2156
  %v2158 = vpop.f32.mrf.mxu0
  %2159 = vmatprep.mubr.f32.mxu0 %v1919
  %2160 = vmatmul.mubr.f32.gmra.mxu0 %v1918
  %v2161 = vpop.f32.mrf.mxu0
  %v2162 = vadd.f32 0.0, %v2161
  %v2163 = vpop.f32.mrf.mxu0
  %2164 = vmatprep.mubr.f32.mxu0 %v1925
  %2165 = vmatmul.mubr.f32.gmra.mxu0 %v1924
  %v2166 = vpop.f32.mrf.mxu0
  %v2167 = vadd.f32 0.0, %v2166
  %v2168 = vpop.f32.mrf.mxu0
  %2169 = vmatprep.mubr.f32.mxu0 %v1931
  %2170 = vmatmul.mubr.f32.gmra.mxu0 %v1930
  %v2171 = vpop.f32.mrf.mxu0
  %v2172 = vadd.f32 0.0, %v2171
  %v2173 = vpop.f32.mrf.mxu0
  %2174 = vmatprep.mubr.f32.mxu0 %v1937
  %2175 = vmatmul.mubr.f32.gmra.mxu0 %v1936
  %v2176 = vpop.f32.mrf.mxu0
  %v2177 = vadd.f32 0.0, %v2176
  %v2178 = vpop.f32.mrf.mxu0
  %2179 = vmatprep.mubr.f32.mxu0 %v1943
  %2180 = vmatmul.mubr.f32.gmra.mxu0 %v1942
  %v2181 = vpop.f32.mrf.mxu0
  %v2182 = vadd.f32 0.0, %v2181
  %v2183 = vpop.f32.mrf.mxu0
  %2184 = vmatprep.mubr.f32.mxu0 %v1949
  %2185 = vmatmul.mubr.f32.gmra.mxu0 %v1948
  %v2186 = vpop.f32.mrf.mxu0
  %v2187 = vadd.f32 0.0, %v2186
  %v2188 = vpop.f32.mrf.mxu0
  %2189 = vmatprep.mubr.f32.mxu0 %v1955
  %2190 = vmatmul.mubr.f32.gmra.mxu0 %v1954
  %v2191 = vpop.f32.mrf.mxu0
  %v2192 = vadd.f32 0.0, %v2191
  %v2193 = vpop.f32.mrf.mxu0
  %2194 = vmatprep.mubr.f32.mxu0 %v1961
  %2195 = vmatmul.mubr.f32.gmra.mxu0 %v1960
  %v2196 = vpop.f32.mrf.mxu0
  %v2197 = vadd.f32 0.0, %v2196
  %v2198 = vpop.f32.mrf.mxu0
  %2199 = vmatprep.mubr.f32.mxu0 %v1967
  %2200 = vmatmul.mubr.f32.gmra.mxu0 %v1966
  %v2201 = vpop.f32.mrf.mxu0
  %v2202 = vadd.f32 0.0, %v2201
  %v2203 = vpop.f32.mrf.mxu0
  %2204 = vmatprep.mubr.f32.mxu0 %v1973
  %2205 = vmatmul.mubr.f32.gmra.mxu0 %v1972
  %v2206 = vpop.f32.mrf.mxu0
  %v2207 = vadd.f32 0.0, %v2206
  %v2208 = vpop.f32.mrf.mxu0
  %2209 = vdwg.mxu0
  %2210 = vmatprep.subr.mxu0 0.0
  %2211 = vmatpush1.msra.mxu0 %v2026
  %2212 = vmatprep.subr.mxu0 0.0
  %2213 = vmatpush1.msra.mxu0 %v2025
  %2214 = vmatprep.subr.mxu0 0.0
  %2215 = vmatpush1.msra.mxu0 %v2024
  %2216 = vmatprep.subr.mxu0 0.0
  %2217 = vmatpush1.msra.mxu0 %v2023
  %2218 = vmatprep.subr.mxu0 0.0
  %2219 = vmatpush1.msra.mxu0 %v2022
  %2220 = vmatprep.subr.mxu0 0.0
  %2221 = vmatpush1.msra.mxu0 %v2021
  %2222 = vmatprep.subr.mxu0 0.0
  %2223 = vmatpush1.msra.mxu0 %v2020
  %2224 = vmatprep.subr.mxu0 0.0
  %2225 = vmatpush1.msra.mxu0 %v2019
  %2226 = vmatprep.subr.mxu0 0.0
  %2227 = vmatpush1.msra.mxu0 %v2018
  %2228 = vmatprep.subr.mxu0 0.0
  %2229 = vmatpush1.msra.mxu0 %v2017
  %2230 = vmatprep.subr.mxu0 0.0
  %2231 = vmatpush1.msra.mxu0 %v2016
  %2232 = vmatprep.subr.mxu0 0.0
  %2233 = vmatpush1.msra.mxu0 %v2015
  %2234 = vmatprep.subr.mxu0 0.0
  %2235 = vmatpush1.msra.mxu0 %v2014
  %2236 = vmatprep.subr.mxu0 0.0
  %2237 = vmatpush1.msra.mxu0 %v2013
  %2238 = vmatprep.subr.mxu0 0.0
  %2239 = vmatpush1.msra.mxu0 %v2012
  %2240 = vmatprep.subr.mxu0 0.0
  %2241 = vmatpush1.msra.mxu0 %v2011
  %2242 = vmatprep.subr.mxu0 0.0
  %2243 = vmatpush2.msra.mxu0 %v2042
  %2244 = vmatprep.subr.mxu0 0.0
  %2245 = vmatpush2.msra.mxu0 %v2041
  %2246 = vmatprep.subr.mxu0 0.0
  %2247 = vmatpush2.msra.mxu0 %v2040
  %2248 = vmatprep.subr.mxu0 0.0
  %2249 = vmatpush2.msra.mxu0 %v2039
  %2250 = vmatprep.subr.mxu0 0.0
  %2251 = vmatpush2.msra.mxu0 %v2038
  %2252 = vmatprep.subr.mxu0 0.0
  %2253 = vmatpush2.msra.mxu0 %v2037
  %2254 = vmatprep.subr.mxu0 0.0
  %2255 = vmatpush2.msra.mxu0 %v2036
  %2256 = vmatprep.subr.mxu0 0.0
  %2257 = vmatpush2.msra.mxu0 %v2035
  %2258 = vmatprep.subr.mxu0 0.0
  %2259 = vmatpush2.msra.mxu0 %v2034
  %2260 = vmatprep.subr.mxu0 0.0
  %2261 = vmatpush2.msra.mxu0 %v2033
  %2262 = vmatprep.subr.mxu0 0.0
  %2263 = vmatpush2.msra.mxu0 %v2032
  %2264 = vmatprep.subr.mxu0 0.0
  %2265 = vmatpush2.msra.mxu0 %v2031
  %2266 = vmatprep.subr.mxu0 0.0
  %2267 = vmatpush2.msra.mxu0 %v2030
  %2268 = vmatprep.subr.mxu0 0.0
  %2269 = vmatpush2.msra.mxu0 %v2029
  %2270 = vmatprep.subr.mxu0 0.0
  %2271 = vmatpush2.msra.mxu0 %v2028
  %2272 = vmatprep.subr.mxu0 0.0
  %2273 = vmatpush2.msra.mxu0 %v2027
  %2274 = vmatprep.mubr.f32.mxu0 %v1897
  %2275 = vmatmul.mubr.f32.gmra.mxu0 %v1896
  %v2276 = vpop.f32.mrf.mxu0
  %v2277 = vadd.f32 %v2142, %v2276
  %v2278 = vpop.f32.mrf.mxu0
  %2279 = vmatprep.mubr.f32.mxu0 %v1903
  %2280 = vmatmul.mubr.f32.gmra.mxu0 %v1902
  %v2281 = vpop.f32.mrf.mxu0
  %v2282 = vadd.f32 %v2147, %v2281
  %v2283 = vpop.f32.mrf.mxu0
  %2284 = vmatprep.mubr.f32.mxu0 %v1909
  %2285 = vmatmul.mubr.f32.gmra.mxu0 %v1908
  %v2286 = vpop.f32.mrf.mxu0
  %v2287 = vadd.f32 %v2152, %v2286
  %v2288 = vpop.f32.mrf.mxu0
  %2289 = vmatprep.mubr.f32.mxu0 %v1915
  %2290 = vmatmul.mubr.f32.gmra.mxu0 %v1914
  %v2291 = vpop.f32.mrf.mxu0
  %v2292 = vadd.f32 %v2157, %v2291
  %v2293 = vpop.f32.mrf.mxu0
  %2294 = vmatprep.mubr.f32.mxu0 %v1921
  %2295 = vmatmul.mubr.f32.gmra.mxu0 %v1920
  %v2296 = vpop.f32.mrf.mxu0
  %v2297 = vadd.f32 %v2162, %v2296
  %v2298 = vpop.f32.mrf.mxu0
  %2299 = vmatprep.mubr.f32.mxu0 %v1927
  %2300 = vmatmul.mubr.f32.gmra.mxu0 %v1926
  %v2301 = vpop.f32.mrf.mxu0
  %v2302 = vadd.f32 %v2167, %v2301
  %v2303 = vpop.f32.mrf.mxu0
  %2304 = vmatprep.mubr.f32.mxu0 %v1933
  %2305 = vmatmul.mubr.f32.gmra.mxu0 %v1932
  %v2306 = vpop.f32.mrf.mxu0
  %v2307 = vadd.f32 %v2172, %v2306
  %v2308 = vpop.f32.mrf.mxu0
  %2309 = vmatprep.mubr.f32.mxu0 %v1939
  %2310 = vmatmul.mubr.f32.gmra.mxu0 %v1938
  %v2311 = vpop.f32.mrf.mxu0
  %v2312 = vadd.f32 %v2177, %v2311
  %v2313 = vpop.f32.mrf.mxu0
  %2314 = vmatprep.mubr.f32.mxu0 %v1945
  %2315 = vmatmul.mubr.f32.gmra.mxu0 %v1944
  %v2316 = vpop.f32.mrf.mxu0
  %v2317 = vadd.f32 %v2182, %v2316
  %v2318 = vpop.f32.mrf.mxu0
  %2319 = vmatprep.mubr.f32.mxu0 %v1951
  %2320 = vmatmul.mubr.f32.gmra.mxu0 %v1950
  %v2321 = vpop.f32.mrf.mxu0
  %v2322 = vadd.f32 %v2187, %v2321
  %v2323 = vpop.f32.mrf.mxu0
  %2324 = vmatprep.mubr.f32.mxu0 %v1957
  %2325 = vmatmul.mubr.f32.gmra.mxu0 %v1956
  %v2326 = vpop.f32.mrf.mxu0
  %v2327 = vadd.f32 %v2192, %v2326
  %v2328 = vpop.f32.mrf.mxu0
  %2329 = vmatprep.mubr.f32.mxu0 %v1963
  %2330 = vmatmul.mubr.f32.gmra.mxu0 %v1962
  %v2331 = vpop.f32.mrf.mxu0
  %v2332 = vadd.f32 %v2197, %v2331
  %v2333 = vpop.f32.mrf.mxu0
  %2334 = vmatprep.mubr.f32.mxu0 %v1969
  %2335 = vmatmul.mubr.f32.gmra.mxu0 %v1968
  %v2336 = vpop.f32.mrf.mxu0
  %v2337 = vadd.f32 %v2202, %v2336
  %v2338 = vpop.f32.mrf.mxu0
  %2339 = vmatprep.mubr.f32.mxu0 %v1975
  %2340 = vmatmul.mubr.f32.gmra.mxu0 %v1974
  %v2341 = vpop.f32.mrf.mxu0
  %v2342 = vadd.f32 %v2207, %v2341
  %v2343 = vpop.f32.mrf.mxu0
  %2344 = vdwg.mxu0
  %2345 = vmatprep.subr.mxu0 0.0
  %2346 = vmatpush1.msra.mxu0 %v2058
  %2347 = vmatprep.subr.mxu0 0.0
  %2348 = vmatpush1.msra.mxu0 %v2057
  %2349 = vmatprep.subr.mxu0 0.0
  %2350 = vmatpush1.msra.mxu0 %v2056
  %2351 = vmatprep.subr.mxu0 0.0
  %2352 = vmatpush1.msra.mxu0 %v2055
  %2353 = vmatprep.subr.mxu0 0.0
  %2354 = vmatpush1.msra.mxu0 %v2054
  %2355 = vmatprep.subr.mxu0 0.0
  %2356 = vmatpush1.msra.mxu0 %v2053
  %2357 = vmatprep.subr.mxu0 0.0
  %2358 = vmatpush1.msra.mxu0 %v2052
  %2359 = vmatprep.subr.mxu0 0.0
  %2360 = vmatpush1.msra.mxu0 %v2051
  %2361 = vmatprep.subr.mxu0 0.0
  %2362 = vmatpush1.msra.mxu0 %v2050
  %2363 = vmatprep.subr.mxu0 0.0
  %2364 = vmatpush1.msra.mxu0 %v2049
  %2365 = vmatprep.subr.mxu0 0.0
  %2366 = vmatpush1.msra.mxu0 %v2048
  %2367 = vmatprep.subr.mxu0 0.0
  %2368 = vmatpush1.msra.mxu0 %v2047
  %2369 = vmatprep.subr.mxu0 0.0
  %2370 = vmatpush1.msra.mxu0 %v2046
  %2371 = vmatprep.subr.mxu0 0.0
  %2372 = vmatpush1.msra.mxu0 %v2045
  %2373 = vmatprep.subr.mxu0 0.0
  %2374 = vmatpush1.msra.mxu0 %v2044
  %2375 = vmatprep.subr.mxu0 0.0
  %2376 = vmatpush1.msra.mxu0 %v2043
  %2377 = vmatprep.subr.mxu0 0.0
  %2378 = vmatpush2.msra.mxu0 %v2074
  %2379 = vmatprep.subr.mxu0 0.0
  %2380 = vmatpush2.msra.mxu0 %v2073
  %2381 = vmatprep.subr.mxu0 0.0
  %2382 = vmatpush2.msra.mxu0 %v2072
  %2383 = vmatprep.subr.mxu0 0.0
  %2384 = vmatpush2.msra.mxu0 %v2071
  %2385 = vmatprep.subr.mxu0 0.0
  %2386 = vmatpush2.msra.mxu0 %v2070
  %2387 = vmatprep.subr.mxu0 0.0
  %2388 = vmatpush2.msra.mxu0 %v2069
  %2389 = vmatprep.subr.mxu0 0.0
  %2390 = vmatpush2.msra.mxu0 %v2068
  %2391 = vmatprep.subr.mxu0 0.0
  %2392 = vmatpush2.msra.mxu0 %v2067
  %2393 = vmatprep.subr.mxu0 0.0
  %2394 = vmatpush2.msra.mxu0 %v2066
  %2395 = vmatprep.subr.mxu0 0.0
  %2396 = vmatpush2.msra.mxu0 %v2065
  %2397 = vmatprep.subr.mxu0 0.0
  %2398 = vmatpush2.msra.mxu0 %v2064
  %2399 = vmatprep.subr.mxu0 0.0
  %2400 = vmatpush2.msra.mxu0 %v2063
  %2401 = vmatprep.subr.mxu0 0.0
  %2402 = vmatpush2.msra.mxu0 %v2062
  %2403 = vmatprep.subr.mxu0 0.0
  %2404 = vmatpush2.msra.mxu0 %v2061
  %2405 = vmatprep.subr.mxu0 0.0
  %2406 = vmatpush2.msra.mxu0 %v2060
  %2407 = vmatprep.subr.mxu0 0.0
  %2408 = vmatpush2.msra.mxu0 %v2059
  %2409 = vmatprep.mubr.f32.mxu0 %v1899
  %2410 = vmatmul.mubr.f32.gmra.mxu0 %v1898
  %v2411 = vpop.f32.mrf.mxu0
  %v2412 = vadd.f32 %v2277, %v2411
  %v2413 = vpop.f32.mrf.mxu0
  %2414 = vmatprep.mubr.f32.mxu0 %v1905
  %2415 = vmatmul.mubr.f32.gmra.mxu0 %v1904
  %v2416 = vpop.f32.mrf.mxu0
  %v2417 = vadd.f32 %v2282, %v2416
  %v2418 = vpop.f32.mrf.mxu0
  %2419 = vmatprep.mubr.f32.mxu0 %v1911
  %2420 = vmatmul.mubr.f32.gmra.mxu0 %v1910
  %v2421 = vpop.f32.mrf.mxu0
  %v2422 = vadd.f32 %v2287, %v2421
  %v2423 = vpop.f32.mrf.mxu0
  %2424 = vmatprep.mubr.f32.mxu0 %v1917
  %2425 = vmatmul.mubr.f32.gmra.mxu0 %v1916
  %v2426 = vpop.f32.mrf.mxu0
  %v2427 = vadd.f32 %v2292, %v2426
  %v2428 = vpop.f32.mrf.mxu0
  %2429 = vmatprep.mubr.f32.mxu0 %v1923
  %2430 = vmatmul.mubr.f32.gmra.mxu0 %v1922
  %v2431 = vpop.f32.mrf.mxu0
  %v2432 = vadd.f32 %v2297, %v2431
  %v2433 = vpop.f32.mrf.mxu0
  %2434 = vmatprep.mubr.f32.mxu0 %v1929
  %2435 = vmatmul.mubr.f32.gmra.mxu0 %v1928
  %v2436 = vpop.f32.mrf.mxu0
  %v2437 = vadd.f32 %v2302, %v2436
  %v2438 = vpop.f32.mrf.mxu0
  %2439 = vmatprep.mubr.f32.mxu0 %v1935
  %2440 = vmatmul.mubr.f32.gmra.mxu0 %v1934
  %v2441 = vpop.f32.mrf.mxu0
  %v2442 = vadd.f32 %v2307, %v2441
  %v2443 = vpop.f32.mrf.mxu0
  %2444 = vmatprep.mubr.f32.mxu0 %v1941
  %2445 = vmatmul.mubr.f32.gmra.mxu0 %v1940
  %v2446 = vpop.f32.mrf.mxu0
  %v2447 = vadd.f32 %v2312, %v2446
  %v2448 = vpop.f32.mrf.mxu0
  %2449 = vmatprep.mubr.f32.mxu0 %v1947
  %2450 = vmatmul.mubr.f32.gmra.mxu0 %v1946
  %v2451 = vpop.f32.mrf.mxu0
  %v2452 = vadd.f32 %v2317, %v2451
  %v2453 = vpop.f32.mrf.mxu0
  %2454 = vmatprep.mubr.f32.mxu0 %v1953
  %2455 = vmatmul.mubr.f32.gmra.mxu0 %v1952
  %v2456 = vpop.f32.mrf.mxu0
  %v2457 = vadd.f32 %v2322, %v2456
  %v2458 = vpop.f32.mrf.mxu0
  %2459 = vmatprep.mubr.f32.mxu0 %v1959
  %2460 = vmatmul.mubr.f32.gmra.mxu0 %v1958
  %v2461 = vpop.f32.mrf.mxu0
  %v2462 = vadd.f32 %v2327, %v2461
  %v2463 = vpop.f32.mrf.mxu0
  %2464 = vmatprep.mubr.f32.mxu0 %v1965
  %2465 = vmatmul.mubr.f32.gmra.mxu0 %v1964
  %v2466 = vpop.f32.mrf.mxu0
  %v2467 = vadd.f32 %v2332, %v2466
  %v2468 = vpop.f32.mrf.mxu0
  %2469 = vmatprep.mubr.f32.mxu0 %v1971
  %2470 = vmatmul.mubr.f32.gmra.mxu0 %v1970
  %v2471 = vpop.f32.mrf.mxu0
  %v2472 = vadd.f32 %v2337, %v2471
  %v2473 = vpop.f32.mrf.mxu0
  %2474 = vmatprep.mubr.f32.mxu0 %v1977
  %2475 = vmatmul.mubr.f32.gmra.mxu0 %v1976
  %v2476 = vpop.f32.mrf.mxu0
  %v2477 = vadd.f32 %v2342, %v2476
  %v2478 = vpop.f32.mrf.mxu0
  %2479 = vdwg.mxu0
  %v2480 = vld [vmem:[#allocation2] sm:$0xff]
  %v2481 = vld [vmem:[#allocation2 + $0x8] sm:$0xff]
  %v2482 = vld [vmem:[#allocation2 + $0x10] sm:$0xff]
  %v2483 = vld [vmem:[#allocation2 + $0x18] sm:$0xff]
  %v2484 = vld [vmem:[#allocation2 + $0x20] sm:$0xff]
  %v2485 = vld [vmem:[#allocation2 + $0x28] sm:$0xff]
  %v2486 = vld [vmem:[#allocation2 + $0x30] sm:$0xff]
  %v2487 = vld [vmem:[#allocation2 + $0x38] sm:$0xff]
  %v2488 = vld [vmem:[#allocation2 + $0x40] sm:$0xff]
  %v2489 = vld [vmem:[#allocation2 + $0x48] sm:$0xff]
  %v2490 = vld [vmem:[#allocation2 + $0x50] sm:$0xff]
  %v2491 = vld [vmem:[#allocation2 + $0x58] sm:$0xff]
  %v2492 = vld [vmem:[#allocation2 + $0x60] sm:$0xff]
  %v2493 = vld [vmem:[#allocation2 + $0x68] sm:$0xff]
  %v2494 = vadd.f32 %v2480, %v2412
  %v2495 = vadd.f32 %v2481, %v2417
  %v2496 = vadd.f32 %v2482, %v2422
  %v2497 = vadd.f32 %v2483, %v2427
  %v2498 = vadd.f32 %v2484, %v2432
  %v2499 = vadd.f32 %v2485, %v2437
  %v2500 = vadd.f32 %v2486, %v2442
  %v2501 = vadd.f32 %v2487, %v2447
  %v2502 = vadd.f32 %v2488, %v2452
  %v2503 = vadd.f32 %v2489, %v2457
  %v2504 = vadd.f32 %v2490, %v2462
  %v2505 = vadd.f32 %v2491, %v2467
  %v2506 = vadd.f32 %v2492, %v2472
  %v2507 = vadd.f32 %v2493, %v2477
  %2508 = vst [vmem:[#allocation2] sm:$0xff] %v2494
  %2509 = vst [vmem:[#allocation2 + $0x8] sm:$0xff] %v2495
  %2510 = vst [vmem:[#allocation2 + $0x10] sm:$0xff] %v2496
  %2511 = vst [vmem:[#allocation2 + $0x18] sm:$0xff] %v2497
  %2512 = vst [vmem:[#allocation2 + $0x20] sm:$0xff] %v2498
  %2513 = vst [vmem:[#allocation2 + $0x28] sm:$0xff] %v2499
  %2514 = vst [vmem:[#allocation2 + $0x30] sm:$0xff] %v2500
  %2515 = vst [vmem:[#allocation2 + $0x38] sm:$0xff] %v2501
  %2516 = vst [vmem:[#allocation2 + $0x40] sm:$0xff] %v2502
  %2517 = vst [vmem:[#allocation2 + $0x48] sm:$0xff] %v2503
  %2518 = vst [vmem:[#allocation2 + $0x50] sm:$0xff] %v2504
  %2519 = vst [vmem:[#allocation2 + $0x58] sm:$0xff] %v2505
  %2520 = vst [vmem:[#allocation2 + $0x60] sm:$0xff] %v2506
  %2521 = vst [vmem:[#allocation2 + $0x68] sm:$0xff] %v2507
  %s2522 = scalar_lea.vmem %s1, 192
  %v2523 = vld [vmem:[%s2522] sm:$0xff]
  %v2524 = vld [vmem:[%s2522 + $0x8] sm:$0xff]
  %v2525 = vld [vmem:[%s2522 + $0x10] sm:$0xff]
  %v2526 = vld [vmem:[%s2522 + $0x18] sm:$0xff]
  %v2527 = vld [vmem:[%s2522 + $0x20] sm:$0xff]
  %v2528 = vld [vmem:[%s2522 + $0x28] sm:$0xff]
  %v2529 = vld [vmem:[%s2522 + $0x30] sm:$0xff]
  %v2530 = vld [vmem:[%s2522 + $0x38] sm:$0xff]
  %v2531 = vld [vmem:[%s2522 + $0x40] sm:$0xff]
  %v2532 = vld [vmem:[%s2522 + $0x48] sm:$0xff]
  %v2533 = vld [vmem:[%s2522 + $0x50] sm:$0xff]
  %v2534 = vld [vmem:[%s2522 + $0x58] sm:$0xff]
  %v2535 = vld [vmem:[%s2522 + $0x60] sm:$0xff]
  %v2536 = vld [vmem:[%s2522 + $0x68] sm:$0xff]
  %v2537 = vld [vmem:[%s2522 + $0x70] sm:$0xff]
  %v2538 = vld [vmem:[%s2522 + $0x78] sm:$0xff]
  %v2539 = vld [vmem:[%s2522 + $0x80] sm:$0xff]
  %v2540 = vld [vmem:[%s2522 + $0x88] sm:$0xff]
  %v2541 = vld [vmem:[%s2522 + $0x90] sm:$0xff]
  %v2542 = vld [vmem:[%s2522 + $0x98] sm:$0xff]
  %v2543 = vld [vmem:[%s2522 + $0xa0] sm:$0xff]
  %v2544 = vld [vmem:[%s2522 + $0xa8] sm:$0xff]
  %v2545 = vld [vmem:[%s2522 + $0xb0] sm:$0xff]
  %v2546 = vld [vmem:[%s2522 + $0xb8] sm:$0xff]
  %v2547 = vld [vmem:[%s2522 + $0xc0] sm:$0xff]
  %v2548 = vld [vmem:[%s2522 + $0xc8] sm:$0xff]
  %v2549 = vld [vmem:[%s2522 + $0xd0] sm:$0xff]
  %v2550 = vld [vmem:[%s2522 + $0xd8] sm:$0xff]
  %v2551 = vld [vmem:[%s2522 + $0xe0] sm:$0xff]
  %v2552 = vld [vmem:[%s2522 + $0xe8] sm:$0xff]
  %v2553 = vld [vmem:[%s2522 + $0xf0] sm:$0xff]
  %v2554 = vld [vmem:[%s2522 + $0xf8] sm:$0xff]
  %v2555 = vld [vmem:[%s2522 + $0x100] sm:$0xff]
  %v2556 = vld [vmem:[%s2522 + $0x108] sm:$0xff]
  %v2557 = vld [vmem:[%s2522 + $0x110] sm:$0xff]
  %v2558 = vld [vmem:[%s2522 + $0x118] sm:$0xff]
  %v2559 = vld [vmem:[%s2522 + $0x120] sm:$0xff]
  %v2560 = vld [vmem:[%s2522 + $0x128] sm:$0xff]
  %v2561 = vld [vmem:[%s2522 + $0x130] sm:$0xff]
  %v2562 = vld [vmem:[%s2522 + $0x138] sm:$0xff]
  %v2563 = vld [vmem:[%s2522 + $0x140] sm:$0xff]
  %v2564 = vld [vmem:[%s2522 + $0x148] sm:$0xff]
  %v2565 = vld [vmem:[%s2522 + $0x150] sm:$0xff]
  %v2566 = vld [vmem:[%s2522 + $0x158] sm:$0xff]
  %v2567 = vld [vmem:[%s2522 + $0x160] sm:$0xff]
  %v2568 = vld [vmem:[%s2522 + $0x168] sm:$0xff]
  %v2569 = vld [vmem:[%s2522 + $0x170] sm:$0xff]
  %v2570 = vld [vmem:[%s2522 + $0x178] sm:$0xff]
  %v2571 = vld [vmem:[%s2522 + $0x180] sm:$0xff]
  %v2572 = vld [vmem:[%s2522 + $0x188] sm:$0xff]
  %v2573 = vld [vmem:[%s2522 + $0x190] sm:$0xff]
  %v2574 = vld [vmem:[%s2522 + $0x198] sm:$0xff]
  %v2575 = vld [vmem:[%s2522 + $0x1a0] sm:$0xff]
  %v2576 = vld [vmem:[%s2522 + $0x1a8] sm:$0xff]
  %v2577 = vld [vmem:[%s2522 + $0x1b0] sm:$0xff]
  %v2578 = vld [vmem:[%s2522 + $0x1b8] sm:$0xff]
  %v2579 = vld [vmem:[%s2522 + $0x1c0] sm:$0xff]
  %v2580 = vld [vmem:[%s2522 + $0x1c8] sm:$0xff]
  %v2581 = vld [vmem:[%s2522 + $0x1d0] sm:$0xff]
  %v2582 = vld [vmem:[%s2522 + $0x1d8] sm:$0xff]
  %v2583 = vld [vmem:[%s2522 + $0x1e0] sm:$0xff]
  %v2584 = vld [vmem:[%s2522 + $0x1e8] sm:$0xff]
  %v2585 = vld [vmem:[%s2522 + $0x1f0] sm:$0xff]
  %v2586 = vld [vmem:[%s2522 + $0x1f8] sm:$0xff]
  %v2587 = vld [vmem:[%s2522 + $0x200] sm:$0xff]
  %v2588 = vld [vmem:[%s2522 + $0x208] sm:$0xff]
  %v2589 = vld [vmem:[%s2522 + $0x210] sm:$0xff]
  %v2590 = vld [vmem:[%s2522 + $0x218] sm:$0xff]
  %v2591 = vld [vmem:[%s2522 + $0x220] sm:$0xff]
  %v2592 = vld [vmem:[%s2522 + $0x228] sm:$0xff]
  %v2593 = vld [vmem:[%s2522 + $0x230] sm:$0xff]
  %v2594 = vld [vmem:[%s2522 + $0x238] sm:$0xff]
  %s2595 = scalar_lea.vmem %s3, 3072
  %v2596 = vld [vmem:[%s2595] sm:$0xff]
  %v2597 = vld [vmem:[%s2595 + $0x8] sm:$0xff]
  %v2598 = vld [vmem:[%s2595 + $0x10] sm:$0xff]
  %v2599 = vld [vmem:[%s2595 + $0x18] sm:$0xff]
  %v2600 = vld [vmem:[%s2595 + $0x20] sm:$0xff]
  %v2601 = vld [vmem:[%s2595 + $0x28] sm:$0xff]
  %v2602 = vld [vmem:[%s2595 + $0x30] sm:$0xff]
  %v2603 = vld [vmem:[%s2595 + $0x38] sm:$0xff]
  %v2604 = vld [vmem:[%s2595 + $0x40] sm:$0xff]
  %v2605 = vld [vmem:[%s2595 + $0x48] sm:$0xff]
  %v2606 = vld [vmem:[%s2595 + $0x50] sm:$0xff]
  %v2607 = vld [vmem:[%s2595 + $0x58] sm:$0xff]
  %v2608 = vld [vmem:[%s2595 + $0x60] sm:$0xff]
  %v2609 = vld [vmem:[%s2595 + $0x68] sm:$0xff]
  %v2610 = vld [vmem:[%s2595 + $0x70] sm:$0xff]
  %v2611 = vld [vmem:[%s2595 + $0x78] sm:$0xff]
  %v2612 = vld [vmem:[%s2595 + $0x80] sm:$0xff]
  %v2613 = vld [vmem:[%s2595 + $0x88] sm:$0xff]
  %v2614 = vld [vmem:[%s2595 + $0x90] sm:$0xff]
  %v2615 = vld [vmem:[%s2595 + $0x98] sm:$0xff]
  %v2616 = vld [vmem:[%s2595 + $0xa0] sm:$0xff]
  %v2617 = vld [vmem:[%s2595 + $0xa8] sm:$0xff]
  %v2618 = vld [vmem:[%s2595 + $0xb0] sm:$0xff]
  %v2619 = vld [vmem:[%s2595 + $0xb8] sm:$0xff]
  %v2620 = vld [vmem:[%s2595 + $0xc0] sm:$0xff]
  %v2621 = vld [vmem:[%s2595 + $0xc8] sm:$0xff]
  %v2622 = vld [vmem:[%s2595 + $0xd0] sm:$0xff]
  %v2623 = vld [vmem:[%s2595 + $0xd8] sm:$0xff]
  %v2624 = vld [vmem:[%s2595 + $0xe0] sm:$0xff]
  %v2625 = vld [vmem:[%s2595 + $0xe8] sm:$0xff]
  %v2626 = vld [vmem:[%s2595 + $0xf0] sm:$0xff]
  %v2627 = vld [vmem:[%s2595 + $0xf8] sm:$0xff]
  %v2628 = vld [vmem:[%s2595 + $0x100] sm:$0xff]
  %v2629 = vld [vmem:[%s2595 + $0x108] sm:$0xff]
  %v2630 = vld [vmem:[%s2595 + $0x110] sm:$0xff]
  %v2631 = vld [vmem:[%s2595 + $0x118] sm:$0xff]
  %v2632 = vld [vmem:[%s2595 + $0x120] sm:$0xff]
  %v2633 = vld [vmem:[%s2595 + $0x128] sm:$0xff]
  %v2634 = vld [vmem:[%s2595 + $0x130] sm:$0xff]
  %v2635 = vld [vmem:[%s2595 + $0x138] sm:$0xff]
  %v2636 = vld [vmem:[%s2595 + $0x140] sm:$0xff]
  %v2637 = vld [vmem:[%s2595 + $0x148] sm:$0xff]
  %v2638 = vld [vmem:[%s2595 + $0x150] sm:$0xff]
  %v2639 = vld [vmem:[%s2595 + $0x158] sm:$0xff]
  %v2640 = vld [vmem:[%s2595 + $0x160] sm:$0xff]
  %v2641 = vld [vmem:[%s2595 + $0x168] sm:$0xff]
  %v2642 = vld [vmem:[%s2595 + $0x170] sm:$0xff]
  %v2643 = vld [vmem:[%s2595 + $0x178] sm:$0xff]
  %v2644 = vld [vmem:[%s2595 + $0x180] sm:$0xff]
  %v2645 = vld [vmem:[%s2595 + $0x188] sm:$0xff]
  %v2646 = vld [vmem:[%s2595 + $0x190] sm:$0xff]
  %v2647 = vld [vmem:[%s2595 + $0x198] sm:$0xff]
  %v2648 = vld [vmem:[%s2595 + $0x1a0] sm:$0xff]
  %v2649 = vld [vmem:[%s2595 + $0x1a8] sm:$0xff]
  %v2650 = vld [vmem:[%s2595 + $0x1b0] sm:$0xff]
  %v2651 = vld [vmem:[%s2595 + $0x1b8] sm:$0xff]
  %v2652 = vld [vmem:[%s2595 + $0x1c0] sm:$0xff]
  %v2653 = vld [vmem:[%s2595 + $0x1c8] sm:$0xff]
  %v2654 = vld [vmem:[%s2595 + $0x1d0] sm:$0xff]
  %v2655 = vld [vmem:[%s2595 + $0x1d8] sm:$0xff]
  %v2656 = vld [vmem:[%s2595 + $0x1e0] sm:$0xff]
  %v2657 = vld [vmem:[%s2595 + $0x1e8] sm:$0xff]
  %v2658 = vld [vmem:[%s2595 + $0x1f0] sm:$0xff]
  %v2659 = vld [vmem:[%s2595 + $0x1f8] sm:$0xff]
  %v2660 = vld [vmem:[%s2595 + $0x200] sm:$0xff]
  %v2661 = vld [vmem:[%s2595 + $0x208] sm:$0xff]
  %v2662 = vld [vmem:[%s2595 + $0x210] sm:$0xff]
  %v2663 = vld [vmem:[%s2595 + $0x218] sm:$0xff]
  %v2664 = vld [vmem:[%s2595 + $0x220] sm:$0xff]
  %v2665 = vld [vmem:[%s2595 + $0x228] sm:$0xff]
  %v2666 = vld [vmem:[%s2595 + $0x230] sm:$0xff]
  %v2667 = vld [vmem:[%s2595 + $0x238] sm:$0xff]
  %v2668 = vld [vmem:[%s2595 + $0x240] sm:$0xff]
  %v2669 = vld [vmem:[%s2595 + $0x248] sm:$0xff]
  %v2670 = vld [vmem:[%s2595 + $0x250] sm:$0xff]
  %v2671 = vld [vmem:[%s2595 + $0x258] sm:$0xff]
  %v2672 = vld [vmem:[%s2595 + $0x260] sm:$0xff]
  %v2673 = vld [vmem:[%s2595 + $0x268] sm:$0xff]
  %v2674 = vld [vmem:[%s2595 + $0x270] sm:$0xff]
  %v2675 = vld [vmem:[%s2595 + $0x278] sm:$0xff]
  %v2676 = vld [vmem:[%s2595 + $0x280] sm:$0xff]
  %v2677 = vld [vmem:[%s2595 + $0x288] sm:$0xff]
  %v2678 = vld [vmem:[%s2595 + $0x290] sm:$0xff]
  %v2679 = vld [vmem:[%s2595 + $0x298] sm:$0xff]
  %v2680 = vld [vmem:[%s2595 + $0x2a0] sm:$0xff]
  %v2681 = vld [vmem:[%s2595 + $0x2a8] sm:$0xff]
  %v2682 = vld [vmem:[%s2595 + $0x2b0] sm:$0xff]
  %v2683 = vld [vmem:[%s2595 + $0x2b8] sm:$0xff]
  %v2684 = vld [vmem:[%s2595 + $0x2c0] sm:$0xff]
  %v2685 = vld [vmem:[%s2595 + $0x2c8] sm:$0xff]
  %v2686 = vld [vmem:[%s2595 + $0x2d0] sm:$0xff]
  %v2687 = vld [vmem:[%s2595 + $0x2d8] sm:$0xff]
  %v2688 = vld [vmem:[%s2595 + $0x2e0] sm:$0xff]
  %v2689 = vld [vmem:[%s2595 + $0x2e8] sm:$0xff]
  %v2690 = vld [vmem:[%s2595 + $0x2f0] sm:$0xff]
  %v2691 = vld [vmem:[%s2595 + $0x2f8] sm:$0xff]
  %2692 = vmatprep.subr.mxu0 0.0
  %2693 = vmatpush1.msra.mxu0 %v2611
  %2694 = vmatprep.subr.mxu0 0.0
  %2695 = vmatpush1.msra.mxu0 %v2610
  %2696 = vmatprep.subr.mxu0 0.0
  %2697 = vmatpush1.msra.mxu0 %v2609
  %2698 = vmatprep.subr.mxu0 0.0
  %2699 = vmatpush1.msra.mxu0 %v2608
  %2700 = vmatprep.subr.mxu0 0.0
  %2701 = vmatpush1.msra.mxu0 %v2607
  %2702 = vmatprep.subr.mxu0 0.0
  %2703 = vmatpush1.msra.mxu0 %v2606
  %2704 = vmatprep.subr.mxu0 0.0
  %2705 = vmatpush1.msra.mxu0 %v2605
  %2706 = vmatprep.subr.mxu0 0.0
  %2707 = vmatpush1.msra.mxu0 %v2604
  %2708 = vmatprep.subr.mxu0 0.0
  %2709 = vmatpush1.msra.mxu0 %v2603
  %2710 = vmatprep.subr.mxu0 0.0
  %2711 = vmatpush1.msra.mxu0 %v2602
  %2712 = vmatprep.subr.mxu0 0.0
  %2713 = vmatpush1.msra.mxu0 %v2601
  %2714 = vmatprep.subr.mxu0 0.0
  %2715 = vmatpush1.msra.mxu0 %v2600
  %2716 = vmatprep.subr.mxu0 0.0
  %2717 = vmatpush1.msra.mxu0 %v2599
  %2718 = vmatprep.subr.mxu0 0.0
  %2719 = vmatpush1.msra.mxu0 %v2598
  %2720 = vmatprep.subr.mxu0 0.0
  %2721 = vmatpush1.msra.mxu0 %v2597
  %2722 = vmatprep.subr.mxu0 0.0
  %2723 = vmatpush1.msra.mxu0 %v2596
  %2724 = vmatprep.subr.mxu0 0.0
  %2725 = vmatpush2.msra.mxu0 %v2627
  %2726 = vmatprep.subr.mxu0 0.0
  %2727 = vmatpush2.msra.mxu0 %v2626
  %2728 = vmatprep.subr.mxu0 0.0
  %2729 = vmatpush2.msra.mxu0 %v2625
  %2730 = vmatprep.subr.mxu0 0.0
  %2731 = vmatpush2.msra.mxu0 %v2624
  %2732 = vmatprep.subr.mxu0 0.0
  %2733 = vmatpush2.msra.mxu0 %v2623
  %2734 = vmatprep.subr.mxu0 0.0
  %2735 = vmatpush2.msra.mxu0 %v2622
  %2736 = vmatprep.subr.mxu0 0.0
  %2737 = vmatpush2.msra.mxu0 %v2621
  %2738 = vmatprep.subr.mxu0 0.0
  %2739 = vmatpush2.msra.mxu0 %v2620
  %2740 = vmatprep.subr.mxu0 0.0
  %2741 = vmatpush2.msra.mxu0 %v2619
  %2742 = vmatprep.subr.mxu0 0.0
  %2743 = vmatpush2.msra.mxu0 %v2618
  %2744 = vmatprep.subr.mxu0 0.0
  %2745 = vmatpush2.msra.mxu0 %v2617
  %2746 = vmatprep.subr.mxu0 0.0
  %2747 = vmatpush2.msra.mxu0 %v2616
  %2748 = vmatprep.subr.mxu0 0.0
  %2749 = vmatpush2.msra.mxu0 %v2615
  %2750 = vmatprep.subr.mxu0 0.0
  %2751 = vmatpush2.msra.mxu0 %v2614
  %2752 = vmatprep.subr.mxu0 0.0
  %2753 = vmatpush2.msra.mxu0 %v2613
  %2754 = vmatprep.subr.mxu0 0.0
  %2755 = vmatpush2.msra.mxu0 %v2612
  %2756 = vmatprep.mubr.f32.mxu0 %v2524
  %2757 = vmatmul.mubr.f32.gmra.mxu0 %v2523
  %v2758 = vpop.f32.mrf.mxu0
  %v2759 = vadd.f32 0.0, %v2758
  %v2760 = vpop.f32.mrf.mxu0
  %2761 = vmatprep.mubr.f32.mxu0 %v2530
  %2762 = vmatmul.mubr.f32.gmra.mxu0 %v2529
  %v2763 = vpop.f32.mrf.mxu0
  %v2764 = vadd.f32 0.0, %v2763
  %v2765 = vpop.f32.mrf.mxu0
  %2766 = vmatprep.mubr.f32.mxu0 %v2536
  %2767 = vmatmul.mubr.f32.gmra.mxu0 %v2535
  %v2768 = vpop.f32.mrf.mxu0
  %v2769 = vadd.f32 0.0, %v2768
  %v2770 = vpop.f32.mrf.mxu0
  %2771 = vmatprep.mubr.f32.mxu0 %v2542
  %2772 = vmatmul.mubr.f32.gmra.mxu0 %v2541
  %v2773 = vpop.f32.mrf.mxu0
  %v2774 = vadd.f32 0.0, %v2773
  %v2775 = vpop.f32.mrf.mxu0
  %2776 = vmatprep.mubr.f32.mxu0 %v2548
  %2777 = vmatmul.mubr.f32.gmra.mxu0 %v2547
  %v2778 = vpop.f32.mrf.mxu0
  %v2779 = vadd.f32 0.0, %v2778
  %v2780 = vpop.f32.mrf.mxu0
  %2781 = vmatprep.mubr.f32.mxu0 %v2554
  %2782 = vmatmul.mubr.f32.gmra.mxu0 %v2553
  %v2783 = vpop.f32.mrf.mxu0
  %v2784 = vadd.f32 0.0, %v2783
  %v2785 = vpop.f32.mrf.mxu0
  %2786 = vmatprep.mubr.f32.mxu0 %v2560
  %2787 = vmatmul.mubr.f32.gmra.mxu0 %v2559
  %v2788 = vpop.f32.mrf.mxu0
  %v2789 = vadd.f32 0.0, %v2788
  %v2790 = vpop.f32.mrf.mxu0
  %2791 = vmatprep.mubr.f32.mxu0 %v2566
  %2792 = vmatmul.mubr.f32.gmra.mxu0 %v2565
  %v2793 = vpop.f32.mrf.mxu0
  %v2794 = vadd.f32 0.0, %v2793
  %v2795 = vpop.f32.mrf.mxu0
  %2796 = vmatprep.mubr.f32.mxu0 %v2572
  %2797 = vmatmul.mubr.f32.gmra.mxu0 %v2571
  %v2798 = vpop.f32.mrf.mxu0
  %v2799 = vadd.f32 0.0, %v2798
  %v2800 = vpop.f32.mrf.mxu0
  %2801 = vmatprep.mubr.f32.mxu0 %v2578
  %2802 = vmatmul.mubr.f32.gmra.mxu0 %v2577
  %v2803 = vpop.f32.mrf.mxu0
  %v2804 = vadd.f32 0.0, %v2803
  %v2805 = vpop.f32.mrf.mxu0
  %2806 = vmatprep.mubr.f32.mxu0 %v2584
  %2807 = vmatmul.mubr.f32.gmra.mxu0 %v2583
  %v2808 = vpop.f32.mrf.mxu0
  %v2809 = vadd.f32 0.0, %v2808
  %v2810 = vpop.f32.mrf.mxu0
  %2811 = vmatprep.mubr.f32.mxu0 %v2590
  %2812 = vmatmul.mubr.f32.gmra.mxu0 %v2589
  %v2813 = vpop.f32.mrf.mxu0
  %v2814 = vadd.f32 0.0, %v2813
  %v2815 = vpop.f32.mrf.mxu0
  %2816 = vdwg.mxu0
  %2817 = vmatprep.subr.mxu0 0.0
  %2818 = vmatpush1.msra.mxu0 %v2643
  %2819 = vmatprep.subr.mxu0 0.0
  %2820 = vmatpush1.msra.mxu0 %v2642
  %2821 = vmatprep.subr.mxu0 0.0
  %2822 = vmatpush1.msra.mxu0 %v2641
  %2823 = vmatprep.subr.mxu0 0.0
  %2824 = vmatpush1.msra.mxu0 %v2640
  %2825 = vmatprep.subr.mxu0 0.0
  %2826 = vmatpush1.msra.mxu0 %v2639
  %2827 = vmatprep.subr.mxu0 0.0
  %2828 = vmatpush1.msra.mxu0 %v2638
  %2829 = vmatprep.subr.mxu0 0.0
  %2830 = vmatpush1.msra.mxu0 %v2637
  %2831 = vmatprep.subr.mxu0 0.0
  %2832 = vmatpush1.msra.mxu0 %v2636
  %2833 = vmatprep.subr.mxu0 0.0
  %2834 = vmatpush1.msra.mxu0 %v2635
  %2835 = vmatprep.subr.mxu0 0.0
  %2836 = vmatpush1.msra.mxu0 %v2634
  %2837 = vmatprep.subr.mxu0 0.0
  %2838 = vmatpush1.msra.mxu0 %v2633
  %2839 = vmatprep.subr.mxu0 0.0
  %2840 = vmatpush1.msra.mxu0 %v2632
  %2841 = vmatprep.subr.mxu0 0.0
  %2842 = vmatpush1.msra.mxu0 %v2631
  %2843 = vmatprep.subr.mxu0 0.0
  %2844 = vmatpush1.msra.mxu0 %v2630
  %2845 = vmatprep.subr.mxu0 0.0
  %2846 = vmatpush1.msra.mxu0 %v2629
  %2847 = vmatprep.subr.mxu0 0.0
  %2848 = vmatpush1.msra.mxu0 %v2628
  %2849 = vmatprep.subr.mxu0 0.0
  %2850 = vmatpush2.msra.mxu0 %v2659
  %2851 = vmatprep.subr.mxu0 0.0
  %2852 = vmatpush2.msra.mxu0 %v2658
  %2853 = vmatprep.subr.mxu0 0.0
  %2854 = vmatpush2.msra.mxu0 %v2657
  %2855 = vmatprep.subr.mxu0 0.0
  %2856 = vmatpush2.msra.mxu0 %v2656
  %2857 = vmatprep.subr.mxu0 0.0
  %2858 = vmatpush2.msra.mxu0 %v2655
  %2859 = vmatprep.subr.mxu0 0.0
  %2860 = vmatpush2.msra.mxu0 %v2654
  %2861 = vmatprep.subr.mxu0 0.0
  %2862 = vmatpush2.msra.mxu0 %v2653
  %2863 = vmatprep.subr.mxu0 0.0
  %2864 = vmatpush2.msra.mxu0 %v2652
  %2865 = vmatprep.subr.mxu0 0.0
  %2866 = vmatpush2.msra.mxu0 %v2651
  %2867 = vmatprep.subr.mxu0 0.0
  %2868 = vmatpush2.msra.mxu0 %v2650
  %2869 = vmatprep.subr.mxu0 0.0
  %2870 = vmatpush2.msra.mxu0 %v2649
  %2871 = vmatprep.subr.mxu0 0.0
  %2872 = vmatpush2.msra.mxu0 %v2648
  %2873 = vmatprep.subr.mxu0 0.0
  %2874 = vmatpush2.msra.mxu0 %v2647
  %2875 = vmatprep.subr.mxu0 0.0
  %2876 = vmatpush2.msra.mxu0 %v2646
  %2877 = vmatprep.subr.mxu0 0.0
  %2878 = vmatpush2.msra.mxu0 %v2645
  %2879 = vmatprep.subr.mxu0 0.0
  %2880 = vmatpush2.msra.mxu0 %v2644
  %2881 = vmatprep.mubr.f32.mxu0 %v2526
  %2882 = vmatmul.mubr.f32.gmra.mxu0 %v2525
  %v2883 = vpop.f32.mrf.mxu0
  %v2884 = vadd.f32 %v2759, %v2883
  %v2885 = vpop.f32.mrf.mxu0
  %2886 = vmatprep.mubr.f32.mxu0 %v2532
  %2887 = vmatmul.mubr.f32.gmra.mxu0 %v2531
  %v2888 = vpop.f32.mrf.mxu0
  %v2889 = vadd.f32 %v2764, %v2888
  %v2890 = vpop.f32.mrf.mxu0
  %2891 = vmatprep.mubr.f32.mxu0 %v2538
  %2892 = vmatmul.mubr.f32.gmra.mxu0 %v2537
  %v2893 = vpop.f32.mrf.mxu0
  %v2894 = vadd.f32 %v2769, %v2893
  %v2895 = vpop.f32.mrf.mxu0
  %2896 = vmatprep.mubr.f32.mxu0 %v2544
  %2897 = vmatmul.mubr.f32.gmra.mxu0 %v2543
  %v2898 = vpop.f32.mrf.mxu0
  %v2899 = vadd.f32 %v2774, %v2898
  %v2900 = vpop.f32.mrf.mxu0
  %2901 = vmatprep.mubr.f32.mxu0 %v2550
  %2902 = vmatmul.mubr.f32.gmra.mxu0 %v2549
  %v2903 = vpop.f32.mrf.mxu0
  %v2904 = vadd.f32 %v2779, %v2903
  %v2905 = vpop.f32.mrf.mxu0
  %2906 = vmatprep.mubr.f32.mxu0 %v2556
  %2907 = vmatmul.mubr.f32.gmra.mxu0 %v2555
  %v2908 = vpop.f32.mrf.mxu0
  %v2909 = vadd.f32 %v2784, %v2908
  %v2910 = vpop.f32.mrf.mxu0
  %2911 = vmatprep.mubr.f32.mxu0 %v2562
  %2912 = vmatmul.mubr.f32.gmra.mxu0 %v2561
  %v2913 = vpop.f32.mrf.mxu0
  %v2914 = vadd.f32 %v2789, %v2913
  %v2915 = vpop.f32.mrf.mxu0
  %2916 = vmatprep.mubr.f32.mxu0 %v2568
  %2917 = vmatmul.mubr.f32.gmra.mxu0 %v2567
  %v2918 = vpop.f32.mrf.mxu0
  %v2919 = vadd.f32 %v2794, %v2918
  %v2920 = vpop.f32.mrf.mxu0
  %2921 = vmatprep.mubr.f32.mxu0 %v2574
  %2922 = vmatmul.mubr.f32.gmra.mxu0 %v2573
  %v2923 = vpop.f32.mrf.mxu0
  %v2924 = vadd.f32 %v2799, %v2923
  %v2925 = vpop.f32.mrf.mxu0
  %2926 = vmatprep.mubr.f32.mxu0 %v2580
  %2927 = vmatmul.mubr.f32.gmra.mxu0 %v2579
  %v2928 = vpop.f32.mrf.mxu0
  %v2929 = vadd.f32 %v2804, %v2928
  %v2930 = vpop.f32.mrf.mxu0
  %2931 = vmatprep.mubr.f32.mxu0 %v2586
  %2932 = vmatmul.mubr.f32.gmra.mxu0 %v2585
  %v2933 = vpop.f32.mrf.mxu0
  %v2934 = vadd.f32 %v2809, %v2933
  %v2935 = vpop.f32.mrf.mxu0
  %2936 = vmatprep.mubr.f32.mxu0 %v2592
  %2937 = vmatmul.mubr.f32.gmra.mxu0 %v2591
  %v2938 = vpop.f32.mrf.mxu0
  %v2939 = vadd.f32 %v2814, %v2938
  %v2940 = vpop.f32.mrf.mxu0
  %2941 = vdwg.mxu0
  %2942 = vmatprep.subr.mxu0 0.0
  %2943 = vmatpush1.msra.mxu0 %v2675
  %2944 = vmatprep.subr.mxu0 0.0
  %2945 = vmatpush1.msra.mxu0 %v2674
  %2946 = vmatprep.subr.mxu0 0.0
  %2947 = vmatpush1.msra.mxu0 %v2673
  %2948 = vmatprep.subr.mxu0 0.0
  %2949 = vmatpush1.msra.mxu0 %v2672
  %2950 = vmatprep.subr.mxu0 0.0
  %2951 = vmatpush1.msra.mxu0 %v2671
  %2952 = vmatprep.subr.mxu0 0.0
  %2953 = vmatpush1.msra.mxu0 %v2670
  %2954 = vmatprep.subr.mxu0 0.0
  %2955 = vmatpush1.msra.mxu0 %v2669
  %2956 = vmatprep.subr.mxu0 0.0
  %2957 = vmatpush1.msra.mxu0 %v2668
  %2958 = vmatprep.subr.mxu0 0.0
  %2959 = vmatpush1.msra.mxu0 %v2667
  %2960 = vmatprep.subr.mxu0 0.0
  %2961 = vmatpush1.msra.mxu0 %v2666
  %2962 = vmatprep.subr.mxu0 0.0
  %2963 = vmatpush1.msra.mxu0 %v2665
  %2964 = vmatprep.subr.mxu0 0.0
  %2965 = vmatpush1.msra.mxu0 %v2664
  %2966 = vmatprep.subr.mxu0 0.0
  %2967 = vmatpush1.msra.mxu0 %v2663
  %2968 = vmatprep.subr.mxu0 0.0
  %2969 = vmatpush1.msra.mxu0 %v2662
  %2970 = vmatprep.subr.mxu0 0.0
  %2971 = vmatpush1.msra.mxu0 %v2661
  %2972 = vmatprep.subr.mxu0 0.0
  %2973 = vmatpush1.msra.mxu0 %v2660
  %2974 = vmatprep.subr.mxu0 0.0
  %2975 = vmatpush2.msra.mxu0 %v2691
  %2976 = vmatprep.subr.mxu0 0.0
  %2977 = vmatpush2.msra.mxu0 %v2690
  %2978 = vmatprep.subr.mxu0 0.0
  %2979 = vmatpush2.msra.mxu0 %v2689
  %2980 = vmatprep.subr.mxu0 0.0
  %2981 = vmatpush2.msra.mxu0 %v2688
  %2982 = vmatprep.subr.mxu0 0.0
  %2983 = vmatpush2.msra.mxu0 %v2687
  %2984 = vmatprep.subr.mxu0 0.0
  %2985 = vmatpush2.msra.mxu0 %v2686
  %2986 = vmatprep.subr.mxu0 0.0
  %2987 = vmatpush2.msra.mxu0 %v2685
  %2988 = vmatprep.subr.mxu0 0.0
  %2989 = vmatpush2.msra.mxu0 %v2684
  %2990 = vmatprep.subr.mxu0 0.0
  %2991 = vmatpush2.msra.mxu0 %v2683
  %2992 = vmatprep.subr.mxu0 0.0
  %2993 = vmatpush2.msra.mxu0 %v2682
  %2994 = vmatprep.subr.mxu0 0.0
  %2995 = vmatpush2.msra.mxu0 %v2681
  %2996 = vmatprep.subr.mxu0 0.0
  %2997 = vmatpush2.msra.mxu0 %v2680
  %2998 = vmatprep.subr.mxu0 0.0
  %2999 = vmatpush2.msra.mxu0 %v2679
  %3000 = vmatprep.subr.mxu0 0.0
  %3001 = vmatpush2.msra.mxu0 %v2678
  %3002 = vmatprep.subr.mxu0 0.0
  %3003 = vmatpush2.msra.mxu0 %v2677
  %3004 = vmatprep.subr.mxu0 0.0
  %3005 = vmatpush2.msra.mxu0 %v2676
  %3006 = vmatprep.mubr.f32.mxu0 %v2528
  %3007 = vmatmul.mubr.f32.gmra.mxu0 %v2527
  %v3008 = vpop.f32.mrf.mxu0
  %v3009 = vadd.f32 %v2884, %v3008
  %v3010 = vpop.f32.mrf.mxu0
  %3011 = vmatprep.mubr.f32.mxu0 %v2534
  %3012 = vmatmul.mubr.f32.gmra.mxu0 %v2533
  %v3013 = vpop.f32.mrf.mxu0
  %v3014 = vadd.f32 %v2889, %v3013
  %v3015 = vpop.f32.mrf.mxu0
  %3016 = vmatprep.mubr.f32.mxu0 %v2540
  %3017 = vmatmul.mubr.f32.gmra.mxu0 %v2539
  %v3018 = vpop.f32.mrf.mxu0
  %v3019 = vadd.f32 %v2894, %v3018
  %v3020 = vpop.f32.mrf.mxu0
  %3021 = vmatprep.mubr.f32.mxu0 %v2546
  %3022 = vmatmul.mubr.f32.gmra.mxu0 %v2545
  %v3023 = vpop.f32.mrf.mxu0
  %v3024 = vadd.f32 %v2899, %v3023
  %v3025 = vpop.f32.mrf.mxu0
  %3026 = vmatprep.mubr.f32.mxu0 %v2552
  %3027 = vmatmul.mubr.f32.gmra.mxu0 %v2551
  %v3028 = vpop.f32.mrf.mxu0
  %v3029 = vadd.f32 %v2904, %v3028
  %v3030 = vpop.f32.mrf.mxu0
  %3031 = vmatprep.mubr.f32.mxu0 %v2558
  %3032 = vmatmul.mubr.f32.gmra.mxu0 %v2557
  %v3033 = vpop.f32.mrf.mxu0
  %v3034 = vadd.f32 %v2909, %v3033
  %v3035 = vpop.f32.mrf.mxu0
  %3036 = vmatprep.mubr.f32.mxu0 %v2564
  %3037 = vmatmul.mubr.f32.gmra.mxu0 %v2563
  %v3038 = vpop.f32.mrf.mxu0
  %v3039 = vadd.f32 %v2914, %v3038
  %v3040 = vpop.f32.mrf.mxu0
  %3041 = vmatprep.mubr.f32.mxu0 %v2570
  %3042 = vmatmul.mubr.f32.gmra.mxu0 %v2569
  %v3043 = vpop.f32.mrf.mxu0
  %v3044 = vadd.f32 %v2919, %v3043
  %v3045 = vpop.f32.mrf.mxu0
  %3046 = vmatprep.mubr.f32.mxu0 %v2576
  %3047 = vmatmul.mubr.f32.gmra.mxu0 %v2575
  %v3048 = vpop.f32.mrf.mxu0
  %v3049 = vadd.f32 %v2924, %v3048
  %v3050 = vpop.f32.mrf.mxu0
  %3051 = vmatprep.mubr.f32.mxu0 %v2582
  %3052 = vmatmul.mubr.f32.gmra.mxu0 %v2581
  %v3053 = vpop.f32.mrf.mxu0
  %v3054 = vadd.f32 %v2929, %v3053
  %v3055 = vpop.f32.mrf.mxu0
  %3056 = vmatprep.mubr.f32.mxu0 %v2588
  %3057 = vmatmul.mubr.f32.gmra.mxu0 %v2587
  %v3058 = vpop.f32.mrf.mxu0
  %v3059 = vadd.f32 %v2934, %v3058
  %v3060 = vpop.f32.mrf.mxu0
  %3061 = vmatprep.mubr.f32.mxu0 %v2594
  %3062 = vmatmul.mubr.f32.gmra.mxu0 %v2593
  %v3063 = vpop.f32.mrf.mxu0
  %v3064 = vadd.f32 %v2939, %v3063
  %v3065 = vpop.f32.mrf.mxu0
  %3066 = vdwg.mxu0
  %v3067 = vld [vmem:[#allocation2] sm:$0xff]
  %v3068 = vld [vmem:[#allocation2 + $0x8] sm:$0xff]
  %v3069 = vld [vmem:[#allocation2 + $0x10] sm:$0xff]
  %v3070 = vld [vmem:[#allocation2 + $0x18] sm:$0xff]
  %v3071 = vld [vmem:[#allocation2 + $0x20] sm:$0xff]
  %v3072 = vld [vmem:[#allocation2 + $0x28] sm:$0xff]
  %v3073 = vld [vmem:[#allocation2 + $0x30] sm:$0xff]
  %v3074 = vld [vmem:[#allocation2 + $0x38] sm:$0xff]
  %v3075 = vld [vmem:[#allocation2 + $0x40] sm:$0xff]
  %v3076 = vld [vmem:[#allocation2 + $0x48] sm:$0xff]
  %v3077 = vld [vmem:[#allocation2 + $0x50] sm:$0xff]
  %v3078 = vld [vmem:[#allocation2 + $0x58] sm:$0xff]
  %v3079 = vadd.f32 %v3067, %v3009
  %v3080 = vadd.f32 %v3068, %v3014
  %v3081 = vadd.f32 %v3069, %v3019
  %v3082 = vadd.f32 %v3070, %v3024
  %v3083 = vadd.f32 %v3071, %v3029
  %v3084 = vadd.f32 %v3072, %v3034
  %v3085 = vadd.f32 %v3073, %v3039
  %v3086 = vadd.f32 %v3074, %v3044
  %v3087 = vadd.f32 %v3075, %v3049
  %v3088 = vadd.f32 %v3076, %v3054
  %v3089 = vadd.f32 %v3077, %v3059
  %v3090 = vadd.f32 %v3078, %v3064
  %3091 = vst [vmem:[#allocation2] sm:$0xff] %v3079
  %3092 = vst [vmem:[#allocation2 + $0x8] sm:$0xff] %v3080
  %3093 = vst [vmem:[#allocation2 + $0x10] sm:$0xff] %v3081
  %3094 = vst [vmem:[#allocation2 + $0x18] sm:$0xff] %v3082
  %3095 = vst [vmem:[#allocation2 + $0x20] sm:$0xff] %v3083
  %3096 = vst [vmem:[#allocation2 + $0x28] sm:$0xff] %v3084
  %3097 = vst [vmem:[#allocation2 + $0x30] sm:$0xff] %v3085
  %3098 = vst [vmem:[#allocation2 + $0x38] sm:$0xff] %v3086
  %3099 = vst [vmem:[#allocation2 + $0x40] sm:$0xff] %v3087
  %3100 = vst [vmem:[#allocation2 + $0x48] sm:$0xff] %v3088
  %3101 = vst [vmem:[#allocation2 + $0x50] sm:$0xff] %v3089
  %3102 = vst [vmem:[#allocation2 + $0x58] sm:$0xff] %v3090
  %v3103 = vld [vmem:[%s5] sm:$0xff]
  %v3104 = vld [vmem:[%s5 + $0x8] sm:$0xff]
  %v3105 = vld [vmem:[%s5 + $0x10] sm:$0xff]
  %v3106 = vld [vmem:[%s5 + $0x18] sm:$0xff]
  %v3107 = vld [vmem:[%s2] sm:$0xff]
  %v3108 = vld [vmem:[%s2 + $0x8] sm:$0xff]
  %s3109 = smul.u32 0, 16
  %s3110 = sld [smem:[#allocation4 + %s3109]]
  %s3111 = sadd.s32 %s3109, 1
  %s3112 = sld [smem:[#allocation4 + %s3111]]
  %p3113 = scmp.gt.s32.totalorder %s3110, %s3112
  %s3114 = scalar_select %p3113, %s3110, %s3112
  %s3115 = sadd.s32 %s3109, 2
  %s3116 = sld [smem:[#allocation4 + %s3115]]
  %p3117 = scmp.gt.s32.totalorder %s3114, %s3116
  %s3118 = scalar_select %p3117, %s3114, %s3116
  %s3119 = sadd.s32 %s3109, 3
  %s3120 = sld [smem:[#allocation4 + %s3119]]
  %p3121 = scmp.gt.s32.totalorder %s3118, %s3120
  %s3122 = scalar_select %p3121, %s3118, %s3120
  %s3123 = sadd.s32 %s3109, 4
  %s3124 = sld [smem:[#allocation4 + %s3123]]
  %p3125 = scmp.gt.s32.totalorder %s3122, %s3124
  %s3126 = scalar_select %p3125, %s3122, %s3124
  %s3127 = sadd.s32 %s3109, 5
  %s3128 = sld [smem:[#allocation4 + %s3127]]
  %p3129 = scmp.gt.s32.totalorder %s3126, %s3128
  %s3130 = scalar_select %p3129, %s3126, %s3128
  %s3131 = sadd.s32 %s3109, 6
  %s3132 = sld [smem:[#allocation4 + %s3131]]
  %p3133 = scmp.gt.s32.totalorder %s3130, %s3132
  %s3134 = scalar_select %p3133, %s3130, %s3132
  %s3135 = sadd.s32 %s3109, 7
  %s3136 = sld [smem:[#allocation4 + %s3135]]
  %p3137 = scmp.gt.s32.totalorder %s3134, %s3136
  %s3138 = scalar_select %p3137, %s3134, %s3136
  %s3139 = sadd.s32 %s3109, 8
  %s3140 = sld [smem:[#allocation4 + %s3139]]
  %p3141 = scmp.gt.s32.totalorder %s3138, %s3140
  %s3142 = scalar_select %p3141, %s3138, %s3140
  %s3143 = sadd.s32 %s3109, 9
  %s3144 = sld [smem:[#allocation4 + %s3143]]
  %p3145 = scmp.gt.s32.totalorder %s3142, %s3144
  %s3146 = scalar_select %p3145, %s3142, %s3144
  %s3147 = sadd.s32 %s3109, 10
  %s3148 = sld [smem:[#allocation4 + %s3147]]
  %p3149 = scmp.gt.s32.totalorder %s3146, %s3148
  %s3150 = scalar_select %p3149, %s3146, %s3148
  %s3151 = sadd.s32 %s3109, 11
  %s3152 = sld [smem:[#allocation4 + %s3151]]
  %p3153 = scmp.gt.s32.totalorder %s3150, %s3152
  %s3154 = scalar_select %p3153, %s3150, %s3152
  %s3155 = sadd.s32 %s3109, 12
  %s3156 = sld [smem:[#allocation4 + %s3155]]
  %p3157 = scmp.gt.s32.totalorder %s3154, %s3156
  %s3158 = scalar_select %p3157, %s3154, %s3156
  %s3159 = sadd.s32 %s3109, 13
  %s3160 = sld [smem:[#allocation4 + %s3159]]
  %p3161 = scmp.gt.s32.totalorder %s3158, %s3160
  %s3162 = scalar_select %p3161, %s3158, %s3160
  %s3163 = sadd.s32 %s3109, 14
  %s3164 = sld [smem:[#allocation4 + %s3163]]
  %p3165 = scmp.gt.s32.totalorder %s3162, %s3164
  %s3166 = scalar_select %p3165, %s3162, %s3164
  %s3167 = sadd.s32 %s3109, 15
  %s3168 = sld [smem:[#allocation4 + %s3167]]
  %p3169 = scmp.gt.s32.totalorder %s3166, %s3168
  %s3170 = scalar_select %p3169, %s3166, %s3168
  // While loop
  $region30: #{cnn_lstm_forward.1} parent=0 // loop_pre_header
    _
  $region31: #{cnn_lstm_forward.1} parent=0 // loop_header
    %s3172 = sphi 0, %s3174
    %p3173 = scmp.ge.s32.totalorder %s3172, %s3170
    %v3177 = vphi 0.0, %v3334
    %v3178 = vphi 0.0, %v3335
    %v3179 = vphi 0.0, %v3336
    %v3180 = vphi 0.0, %v3337
  $region32: #{cnn_lstm_forward.1} parent=0 // loop_header_branch
    %3176 = sbr.rel (%p3173) target = $region36
  $region33: #{cnn_lstm_forward.1} parent=0 // loop_body
    %s3181 = smul.u32 %s3172, 16
    %s3182 = scalar_lea.vmem [#allocation2], %s3181
    %v3183 = vld [vmem:[%s3182] sm:$0xff]
    %v3184 = vld [vmem:[%s3182 + $0x8] sm:$0xff]
    %3187 = vrot.lane.b32.xlu0 %v3177, 32
    %v3188 = vpop.permute.xlu0 %3187
    %3189 = vrot.lane.b32.xlu0 %v3178, 32
    %v3190 = vpop.permute.xlu0 %3189
    %vm3191 = vcmask 261120
    %v3192 = vsel %vm3191, %v3188, 0
    %v3194 = vsel %vm3191, %v3190, 0
    %3196 = vmatprep.subr.mxu0 0.0
    %3197 = vmatpush1.msra.mxu0 0.0
    %3198 = vmatprep.subr.mxu0 0.0
    %3199 = vmatpush1.msra.mxu0 0.0
    %3200 = vmatprep.subr.mxu0 0.0
    %3201 = vmatpush1.msra.mxu0 0.0
    %3202 = vmatprep.subr.mxu0 0.0
    %3203 = vmatpush1.msra.mxu0 0.0
    %3204 = vmatprep.subr.mxu0 0.0
    %3205 = vmatpush1.msra.mxu0 0.0
    %3206 = vmatprep.subr.mxu0 0.0
    %3207 = vmatpush1.msra.mxu0 0.0
    %3208 = vmatprep.subr.mxu0 0.0
    %3209 = vmatpush1.msra.mxu0 0.0
    %3210 = vmatprep.subr.mxu0 0.0
    %3211 = vmatpush1.msra.mxu0 0.0
    %3212 = vmatprep.subr.mxu0 0.0
    %3213 = vmatpush1.msra.mxu0 0.0
    %3214 = vmatprep.subr.mxu0 0.0
    %3215 = vmatpush1.msra.mxu0 0.0
    %3216 = vmatprep.subr.mxu0 0.0
    %3217 = vmatpush1.msra.mxu0 0.0
    %3218 = vmatprep.subr.mxu0 0.0
    %3219 = vmatpush1.msra.mxu0 0.0
    %3220 = vmatprep.subr.mxu0 0.0
    %3221 = vmatpush1.msra.mxu0 %v3106
    %3222 = vmatprep.subr.mxu0 0.0
    %3223 = vmatpush1.msra.mxu0 %v3105
    %3224 = vmatprep.subr.mxu0 0.0
    %3225 = vmatpush1.msra.mxu0 %v3104
    %3226 = vmatprep.subr.mxu0 0.0
    %3227 = vmatpush1.msra.mxu0 %v3103
    %3228 = vmatprep.subr.mxu0 0.0
    %3229 = vmatpush2.msra.mxu0 0.0
    %3230 = vmatprep.subr.mxu0 0.0
    %3231 = vmatpush2.msra.mxu0 0.0
    %3232 = vmatprep.subr.mxu0 0.0
    %3233 = vmatpush2.msra.mxu0 0.0
    %3234 = vmatprep.subr.mxu0 0.0
    %3235 = vmatpush2.msra.mxu0 0.0
    %3236 = vmatprep.subr.mxu0 0.0
    %3237 = vmatpush2.msra.mxu0 0.0
    %3238 = vmatprep.subr.mxu0 0.0
    %3239 = vmatpush2.msra.mxu0 0.0
    %3240 = vmatprep.subr.mxu0 0.0
    %3241 = vmatpush2.msra.mxu0 0.0
    %3242 = vmatprep.subr.mxu0 0.0
    %3243 = vmatpush2.msra.mxu0 0.0
    %3244 = vmatprep.subr.mxu0 0.0
    %3245 = vmatpush2.msra.mxu0 0.0
    %3246 = vmatprep.subr.mxu0 0.0
    %3247 = vmatpush2.msra.mxu0 0.0
    %3248 = vmatprep.subr.mxu0 0.0
    %3249 = vmatpush2.msra.mxu0 0.0
    %3250 = vmatprep.subr.mxu0 0.0
    %3251 = vmatpush2.msra.mxu0 0.0
    %3252 = vmatprep.subr.mxu0 0.0
    %3253 = vmatpush2.msra.mxu0 0.0
    %3254 = vmatprep.subr.mxu0 0.0
    %3255 = vmatpush2.msra.mxu0 0.0
    %3256 = vmatprep.subr.mxu0 0.0
    %3257 = vmatpush2.msra.mxu0 0.0
    %3258 = vmatprep.subr.mxu0 0.0
    %3259 = vmatpush2.msra.mxu0 0.0
    %3260 = vmatprep.mubr.f32.mxu0 0.0
    %3261 = vmatmul.mubr.f32.gmra.mxu0 %v3192
    %v3262 = vpop.f32.mrf.mxu0
    %v3263 = vadd.f32 0.0, %v3262
    %v3264 = vpop.f32.mrf.mxu0
    %3265 = vmatprep.mubr.f32.mxu0 0.0
    %3266 = vmatmul.mubr.f32.gmra.mxu0 %v3194
    %v3267 = vpop.f32.mrf.mxu0
    %v3268 = vadd.f32 0.0, %v3267
    %v3269 = vpop.f32.mrf.mxu0
    %3270 = vdwg.mxu0
    %v3271 = vadd.f32 %v3183, %v3263
    %v3272 = vadd.f32 %v3184, %v3268
    %v3273 = vxor.u32 %v3271, 2147483648
    %v3274 = vxor.u32 %v3272, 2147483648
    %v3275 = vmul.f32 %v3273, 1.442695
    %v3276 = vpow.pop %v3275
    %v3277 = vmul.f32 %v3274, 1.442695
    %v3278 = vpow.pop %v3277
    %v3279 = vadd.f32 %v3276, 1.0
    %v3280 = vadd.f32 %v3278, 1.0
    %v3281 = vrcp.pop %v3279
    %v3282 = vmul.f32 1.0, %v3281
    %v3283 = vrcp.pop %v3280
    %v3284 = vmul.f32 1.0, %v3283
    %v3285 = vtanh.pop %v3271
    %v3286 = vtanh.pop %v3272
    %v3287 = vmul.f32 %v3282, %v3179
    %v3288 = vmul.f32 %v3284, %v3180
    %3291 = vrot.lane.b32.xlu0 %v3285, 64
    %v3292 = vpop.permute.xlu0 %3291
    %3293 = vrot.lane.b32.xlu0 %v3286, 64
    %v3294 = vpop.permute.xlu0 %3293
    %v3297 = vmul.f32 %v3282, %v3292
    %v3298 = vmul.f32 %v3284, %v3294
    %3301 = vrot.lane.b32.xlu0 %v3297, 32
    %v3302 = vpop.permute.xlu0 %3301
    %3303 = vrot.lane.b32.xlu0 %v3298, 32
    %v3304 = vpop.permute.xlu0 %3303
    %v3307 = vadd.f32 %v3287, %v3302
    %v3308 = vadd.f32 %v3288, %v3304
    %v3309 = vtanh.pop %v3307
    %v3310 = vtanh.pop %v3308
    %3313 = vrot.lane.b32.xlu0 %v3309, 64
    %v3314 = vpop.permute.xlu0 %3313
    %3315 = vrot.lane.b32.xlu0 %v3310, 64
    %v3316 = vpop.permute.xlu0 %3315
    %v3319 = vmul.f32 %v3282, %v3314
    %v3320 = vmul.f32 %v3284, %v3316
    %v3321 = vstv %s3172
    %vm3322 = vcmp.lt.s32.totalorder %v3321, %v3107
    %vm3323 = vcmp.lt.s32.totalorder %v3321, %v3108
    %v3324 = vsel %vm3322, 1, 0
    %v3325 = vsel %vm3323, 1, 0
    %3326 = vset.pattern.permute.xlu0 0
    %3327 = vperm.xlu0 %3326, %v3324
    %v3328 = vpop.permute.xlu0 %3327
    %3329 = vset.pattern.permute.xlu0 0
    %3330 = vperm.xlu0 %3329, %v3325
    %v3331 = vpop.permute.xlu0 %3330
    %vm3332 = vcmp.eq.s32.totalorder %v3328, 1
    %vm3333 = vcmp.eq.s32.totalorder %v3331, 1
    %v3334 = vsel %vm3332, %v3319, %v3177
    %v3335 = vsel %vm3333, %v3320, %v3178
    %v3336 = vsel %vm3332, %v3307, %v3179
    %v3337 = vsel %vm3333, %v3308, %v3180
  $region34: #{cnn_lstm_forward.1} parent=0 // loop_footer
    %s3174 = sadd.s32 %s3172, 1
  $region35: #{cnn_lstm_forward.1} parent=0 // loop_footer_branch
    %3171 = sbr.rel target = $region31
  $region36: #{cnn_lstm_forward.1} parent=0 // loop_exit
    _
  %v3338 = vld [vmem:[%s6] sm:$0xff]
  %v3339 = vld [vmem:[%s6 + $0x8] sm:$0xff]
  %v3340 = vld [vmem:[%s6 + $0x10] sm:$0xff]
  %v3341 = vld [vmem:[%s6 + $0x18] sm:$0xff]
  %v3342 = vld [vmem:[%s7] sm:$0x1]
  %v3344 = vlaneseq
  %v3345 = vshrl.u32 %v3344, 7
  %v3346 = vsub.s32 0, %v3345
  %v3347 = vrot.slane %v3342, %v3346
  %3351 = vrot.lane.b32.xlu0 %v3177, 32
  %v3352 = vpop.permute.xlu0 %3351
  %3353 = vrot.lane.b32.xlu0 %v3178, 32
  %v3354 = vpop.permute.xlu0 %3353
  %vm3355 = vcmask 261120
  %v3356 = vsel %vm3355, %v3352, 0
  %v3358 = vsel %vm3355, %v3354, 0
  %3360 = vmatprep.subr.mxu0 0.0
  %3361 = vmatpush1.msra.mxu0 0.0
  %3362 = vmatprep.subr.mxu0 0.0
  %3363 = vmatpush1.msra.mxu0 0.0
  %3364 = vmatprep.subr.mxu0 0.0
  %3365 = vmatpush1.msra.mxu0 0.0
  %3366 = vmatprep.subr.mxu0 0.0
  %3367 = vmatpush1.msra.mxu0 0.0
  %3368 = vmatprep.subr.mxu0 0.0
  %3369 = vmatpush1.msra.mxu0 0.0
  %3370 = vmatprep.subr.mxu0 0.0
  %3371 = vmatpush1.msra.mxu0 0.0
  %3372 = vmatprep.subr.mxu0 0.0
  %3373 = vmatpush1.msra.mxu0 0.0
  %3374 = vmatprep.subr.mxu0 0.0
  %3375 = vmatpush1.msra.mxu0 0.0
  %3376 = vmatprep.subr.mxu0 0.0
  %3377 = vmatpush1.msra.mxu0 0.0
  %3378 = vmatprep.subr.mxu0 0.0
  %3379 = vmatpush1.msra.mxu0 0.0
  %3380 = vmatprep.subr.mxu0 0.0
  %3381 = vmatpush1.msra.mxu0 0.0
  %3382 = vmatprep.subr.mxu0 0.0
  %3383 = vmatpush1.msra.mxu0 0.0
  %3384 = vmatprep.subr.mxu0 0.0
  %3385 = vmatpush1.msra.mxu0 %v3341
  %3386 = vmatprep.subr.mxu0 0.0
  %3387 = vmatpush1.msra.mxu0 %v3340
  %3388 = vmatprep.subr.mxu0 0.0
  %3389 = vmatpush1.msra.mxu0 %v3339
  %3390 = vmatprep.subr.mxu0 0.0
  %3391 = vmatpush1.msra.mxu0 %v3338
  %3392 = vmatprep.subr.mxu0 0.0
  %3393 = vmatpush2.msra.mxu0 0.0
  %3394 = vmatprep.subr.mxu0 0.0
  %3395 = vmatpush2.msra.mxu0 0.0
  %3396 = vmatprep.subr.mxu0 0.0
  %3397 = vmatpush2.msra.mxu0 0.0
  %3398 = vmatprep.subr.mxu0 0.0
  %3399 = vmatpush2.msra.mxu0 0.0
  %3400 = vmatprep.subr.mxu0 0.0
  %3401 = vmatpush2.msra.mxu0 0.0
  %3402 = vmatprep.subr.mxu0 0.0
  %3403 = vmatpush2.msra.mxu0 0.0
  %3404 = vmatprep.subr.mxu0 0.0
  %3405 = vmatpush2.msra.mxu0 0.0
  %3406 = vmatprep.subr.mxu0 0.0
  %3407 = vmatpush2.msra.mxu0 0.0
  %3408 = vmatprep.subr.mxu0 0.0
  %3409 = vmatpush2.msra.mxu0 0.0
  %3410 = vmatprep.subr.mxu0 0.0
  %3411 = vmatpush2.msra.mxu0 0.0
  %3412 = vmatprep.subr.mxu0 0.0
  %3413 = vmatpush2.msra.mxu0 0.0
  %3414 = vmatprep.subr.mxu0 0.0
  %3415 = vmatpush2.msra.mxu0 0.0
  %3416 = vmatprep.subr.mxu0 0.0
  %3417 = vmatpush2.msra.mxu0 0.0
  %3418 = vmatprep.subr.mxu0 0.0
  %3419 = vmatpush2.msra.mxu0 0.0
  %3420 = vmatprep.subr.mxu0 0.0
  %3421 = vmatpush2.msra.mxu0 0.0
  %3422 = vmatprep.subr.mxu0 0.0
  %3423 = vmatpush2.msra.mxu0 0.0
  %3424 = vmatprep.mubr.f32.mxu0 0.0
  %3425 = vmatmul.mubr.f32.gmra.mxu0 %v3356
  %v3426 = vpop.f32.mrf.mxu0
  %v3427 = vadd.f32 %v3347, %v3426
  %v3428 = vpop.f32.mrf.mxu0
  %3429 = vmatprep.mubr.f32.mxu0 0.0
  %3430 = vmatmul.mubr.f32.gmra.mxu0 %v3358
  %v3431 = vpop.f32.mrf.mxu0
  %v3432 = vadd.f32 %v3347, %v3431
  %v3433 = vpop.f32.mrf.mxu0
  %3434 = vdwg.mxu0
  %3435 = vst [vmem:[%s8] sm:$0xff] %v3427
  %3436 = vst [vmem:[%s8 + $0x8] sm:$0xff] %v3432
  // Predicated region
  $region37: #{cnn_lstm_forward.1} parent=0 // pred_check
    _
  $region38: #{cnn_lstm_forward.1} parent=0 // pred_check_branch
    %3438 = sbr.rel (0) target = $region40
  $region39: #{cnn_lstm_forward.1} parent=0 // pred_region
    _
  $region40: #{cnn_lstm_forward.1} parent=0 // pred_fallthru
    _
  // Predicated region
  $region41: #{cnn_lstm_forward.1} parent=0 // pred_check
    _
  $region42: #{cnn_lstm_forward.1} parent=0 // pred_check_branch
    %3440 = sbr.rel (0) target = $region44
  $region43: #{cnn_lstm_forward.1} parent=0 // pred_region
    _
  $region44: #{cnn_lstm_forward.1} parent=0 // pred_fallthru
    _

</llo_original>
